<compile_context>
chip_gen: v7x
topology: tpu7x:2x2x1
jax: 0.10.0
libtpu: 0.0.40
codegen_flags: <defaults>
</compile_context>

<pallas_src>
import functools

import jax
import jax.numpy as jnp
import numpy as np
from jax.experimental import pallas as pl
from jax.experimental.pallas import tpu as pltpu


# --------------------------------------------------------------------------
# Kernel
# --------------------------------------------------------------------------
def _async_attn_kernel(x_ref, w_ref, b_ref, rep_d_ref, pick_t_ref, pick_h_ref,
                       splat_t_ref, seg_d_ref, o_ref, qkv_ref, *,
                       n_heads, head_dim, unified_max_value):
    H, Dh = n_heads, head_dim
    HD = H * Dh
    umv = jnp.float32(unified_max_value)

    # ---- fused QKV projection: bf16 x bf16 -> f32 accumulate on the MXU ----
    qkv_ref[...] = (
        jnp.dot(x_ref[...], w_ref[...], preferred_element_type=jnp.float32)
        + b_ref[...])

    rep_d = rep_d_ref[...]      # (Dh, HD)    rep_d[j, t*Dh+j]   = 1
    pick_t = pick_t_ref[...]    # (HD, H)     pick_t[t*Dh+j, t]  = 1
    pick_h = pick_h_ref[...]    # (H*H, H)    pick_h[h*H+t, h]   = 1
    splat_t = splat_t_ref[...]  # (H, HD)     splat_t[t, t*Dh+j] = 1
    seg_d = seg_d_ref[...]      # (HD, Dh)    seg_d[t*Dh+j, j]   = 1

    # ---- per-token cross-head scores for ALL (query-head, key-head) pairs --
    # scores[:, h*H + t] = sum_j q[:, h*Dh+j] * k[:, t*Dh+j]
    score_blocks = []
    for h in range(H):                      # H is small & static -> unrolls
        k = qkv_ref[:, HD:2 * HD]           # re-sliced per head (bounds live range)
        q_h = qkv_ref[:, h * Dh:(h + 1) * Dh]                     # (tS, Dh)
        q_rep = jnp.dot(q_h, rep_d, preferred_element_type=jnp.float32)
        score_blocks.append(
            jnp.dot(q_rep * k, pick_t, preferred_element_type=jnp.float32))
    scores = jnp.concatenate(score_blocks, axis=-1)               # (tS, H*H)

    # ---- "asynchronized softmax": ONE exp / mask over the whole tile ------
    sub = scores - umv
    e = jnp.exp(sub)
    # select (NOT multiply): any exp overflow for sub > umv is discarded safely
    e = jnp.where((sub > umv) | (sub < -umv), 0.0, e)
    denom = jnp.dot(e, pick_h, preferred_element_type=jnp.float32)  # (tS, H)
    inv = pl.reciprocal(denom, approx=True)                         # EUP slot
    # Fully-masked row: torch computes 0/0 = NaN -> propagate explicitly.
    inv = jnp.where(denom == 0.0, jnp.float32(jnp.nan), inv)

    # ---- weighted mix of the per-head V vectors (no lane broadcasts) ------
    out_blocks = []
    for h in range(H):
        v = qkv_ref[:, 2 * HD:3 * HD]       # re-sliced per head
        w_h = e[:, h * H:(h + 1) * H] * inv[:, h:h + 1]            # (tS, H)
        w_exp = jnp.dot(w_h, splat_t, preferred_element_type=jnp.float32)
        out_blocks.append(
            jnp.dot(w_exp * v, seg_d, preferred_element_type=jnp.float32))

    # Single lane-dense store of the whole (tS, H*Dh) output tile.
    o_ref[...] = jnp.concatenate(out_blocks, axis=-1).astype(o_ref.dtype)


# --------------------------------------------------------------------------
# Wrapper helpers
# --------------------------------------------------------------------------
def _selector_constants(n_heads, head_dim):
    """Tiny constant 0/1 matrices that let the MXU do the per-head tiling,
    segment sums and weight splats (instead of XLU reduces / broadcasts)."""
    H, Dh = n_heads, head_dim
    eye_d = np.eye(Dh, dtype=np.float32)
    eye_h = np.eye(H, dtype=np.float32)
    rep_d = np.tile(eye_d, (1, H))                                 # (Dh, H*Dh)
    seg_d = np.tile(eye_d, (H, 1))                                 # (H*Dh, Dh)
    pick_t = np.kron(eye_h, np.ones((Dh, 1), np.float32))          # (H*Dh, H)
    splat_t = np.ascontiguousarray(pick_t.T)                       # (H, H*Dh)
    pick_h = np.kron(eye_h, np.ones((H, 1), np.float32))           # (H*H, H)
    return (jnp.asarray(rep_d), jnp.asarray(pick_t), jnp.asarray(pick_h),
            jnp.asarray(splat_t), jnp.asarray(seg_d))


def _vmem_capacity_bytes():
    # Hardware probe only; a failed probe falls back CONSERVATIVELY (64 MiB,
    # i.e. the v7x size) so the fallback can never over-budget VMEM.
    try:
        return int(pltpu.get_tpu_info().vmem_capacity_bytes)
    except Exception:
        return 64 << 20


def _pick_seq_tile(seq_len, per_row_bytes, resident_bytes, budget_bytes):
    """Largest divisor of seq_len (256/128/8-aligned when possible) whose
    per-step VMEM footprint stays under budget; never silently exceeds the
    budget unless no legal tile fits at all (then the smallest legal tile)."""
    cap = max(8, (budget_bytes - resident_bytes) // max(per_row_bytes, 1))
    cap = min(cap, 2048)
    divisors = [d for d in range(1, seq_len + 1)
                if seq_len % d == 0 and (d == seq_len or d % 8 == 0)]
    for align in (256, 128, 8, 1):
        fitting = [d for d in divisors if d <= cap and d % align == 0]
        if fitting:
            return max(fitting)
    return min(divisors)


# --------------------------------------------------------------------------
# Public entry point
# --------------------------------------------------------------------------
def asynchronized_attention(x, weight, bias, n_heads, unified_max_value,
                            seq_tile=None):
    """x: (B, S, d_model); weight: (3*d_model, d_model) [nn.Linear convention];
    bias: (3*d_model,).  Returns (B, S, n_heads, head_dim) like the module."""
    B, S, Dm = x.shape
    assert Dm % n_heads == 0
    H = n_heads
    Dh = Dm // H
    HD = H * Dh                       # == Dm

    # Re-pack the fused qkv_proj weight so ONE matmul emits [Q | K | V], each
    # head-major, matching the module's .view(B, S, H, 3*Dh).chunk(3, dim=-1)
    # (feature f = h*3*Dh + c*Dh + j  ->  column c*HD + h*Dh + j).
    wt = weight.T.reshape(Dm, H, 3, Dh)
    wqkv = jnp.transpose(wt, (0, 2, 1, 3)).reshape(Dm, 3 * HD)
    bqkv = jnp.transpose(bias.reshape(H, 3, Dh), (1, 0, 2)).reshape(1, 3 * HD)

    # bf16 MXU inputs (accumulation stays f32 in-kernel); bias stays f32.
    x_mm = x.astype(jnp.bfloat16)
    wqkv = wqkv.astype(jnp.bfloat16)
    bqkv = bqkv.astype(jnp.float32)
    consts = _selector_constants(H, Dh)

    out_itemsize = jnp.dtype(x.dtype).itemsize
    vmem_cap = _vmem_capacity_bytes()
    tile_budget = min(int(0.75 * vmem_cap), 100 << 20)   # ~48 MiB v7x, ~96 MiB v5e/v6e

    const_elems = 2 * Dh * HD + 2 * H * HD + H * H * H
    per_row = (2 * 2 * Dm                 # x block (bf16, double-buffered)
               + 2 * out_itemsize * HD    # out block (double-buffered)
               + 4 * 3 * HD               # qkv f32 scratch
               + 6 * 4 * HD               # lane-dense f32 temporaries
               + 4 * 4 * H * H)           # (tS, H*H) score / exp tiles
    resident = 2 * (2 * Dm * 3 * HD       # fused weight (bf16) block
                    + 4 * 3 * HD          # bias block
                    + 4 * const_elems)    # selector constants

    if seq_tile is None:
        tS = _pick_seq_tile(S, per_row, resident, tile_budget)
        # v7x megacore: avoid a single-step grid so both TensorCores get work.
        if B * (S // tS) == 1 and tS % 16 == 0:
            tS //= 2
    else:
        tS = int(seq_tile)
    if S % tS != 0 or not (tS == S or tS % 8 == 0):
        raise ValueError(f"seq tile {tS} must divide S={S} and be a multiple of 8")

    est_vmem = resident + per_row * tS
    vmem_limit = int(min(int(0.8 * vmem_cap), max(32 << 20, 2 * est_vmem)))

    kernel = functools.partial(
        _async_attn_kernel, n_heads=H, head_dim=Dh,
        unified_max_value=float(unified_max_value))

    flops = (2 * B * S * Dm * 3 * HD                    # QKV projection
             + 2 * B * S * H * HD * (Dh + 2 * H + 1)    # selector matmuls
             + 2 * B * S * H * H * H)                   # denominators
    cost = pl.CostEstimate(
        flops=int(flops),
        transcendentals=int(B * S * (H * H + H)),
        bytes_accessed=int(2 * B * S * Dm + out_itemsize * B * S * HD
                           + 2 * Dm * 3 * HD + 4 * 3 * HD + 4 * const_elems))

    const_specs = [pl.BlockSpec(c.shape, lambda b, s: (0, 0)) for c in consts]

    out_flat = pl.pallas_call(
        kernel,
        out_shape=jax.ShapeDtypeStruct((B, S, HD), x.dtype),
        grid_spec=pltpu.PrefetchScalarGridSpec(
            num_scalar_prefetch=0,
            grid=(B, S // tS),
            in_specs=[
                pl.BlockSpec((None, tS, Dm), lambda b, s: (b, s, 0)),   # x tile
                pl.BlockSpec((Dm, 3 * HD), lambda b, s: (0, 0)),        # fused W (DMA'd once)
                pl.BlockSpec((1, 3 * HD), lambda b, s: (0, 0)),         # fused bias
            ] + const_specs,
            out_specs=pl.BlockSpec((None, tS, HD), lambda b, s: (b, s, 0)),
            scratch_shapes=[pltpu.VMEM((tS, 3 * HD), jnp.float32)],
        ),
        compiler_params=pltpu.CompilerParams(
            dimension_semantics=("parallel", "parallel"),
            vmem_limit_bytes=vmem_limit),
        cost_estimate=cost,
    )(x_mm, wqkv, bqkv, *consts)

    return out_flat.reshape(B, S, H, Dh)


# --------------------------------------------------------------------------
# Pure-JAX reference (mirror of the PyTorch forward)
# --------------------------------------------------------------------------
def reference(x, weight, bias, n_heads, umv, mxu_bf16=False):
    """With mxu_bf16=True the QKV projection inputs are rounded to bf16
    (f32 accumulate), mirroring the kernel's MXU numerics for a tight check."""
    B, S, Dm = x.shape
    Dh = Dm // n_heads
    if mxu_bf16:
        x = x.astype(jnp.bfloat16)
        weight = weight.astype(jnp.bfloat16)
    qkv = jnp.einsum('bsm,fm->bsf', x, weight,
                     preferred_element_type=jnp.float32) + bias
    qkv = qkv.reshape(B, S, n_heads, 3 * Dh)
    Q, K, V = qkv[..., :Dh], qkv[..., Dh:2 * Dh], qkv[..., 2 * Dh:]
    scores = jnp.einsum('bshd,bskd->bshk', Q, K)
    sub = scores - umv
    e = jnp.exp(sub)
    e = jnp.where((sub > umv) | (sub < -umv), 0.0, e)
    denom = jnp.sum(e, axis=-1, keepdims=True)
    return jnp.einsum('bshk,bskd->bshd', e / denom, V)


# --------------------------------------------------------------------------
# Self-test
# --------------------------------------------------------------------------
if __name__ == "__main__":
    d_model, n_heads = 32, 4
    head_dim = d_model // n_heads
    batch, seq = 2, 128
    umv = 5.0

    # ---------- test 1: randomized, tiled grid (grid = (2, 2)) ----------
    key = jax.random.PRNGKey(0)
    kx, kw, kb = jax.random.split(key, 3)
    x = jax.random.normal(kx, (batch, seq, d_model), dtype=jnp.float32)
    weight = 0.03 * jax.random.normal(kw, (3 * d_model, d_model), dtype=jnp.float32)
    # Shift the Q/K biases so scores land well inside (0, 2*umv): keeps the
    # randomized check robust (no knife-edge mask decisions).
    f_idx = np.arange(3 * d_model)
    is_qk = ((f_idx % (3 * head_dim)) // head_dim) < 2
    shift = jnp.asarray(np.where(is_qk, np.sqrt(umv / head_dim), 0.0), jnp.float32)
    bias = shift + 0.02 * jax.random.normal(kb, (3 * d_model,), dtype=jnp.float32)

    out = jax.block_until_ready(
        asynchronized_attention(x, weight, bias, n_heads, umv, seq_tile=64))
    assert out.shape == (batch, seq, n_heads, head_dim)
    ref_bf16 = reference(x, weight, bias, n_heads, umv, mxu_bf16=True)
    ref_f32 = reference(x, weight, bias, n_heads, umv, mxu_bf16=False)
    if not np.allclose(np.asarray(out), np.asarray(ref_bf16),
                       rtol=2e-2, atol=2e-2, equal_nan=True):
        raise AssertionError("Pallas kernel mismatches bf16-matmul JAX reference")
    if not np.allclose(np.asarray(out), np.asarray(ref_f32),
                       rtol=4e-2, atol=4e-2, equal_nan=True):
        raise AssertionError("Pallas kernel mismatches f32 JAX reference")

    # ---------- test 2: deterministic mask / NaN coverage (auto tile) ----
    # Copy-projection weights so scores are exact and far from mask boundaries.
    W2 = np.zeros((3 * d_model, d_model), np.float32)
    for h in range(n_heads):
        for c in range(3):
            for j in range(head_dim):
                W2[h * 3 * head_dim + c * head_dim + j, h * head_dim + j] = 1.0
    b2 = jnp.zeros((3 * d_model,), jnp.float32)
    pat_a = [1.0, -1.0, 0.5, 1.5]     # mixes unmasked, score<0 and score>2*umv
    pat_b = [2.0, -1.0, -1.0, -1.0]   # head 0 fully masked -> 0/0 -> NaN row
    x2 = np.zeros((1, 8, d_model), np.float32)
    for s in range(8):
        pat = pat_a if s < 6 else pat_b
        for h in range(n_heads):
            x2[0, s, h * head_dim:(h + 1) * head_dim] = pat[h]
    x2 = jnp.asarray(x2)
    out2 = jax.block_until_ready(
        asynchronized_attention(x2, jnp.asarray(W2), b2, n_heads, umv))
    ref2 = reference(x2, jnp.asarray(W2), b2, n_heads, umv)
    o2, r2 = np.asarray(out2), np.asarray(ref2)
    if not np.allclose(o2, r2, rtol=1e-2, atol=1e-2, equal_nan=True):
        raise AssertionError("Pallas kernel mismatches JAX reference (mask case)")
    assert np.isnan(o2[0, 6:, 0, :]).all()   # fully-masked head -> NaN (as in PyTorch)
    assert np.isfinite(o2[0, :6]).all() and np.isfinite(o2[0, 6:, 1:]).all()

    print("KERNEL_OK")
</pallas_src>

<mosaic_0001>
module attributes {stable_mosaic.version = 11 : i64} {
  func.func @_async_attn_kernel(%arg0: i32, %arg1: i32, %arg2: memref<1x64x32xbf16, #tpu.memory_space<vmem>>, %arg3: memref<32x96xbf16, #tpu.memory_space<vmem>>, %arg4: memref<1x96xf32, #tpu.memory_space<vmem>>, %arg5: memref<8x32xf32, #tpu.memory_space<vmem>>, %arg6: memref<32x4xf32, #tpu.memory_space<vmem>>, %arg7: memref<16x4xf32, #tpu.memory_space<vmem>>, %arg8: memref<4x32xf32, #tpu.memory_space<vmem>>, %arg9: memref<32x8xf32, #tpu.memory_space<vmem>>, %arg10: memref<1x64x32xf32, #tpu.memory_space<vmem>>, %arg11: memref<64x96xf32, #tpu.memory_space<vmem>>) attributes {dimension_semantics = [#tpu.dimension_semantics<parallel>, #tpu.dimension_semantics<parallel>], iteration_bounds = array<i64: 2, 2>, scalar_prefetch = 0 : i64, scratch_operands = 1 : i64, tpu.core_type = #tpu.core_type<tc>, window_params = [{transform_indices = @transform_0, window_bounds = array<i64: 1, 64, 32>}, {pipeline_mode = #tpu.pipeline_mode<synchronous>, transform_indices = @transform_1, window_bounds = array<i64: 32, 96>}, {pipeline_mode = #tpu.pipeline_mode<synchronous>, transform_indices = @transform_2, window_bounds = array<i64: 1, 96>}, {pipeline_mode = #tpu.pipeline_mode<synchronous>, transform_indices = @transform_3, window_bounds = array<i64: 8, 32>}, {pipeline_mode = #tpu.pipeline_mode<synchronous>, transform_indices = @transform_4, window_bounds = array<i64: 32, 4>}, {pipeline_mode = #tpu.pipeline_mode<synchronous>, transform_indices = @transform_5, window_bounds = array<i64: 16, 4>}, {pipeline_mode = #tpu.pipeline_mode<synchronous>, transform_indices = @transform_6, window_bounds = array<i64: 4, 32>}, {pipeline_mode = #tpu.pipeline_mode<synchronous>, transform_indices = @transform_7, window_bounds = array<i64: 32, 8>}, {transform_indices = @transform_8, window_bounds = array<i64: 1, 64, 32>}]} {
    %c0 = arith.constant 0 : index
    %c0_0 = arith.constant 0 : index
    %c0_1 = arith.constant 0 : index
    %0 = vector.load %arg2[%c0, %c0_0, %c0_1] : memref<1x64x32xbf16, #tpu.memory_space<vmem>>, vector<1x64x32xbf16>
    %1 = vector.shape_cast %0 : vector<1x64x32xbf16> to vector<64x32xbf16>
    %c0_2 = arith.constant 0 : index
    %c0_3 = arith.constant 0 : index
    %2 = vector.load %arg3[%c0_2, %c0_3] : memref<32x96xbf16, #tpu.memory_space<vmem>>, vector<32x96xbf16>
    %cst = arith.constant dense<0.000000e+00> : vector<64x96xf32>
    %3 = tpu.matmul %1, %2, %cst {dimension_numbers = #tpu.dot_dimension_numbers<[1], [0], [0], [1], [0, 0, 1, 1], [], []>} : vector<64x32xbf16>, vector<32x96xbf16>, vector<64x96xf32> -> vector<64x96xf32>
    %c0_4 = arith.constant 0 : index
    %c0_5 = arith.constant 0 : index
    %4 = vector.load %arg4[%c0_4, %c0_5] : memref<1x96xf32, #tpu.memory_space<vmem>>, vector<1x96xf32>
    %5 = vector.broadcast %4 : vector<1x96xf32> to vector<64x96xf32>
    %6 = arith.addf %3, %5 : vector<64x96xf32>
    %c0_6 = arith.constant 0 : index
    %c0_7 = arith.constant 0 : index
    %7 = vector.load %arg11[%c0_6, %c0_7] : memref<64x96xf32, #tpu.memory_space<vmem>>, vector<64x96xf32>
    tpu.vector_store %arg11[%c0_6, %c0_7], %6 {strides = array<i32>} : memref<64x96xf32, #tpu.memory_space<vmem>>, vector<64x96xf32>,
    %c0_8 = arith.constant 0 : index
    %c0_9 = arith.constant 0 : index
    %8 = vector.load %arg5[%c0_8, %c0_9] : memref<8x32xf32, #tpu.memory_space<vmem>>, vector<8x32xf32>
    %c0_10 = arith.constant 0 : index
    %c0_11 = arith.constant 0 : index
    %9 = vector.load %arg6[%c0_10, %c0_11] : memref<32x4xf32, #tpu.memory_space<vmem>>, vector<32x4xf32>
    %c0_12 = arith.constant 0 : index
    %c0_13 = arith.constant 0 : index
    %10 = vector.load %arg7[%c0_12, %c0_13] : memref<16x4xf32, #tpu.memory_space<vmem>>, vector<16x4xf32>
    %c0_14 = arith.constant 0 : index
    %c0_15 = arith.constant 0 : index
    %11 = vector.load %arg8[%c0_14, %c0_15] : memref<4x32xf32, #tpu.memory_space<vmem>>, vector<4x32xf32>
    %c0_16 = arith.constant 0 : index
    %c0_17 = arith.constant 0 : index
    %12 = vector.load %arg9[%c0_16, %c0_17] : memref<32x8xf32, #tpu.memory_space<vmem>>, vector<32x8xf32>
    %c0_18 = arith.constant 0 : index
    %c32 = arith.constant 32 : index
    %13 = vector.load %arg11[%c0_18, %c32] : memref<64x96xf32, #tpu.memory_space<vmem>>, vector<64x32xf32>
    %c0_19 = arith.constant 0 : index
    %c0_20 = arith.constant 0 : index
    %14 = vector.load %arg11[%c0_19, %c0_20] : memref<64x96xf32, #tpu.memory_space<vmem>>, vector<64x8xf32>
    %cst_21 = arith.constant dense<0.000000e+00> : vector<64x32xf32>
    %15 = tpu.matmul %14, %8, %cst_21 {dimension_numbers = #tpu.dot_dimension_numbers<[1], [0], [0], [1], [0, 0, 1, 1], [], []>} : vector<64x8xf32>, vector<8x32xf32>, vector<64x32xf32> -> vector<64x32xf32>
    %16 = arith.mulf %15, %13 : vector<64x32xf32>
    %cst_22 = arith.constant dense<0.000000e+00> : vector<64x4xf32>
    %17 = tpu.matmul %16, %9, %cst_22 {dimension_numbers = #tpu.dot_dimension_numbers<[1], [0], [0], [1], [0, 0, 1, 1], [], []>} : vector<64x32xf32>, vector<32x4xf32>, vector<64x4xf32> -> vector<64x4xf32>
    %c0_23 = arith.constant 0 : index
    %c32_24 = arith.constant 32 : index
    %18 = vector.load %arg11[%c0_23, %c32_24] : memref<64x96xf32, #tpu.memory_space<vmem>>, vector<64x32xf32>
    %c0_25 = arith.constant 0 : index
    %c8 = arith.constant 8 : index
    %19 = vector.load %arg11[%c0_25, %c8] : memref<64x96xf32, #tpu.memory_space<vmem>>, vector<64x8xf32>
    %cst_26 = arith.constant dense<0.000000e+00> : vector<64x32xf32>
    %20 = tpu.matmul %19, %8, %cst_26 {dimension_numbers = #tpu.dot_dimension_numbers<[1], [0], [0], [1], [0, 0, 1, 1], [], []>} : vector<64x8xf32>, vector<8x32xf32>, vector<64x32xf32> -> vector<64x32xf32>
    %21 = arith.mulf %20, %18 : vector<64x32xf32>
    %cst_27 = arith.constant dense<0.000000e+00> : vector<64x4xf32>
    %22 = tpu.matmul %21, %9, %cst_27 {dimension_numbers = #tpu.dot_dimension_numbers<[1], [0], [0], [1], [0, 0, 1, 1], [], []>} : vector<64x32xf32>, vector<32x4xf32>, vector<64x4xf32> -> vector<64x4xf32>
    %c0_28 = arith.constant 0 : index
    %c32_29 = arith.constant 32 : index
    %23 = vector.load %arg11[%c0_28, %c32_29] : memref<64x96xf32, #tpu.memory_space<vmem>>, vector<64x32xf32>
    %c0_30 = arith.constant 0 : index
    %c16 = arith.constant 16 : index
    %24 = vector.load %arg11[%c0_30, %c16] : memref<64x96xf32, #tpu.memory_space<vmem>>, vector<64x8xf32>
    %cst_31 = arith.constant dense<0.000000e+00> : vector<64x32xf32>
    %25 = tpu.matmul %24, %8, %cst_31 {dimension_numbers = #tpu.dot_dimension_numbers<[1], [0], [0], [1], [0, 0, 1, 1], [], []>} : vector<64x8xf32>, vector<8x32xf32>, vector<64x32xf32> -> vector<64x32xf32>
    %26 = arith.mulf %25, %23 : vector<64x32xf32>
    %cst_32 = arith.constant dense<0.000000e+00> : vector<64x4xf32>
    %27 = tpu.matmul %26, %9, %cst_32 {dimension_numbers = #tpu.dot_dimension_numbers<[1], [0], [0], [1], [0, 0, 1, 1], [], []>} : vector<64x32xf32>, vector<32x4xf32>, vector<64x4xf32> -> vector<64x4xf32>
    %c0_33 = arith.constant 0 : index
    %c32_34 = arith.constant 32 : index
    %28 = vector.load %arg11[%c0_33, %c32_34] : memref<64x96xf32, #tpu.memory_space<vmem>>, vector<64x32xf32>
    %c0_35 = arith.constant 0 : index
    %c24 = arith.constant 24 : index
    %29 = vector.load %arg11[%c0_35, %c24] : memref<64x96xf32, #tpu.memory_space<vmem>>, vector<64x8xf32>
    %cst_36 = arith.constant dense<0.000000e+00> : vector<64x32xf32>
    %30 = tpu.matmul %29, %8, %cst_36 {dimension_numbers = #tpu.dot_dimension_numbers<[1], [0], [0], [1], [0, 0, 1, 1], [], []>} : vector<64x8xf32>, vector<8x32xf32>, vector<64x32xf32> -> vector<64x32xf32>
    %31 = arith.mulf %30, %28 : vector<64x32xf32>
    %cst_37 = arith.constant dense<0.000000e+00> : vector<64x4xf32>
    %32 = tpu.matmul %31, %9, %cst_37 {dimension_numbers = #tpu.dot_dimension_numbers<[1], [0], [0], [1], [0, 0, 1, 1], [], []>} : vector<64x32xf32>, vector<32x4xf32>, vector<64x4xf32> -> vector<64x4xf32>
    %33 = tpu.concatenate %17, %22, %27, %32 in 1 : vector<64x4xf32>, vector<64x4xf32>, vector<64x4xf32>, vector<64x4xf32> -> vector<64x16xf32>
    %cst_38 = arith.constant 5.000000e+00 : f32
    %34 = vector.broadcast %cst_38 : f32 to vector<64x16xf32>
    %35 = arith.subf %33, %34 : vector<64x16xf32>
    %36 = math.exp %35 : vector<64x16xf32>
    %cst_39 = arith.constant 5.000000e+00 : f32
    %37 = vector.broadcast %cst_39 : f32 to vector<64x16xf32>
    %38 = arith.cmpf ogt, %35, %37 : vector<64x16xf32>
    %cst_40 = arith.constant 0.000000e+00 : f32
    %cst_41 = arith.constant 5.000000e+00 : f32
    %39 = arith.subf %cst_40, %cst_41 : f32
    %40 = vector.broadcast %39 : f32 to vector<64x16xf32>
    %41 = arith.cmpf olt, %35, %40 : vector<64x16xf32>
    %42 = arith.ori %38, %41 : vector<64x16xi1>
    %cst_42 = arith.constant 0.000000e+00 : f32
    %43 = vector.broadcast %cst_42 : f32 to vector<64x16xf32>
    %44 = arith.select %42, %43, %36 : vector<64x16xi1>, vector<64x16xf32>
    %cst_43 = arith.constant dense<0.000000e+00> : vector<64x4xf32>
    %45 = tpu.matmul %44, %10, %cst_43 {dimension_numbers = #tpu.dot_dimension_numbers<[1], [0], [0], [1], [0, 0, 1, 1], [], []>} : vector<64x16xf32>, vector<16x4xf32>, vector<64x4xf32> -> vector<64x4xf32>
    %46 = tpu.reciprocal %45 {approx = true} : vector<64x4xf32> -> vector<64x4xf32>
    %cst_44 = arith.constant 0.000000e+00 : f32
    %47 = vector.broadcast %cst_44 : f32 to vector<64x4xf32>
    %48 = arith.cmpf oeq, %45, %47 : vector<64x4xf32>
    %cst_45 = arith.constant 0x7FC00000 : f32
    %49 = vector.broadcast %cst_45 : f32 to vector<64x4xf32>
    %50 = arith.select %48, %49, %46 : vector<64x4xi1>, vector<64x4xf32>
    %c0_46 = arith.constant 0 : index
    %c64 = arith.constant 64 : index
    %51 = vector.load %arg11[%c0_46, %c64] : memref<64x96xf32, #tpu.memory_space<vmem>>, vector<64x32xf32>
    %52 = vector.extract_strided_slice %44 {offsets = [0, 0], sizes = [64, 4], strides = [1, 1]} : vector<64x16xf32> to vector<64x4xf32>
    %53 = vector.extract_strided_slice %50 {offsets = [0, 0], sizes = [64, 1], strides = [1, 1]} : vector<64x4xf32> to vector<64x1xf32>
    %54 = vector.broadcast %53 : vector<64x1xf32> to vector<64x4xf32>
    %55 = arith.mulf %52, %54 : vector<64x4xf32>
    %cst_47 = arith.constant dense<0.000000e+00> : vector<64x32xf32>
    %56 = tpu.matmul %55, %11, %cst_47 {dimension_numbers = #tpu.dot_dimension_numbers<[1], [0], [0], [1], [0, 0, 1, 1], [], []>} : vector<64x4xf32>, vector<4x32xf32>, vector<64x32xf32> -> vector<64x32xf32>
    %57 = arith.mulf %56, %51 : vector<64x32xf32>
    %cst_48 = arith.constant dense<0.000000e+00> : vector<64x8xf32>
    %58 = tpu.matmul %57, %12, %cst_48 {dimension_numbers = #tpu.dot_dimension_numbers<[1], [0], [0], [1], [0, 0, 1, 1], [], []>} : vector<64x32xf32>, vector<32x8xf32>, vector<64x8xf32> -> vector<64x8xf32>
    %c0_49 = arith.constant 0 : index
    %c64_50 = arith.constant 64 : index
    %59 = vector.load %arg11[%c0_49, %c64_50] : memref<64x96xf32, #tpu.memory_space<vmem>>, vector<64x32xf32>
    %60 = vector.extract_strided_slice %44 {offsets = [0, 4], sizes = [64, 4], strides = [1, 1]} : vector<64x16xf32> to vector<64x4xf32>
    %61 = vector.extract_strided_slice %50 {offsets = [0, 1], sizes = [64, 1], strides = [1, 1]} : vector<64x4xf32> to vector<64x1xf32>
    %62 = vector.broadcast %61 : vector<64x1xf32> to vector<64x4xf32>
    %63 = arith.mulf %60, %62 : vector<64x4xf32>
    %cst_51 = arith.constant dense<0.000000e+00> : vector<64x32xf32>
    %64 = tpu.matmul %63, %11, %cst_51 {dimension_numbers = #tpu.dot_dimension_numbers<[1], [0], [0], [1], [0, 0, 1, 1], [], []>} : vector<64x4xf32>, vector<4x32xf32>, vector<64x32xf32> -> vector<64x32xf32>
    %65 = arith.mulf %64, %59 : vector<64x32xf32>
    %cst_52 = arith.constant dense<0.000000e+00> : vector<64x8xf32>
    %66 = tpu.matmul %65, %12, %cst_52 {dimension_numbers = #tpu.dot_dimension_numbers<[1], [0], [0], [1], [0, 0, 1, 1], [], []>} : vector<64x32xf32>, vector<32x8xf32>, vector<64x8xf32> -> vector<64x8xf32>
    %c0_53 = arith.constant 0 : index
    %c64_54 = arith.constant 64 : index
    %67 = vector.load %arg11[%c0_53, %c64_54] : memref<64x96xf32, #tpu.memory_space<vmem>>, vector<64x32xf32>
    %68 = vector.extract_strided_slice %44 {offsets = [0, 8], sizes = [64, 4], strides = [1, 1]} : vector<64x16xf32> to vector<64x4xf32>
    %69 = vector.extract_strided_slice %50 {offsets = [0, 2], sizes = [64, 1], strides = [1, 1]} : vector<64x4xf32> to vector<64x1xf32>
    %70 = vector.broadcast %69 : vector<64x1xf32> to vector<64x4xf32>
    %71 = arith.mulf %68, %70 : vector<64x4xf32>
    %cst_55 = arith.constant dense<0.000000e+00> : vector<64x32xf32>
    %72 = tpu.matmul %71, %11, %cst_55 {dimension_numbers = #tpu.dot_dimension_numbers<[1], [0], [0], [1], [0, 0, 1, 1], [], []>} : vector<64x4xf32>, vector<4x32xf32>, vector<64x32xf32> -> vector<64x32xf32>
    %73 = arith.mulf %72, %67 : vector<64x32xf32>
    %cst_56 = arith.constant dense<0.000000e+00> : vector<64x8xf32>
    %74 = tpu.matmul %73, %12, %cst_56 {dimension_numbers = #tpu.dot_dimension_numbers<[1], [0], [0], [1], [0, 0, 1, 1], [], []>} : vector<64x32xf32>, vector<32x8xf32>, vector<64x8xf32> -> vector<64x8xf32>
    %c0_57 = arith.constant 0 : index
    %c64_58 = arith.constant 64 : index
    %75 = vector.load %arg11[%c0_57, %c64_58] : memref<64x96xf32, #tpu.memory_space<vmem>>, vector<64x32xf32>
    %76 = vector.extract_strided_slice %44 {offsets = [0, 12], sizes = [64, 4], strides = [1, 1]} : vector<64x16xf32> to vector<64x4xf32>
    %77 = vector.extract_strided_slice %50 {offsets = [0, 3], sizes = [64, 1], strides = [1, 1]} : vector<64x4xf32> to vector<64x1xf32>
    %78 = vector.broadcast %77 : vector<64x1xf32> to vector<64x4xf32>
    %79 = arith.mulf %76, %78 : vector<64x4xf32>
    %cst_59 = arith.constant dense<0.000000e+00> : vector<64x32xf32>
    %80 = tpu.matmul %79, %11, %cst_59 {dimension_numbers = #tpu.dot_dimension_numbers<[1], [0], [0], [1], [0, 0, 1, 1], [], []>} : vector<64x4xf32>, vector<4x32xf32>, vector<64x32xf32> -> vector<64x32xf32>
    %81 = arith.mulf %80, %75 : vector<64x32xf32>
    %cst_60 = arith.constant dense<0.000000e+00> : vector<64x8xf32>
    %82 = tpu.matmul %81, %12, %cst_60 {dimension_numbers = #tpu.dot_dimension_numbers<[1], [0], [0], [1], [0, 0, 1, 1], [], []>} : vector<64x32xf32>, vector<32x8xf32>, vector<64x8xf32> -> vector<64x8xf32>
    %83 = tpu.concatenate %58, %66, %74, %82 in 1 : vector<64x8xf32>, vector<64x8xf32>, vector<64x8xf32>, vector<64x8xf32> -> vector<64x32xf32>
    %c0_61 = arith.constant 0 : index
    %c0_62 = arith.constant 0 : index
    %c0_63 = arith.constant 0 : index
    %84 = vector.load %arg10[%c0_61, %c0_62, %c0_63] : memref<1x64x32xf32, #tpu.memory_space<vmem>>, vector<1x64x32xf32>
    %85 = vector.shape_cast %84 : vector<1x64x32xf32> to vector<64x32xf32>
    %86 = vector.shape_cast %83 : vector<64x32xf32> to vector<1x64x32xf32>
    tpu.vector_store %arg10[%c0_61, %c0_62, %c0_63], %86 {strides = array<i32>} : memref<1x64x32xf32, #tpu.memory_space<vmem>>, vector<1x64x32xf32>,
    return
  }
  func.func @transform_0(%arg0: i32, %arg1: i32) -> (i32, i32, i32) {
    %c0_i32 = arith.constant 0 : i32
    %c0_i32_0 = arith.constant 0 : i32
    return %arg0, %arg1, %c0_i32 : i32, i32, i32
  }
  func.func @transform_1(%arg0: i32, %arg1: i32) -> (i32, i32) {
    %c0_i32 = arith.constant 0 : i32
    %c0_i32_0 = arith.constant 0 : i32
    %c0_i32_1 = arith.constant 0 : i32
    return %c0_i32, %c0_i32_0 : i32, i32
  }
  func.func @transform_2(%arg0: i32, %arg1: i32) -> (i32, i32) {
    %c0_i32 = arith.constant 0 : i32
    %c0_i32_0 = arith.constant 0 : i32
    %c0_i32_1 = arith.constant 0 : i32
    return %c0_i32, %c0_i32_0 : i32, i32
  }
  func.func @transform_3(%arg0: i32, %arg1: i32) -> (i32, i32) {
    %c0_i32 = arith.constant 0 : i32
    %c0_i32_0 = arith.constant 0 : i32
    %c0_i32_1 = arith.constant 0 : i32
    return %c0_i32, %c0_i32_0 : i32, i32
  }
  func.func @transform_4(%arg0: i32, %arg1: i32) -> (i32, i32) {
    %c0_i32 = arith.constant 0 : i32
    %c0_i32_0 = arith.constant 0 : i32
    %c0_i32_1 = arith.constant 0 : i32
    return %c0_i32, %c0_i32_0 : i32, i32
  }
  func.func @transform_5(%arg0: i32, %arg1: i32) -> (i32, i32) {
    %c0_i32 = arith.constant 0 : i32
    %c0_i32_0 = arith.constant 0 : i32
    %c0_i32_1 = arith.constant 0 : i32
    return %c0_i32, %c0_i32_0 : i32, i32
  }
  func.func @transform_6(%arg0: i32, %arg1: i32) -> (i32, i32) {
    %c0_i32 = arith.constant 0 : i32
    %c0_i32_0 = arith.constant 0 : i32
    %c0_i32_1 = arith.constant 0 : i32
    return %c0_i32, %c0_i32_0 : i32, i32
  }
  func.func @transform_7(%arg0: i32, %arg1: i32) -> (i32, i32) {
    %c0_i32 = arith.constant 0 : i32
    %c0_i32_0 = arith.constant 0 : i32
    %c0_i32_1 = arith.constant 0 : i32
    return %c0_i32, %c0_i32_0 : i32, i32
  }
  func.func @transform_8(%arg0: i32, %arg1: i32) -> (i32, i32, i32) {
    %c0_i32 = arith.constant 0 : i32
    %c0_i32_0 = arith.constant 0 : i32
    return %arg0, %arg1, %c0_i32 : i32, i32, i32
  }
}

</mosaic_0001>

<llo_original>
// kernel: tpu_custom_call.1
$region0: #{tpu_custom_call.1}
  #allocation0 [shape = 'u32[]', space=smem, size = 0x4, offset = 0x4, fixed_abs, tag = 'smem constant byte address 0x4 - core index']
  #allocation1 [shape = 'u32[144,128]{1,0:T(1,128)}', space=vmem, size = 0x12000, scoped, tag = 'internal scratch']
  #allocation2 [shape = 'f32[64,96]{1,0:T(8,128)}', space=vmem, size = 0x8000, scoped, tag = 'scratch operand']
  %s0 = inlined_call_operand.vmem [shape: bf16[2,128,32], index: 0, kind: input, shape index: {}]
  %s1 = inlined_call_operand.vmem [shape: bf16[32,96], index: 1, kind: input, shape index: {}]
  %s2 = inlined_call_operand.vmem [shape: f32[1,96], index: 2, kind: input, shape index: {}]
  %s3 = inlined_call_operand.vmem [shape: f32[8,32], index: 3, kind: input, shape index: {}]
  %s4 = inlined_call_operand.vmem [shape: f32[32,4], index: 4, kind: input, shape index: {}]
  %s5 = inlined_call_operand.vmem [shape: f32[16,4], index: 5, kind: input, shape index: {}]
  %s6 = inlined_call_operand.vmem [shape: f32[4,32], index: 6, kind: input, shape index: {}]
  %s7 = inlined_call_operand.vmem [shape: f32[32,8], index: 7, kind: input, shape index: {}]
  %s8 = inlined_call_operand.vmem [shape: f32[2,128,32], index: 8, kind: output, shape index: {}]
  %s9 = sld [smem:[#allocation0]]
  $region65: #{tpu_custom_call.1} parent=0
    _
  %s11 = ssub.s32 1, %s9
  %s12 = scalar_select 0, %s11, %s9
  loop: start=0, step=1, limit=6
  $region2: #{tpu_custom_call.1} parent=0 // loop_pre_header
    _
  $region3: #{tpu_custom_call.1} parent=0 // loop_header
    %s14 = sphi 0, %s18
    %p15 = scmp.ge.s32.totalorder %s14, 6
    %s21 = sphi 0, %s33
    %s22 = sphi 0, %s29
    %s23 = sphi 0, %s21
    %s24 = sphi 0, %s22
    %s25 = sphi 0, %s23
    %s26 = sphi 0, %s24
    %s38 = sphi 0, %s40
    %s41 = sphi 0, %s38
    %s42 = sphi 0, %s41
    %s58 = sphi 0, %s42
    %s62 = sphi 0, %s62
    %s64 = sphi 0, %s62
    %s65 = sphi 0, %s64
    %s79 = sphi 0, %s65
    %s83 = sphi 0, %s83
    %s85 = sphi 0, %s83
    %s86 = sphi 0, %s85
    %s100 = sphi 0, %s86
    %s104 = sphi 0, %s104
    %s106 = sphi 0, %s104
    %s107 = sphi 0, %s106
    %s121 = sphi 0, %s107
    %s125 = sphi 0, %s125
    %s127 = sphi 0, %s125
    %s128 = sphi 0, %s127
    %s142 = sphi 0, %s128
    %s146 = sphi 0, %s146
    %s148 = sphi 0, %s146
    %s149 = sphi 0, %s148
    %s163 = sphi 0, %s149
    %s167 = sphi 0, %s167
    %s169 = sphi 0, %s167
    %s170 = sphi 0, %s169
    %s184 = sphi 0, %s170
    %s188 = sphi 0, %s188
    %s190 = sphi 0, %s188
    %s191 = sphi 0, %s190
    %s205 = sphi 0, %s191
    %s213 = sphi 0, %s215
    %s216 = sphi 0, %s213
    %s217 = sphi 0, %s216
    %s233 = sphi 0, %s217
  $region4: #{tpu_custom_call.1} parent=0 // loop_header_branch
    %17 = sbr.rel (%p15) target = $region8
  $region5: #{tpu_custom_call.1} parent=0 // loop_body
    %s19 = ssub.s32 %s14, 1
    %s20 = ssub.s32 %s14, 2
    %s27 = sadd.s32 1, %s22
    %p28 = scmp.ge.s32.totalorder %s27, 2
    %s29 = scalar_select %p28, 0, %s27
    %s30 = sadd.s32 1, %s21
    %s31 = scalar_select %p28, %s30, %s21
    %p32 = scmp.ge.s32.totalorder %s31, 2
    %s33 = scalar_select %p32, 0, %s31
    %s34 = ssub.s32 %s21, %s33
    %s35 = ssub.s32 %s22, %s29
    %s36 = sor.u32 %s34, %s35
    %p37 = scmp.eq.s32.totalorder %s36, 0
    %s39 = sadd.s32 %s38, 1
    %s40 = scalar_select %p37, %s38, %s39
    %p43 = pneg %p37
    %p44 = scmp.eq.s32.totalorder %s14, 3
    %p45 = por %p43, %p44
    %p46 = scmp.ne.s32.totalorder %s38, %s41
    %p47 = scmp.eq.s32.totalorder %s14, 0
    %p48 = por %p46, %p47
    %p49 = scmp.ne.s32.totalorder %s38, %s41
    %p50 = scmp.eq.s32.totalorder %s19, 3
    %p51 = por %p49, %p50
    %p52 = scmp.ne.s32.totalorder %s41, %s42
    %p53 = scmp.eq.s32.totalorder %s19, 0
    %p54 = por %p52, %p53
    %p55 = scmp.ne.s32.totalorder %s41, %s42
    %p56 = scmp.eq.s32.totalorder %s20, 3
    %p57 = por %p55, %p56
    %p59 = scmp.ne.s32.totalorder %s42, %s58
    %p60 = scmp.eq.s32.totalorder %s20, 0
    %p61 = por %p59, %p60
    %s63 = sadd.s32 %s62, 1
    %p66 = scmp.eq.s32.totalorder %s14, 3
    %p67 = scmp.ne.s32.totalorder %s62, %s64
    %p68 = scmp.eq.s32.totalorder %s14, 0
    %p69 = por %p67, %p68
    %p70 = scmp.ne.s32.totalorder %s62, %s64
    %p71 = scmp.eq.s32.totalorder %s19, 3
    %p72 = por %p70, %p71
    %p73 = scmp.ne.s32.totalorder %s64, %s65
    %p74 = scmp.eq.s32.totalorder %s19, 0
    %p75 = por %p73, %p74
    %p76 = scmp.ne.s32.totalorder %s64, %s65
    %p77 = scmp.eq.s32.totalorder %s20, 3
    %p78 = por %p76, %p77
    %p80 = scmp.ne.s32.totalorder %s65, %s79
    %p81 = scmp.eq.s32.totalorder %s20, 0
    %p82 = por %p80, %p81
    %s84 = sadd.s32 %s83, 1
    %p87 = scmp.eq.s32.totalorder %s14, 3
    %p88 = scmp.ne.s32.totalorder %s83, %s85
    %p89 = scmp.eq.s32.totalorder %s14, 0
    %p90 = por %p88, %p89
    %p91 = scmp.ne.s32.totalorder %s83, %s85
    %p92 = scmp.eq.s32.totalorder %s19, 3
    %p93 = por %p91, %p92
    %p94 = scmp.ne.s32.totalorder %s85, %s86
    %p95 = scmp.eq.s32.totalorder %s19, 0
    %p96 = por %p94, %p95
    %p97 = scmp.ne.s32.totalorder %s85, %s86
    %p98 = scmp.eq.s32.totalorder %s20, 3
    %p99 = por %p97, %p98
    %p101 = scmp.ne.s32.totalorder %s86, %s100
    %p102 = scmp.eq.s32.totalorder %s20, 0
    %p103 = por %p101, %p102
    %s105 = sadd.s32 %s104, 1
    %p108 = scmp.eq.s32.totalorder %s14, 3
    %p109 = scmp.ne.s32.totalorder %s104, %s106
    %p110 = scmp.eq.s32.totalorder %s14, 0
    %p111 = por %p109, %p110
    %p112 = scmp.ne.s32.totalorder %s104, %s106
    %p113 = scmp.eq.s32.totalorder %s19, 3
    %p114 = por %p112, %p113
    %p115 = scmp.ne.s32.totalorder %s106, %s107
    %p116 = scmp.eq.s32.totalorder %s19, 0
    %p117 = por %p115, %p116
    %p118 = scmp.ne.s32.totalorder %s106, %s107
    %p119 = scmp.eq.s32.totalorder %s20, 3
    %p120 = por %p118, %p119
    %p122 = scmp.ne.s32.totalorder %s107, %s121
    %p123 = scmp.eq.s32.totalorder %s20, 0
    %p124 = por %p122, %p123
    %s126 = sadd.s32 %s125, 1
    %p129 = scmp.eq.s32.totalorder %s14, 3
    %p130 = scmp.ne.s32.totalorder %s125, %s127
    %p131 = scmp.eq.s32.totalorder %s14, 0
    %p132 = por %p130, %p131
    %p133 = scmp.ne.s32.totalorder %s125, %s127
    %p134 = scmp.eq.s32.totalorder %s19, 3
    %p135 = por %p133, %p134
    %p136 = scmp.ne.s32.totalorder %s127, %s128
    %p137 = scmp.eq.s32.totalorder %s19, 0
    %p138 = por %p136, %p137
    %p139 = scmp.ne.s32.totalorder %s127, %s128
    %p140 = scmp.eq.s32.totalorder %s20, 3
    %p141 = por %p139, %p140
    %p143 = scmp.ne.s32.totalorder %s128, %s142
    %p144 = scmp.eq.s32.totalorder %s20, 0
    %p145 = por %p143, %p144
    %s147 = sadd.s32 %s146, 1
    %p150 = scmp.eq.s32.totalorder %s14, 3
    %p151 = scmp.ne.s32.totalorder %s146, %s148
    %p152 = scmp.eq.s32.totalorder %s14, 0
    %p153 = por %p151, %p152
    %p154 = scmp.ne.s32.totalorder %s146, %s148
    %p155 = scmp.eq.s32.totalorder %s19, 3
    %p156 = por %p154, %p155
    %p157 = scmp.ne.s32.totalorder %s148, %s149
    %p158 = scmp.eq.s32.totalorder %s19, 0
    %p159 = por %p157, %p158
    %p160 = scmp.ne.s32.totalorder %s148, %s149
    %p161 = scmp.eq.s32.totalorder %s20, 3
    %p162 = por %p160, %p161
    %p164 = scmp.ne.s32.totalorder %s149, %s163
    %p165 = scmp.eq.s32.totalorder %s20, 0
    %p166 = por %p164, %p165
    %s168 = sadd.s32 %s167, 1
    %p171 = scmp.eq.s32.totalorder %s14, 3
    %p172 = scmp.ne.s32.totalorder %s167, %s169
    %p173 = scmp.eq.s32.totalorder %s14, 0
    %p174 = por %p172, %p173
    %p175 = scmp.ne.s32.totalorder %s167, %s169
    %p176 = scmp.eq.s32.totalorder %s19, 3
    %p177 = por %p175, %p176
    %p178 = scmp.ne.s32.totalorder %s169, %s170
    %p179 = scmp.eq.s32.totalorder %s19, 0
    %p180 = por %p178, %p179
    %p181 = scmp.ne.s32.totalorder %s169, %s170
    %p182 = scmp.eq.s32.totalorder %s20, 3
    %p183 = por %p181, %p182
    %p185 = scmp.ne.s32.totalorder %s170, %s184
    %p186 = scmp.eq.s32.totalorder %s20, 0
    %p187 = por %p185, %p186
    %s189 = sadd.s32 %s188, 1
    %p192 = scmp.eq.s32.totalorder %s14, 3
    %p193 = scmp.ne.s32.totalorder %s188, %s190
    %p194 = scmp.eq.s32.totalorder %s14, 0
    %p195 = por %p193, %p194
    %p196 = scmp.ne.s32.totalorder %s188, %s190
    %p197 = scmp.eq.s32.totalorder %s19, 3
    %p198 = por %p196, %p197
    %p199 = scmp.ne.s32.totalorder %s190, %s191
    %p200 = scmp.eq.s32.totalorder %s19, 0
    %p201 = por %p199, %p200
    %p202 = scmp.ne.s32.totalorder %s190, %s191
    %p203 = scmp.eq.s32.totalorder %s20, 3
    %p204 = por %p202, %p203
    %p206 = scmp.ne.s32.totalorder %s191, %s205
    %p207 = scmp.eq.s32.totalorder %s20, 0
    %p208 = por %p206, %p207
    %s209 = ssub.s32 %s21, %s33
    %s210 = ssub.s32 %s22, %s29
    %s211 = sor.u32 %s209, %s210
    %p212 = scmp.eq.s32.totalorder %s211, 0
    %s214 = sadd.s32 %s213, 1
    %s215 = scalar_select %p212, %s213, %s214
    %p218 = pneg %p212
    %p219 = scmp.eq.s32.totalorder %s14, 3
    %p220 = por %p218, %p219
    %p221 = scmp.ne.s32.totalorder %s213, %s216
    %p222 = scmp.eq.s32.totalorder %s14, 0
    %p223 = por %p221, %p222
    %p224 = scmp.ne.s32.totalorder %s213, %s216
    %p225 = scmp.eq.s32.totalorder %s19, 3
    %p226 = por %p224, %p225
    %p227 = scmp.ne.s32.totalorder %s216, %s217
    %p228 = scmp.eq.s32.totalorder %s19, 0
    %p229 = por %p227, %p228
    %p230 = scmp.ne.s32.totalorder %s216, %s217
    %p231 = scmp.eq.s32.totalorder %s20, 3
    %p232 = por %p230, %p231
    %p234 = scmp.ne.s32.totalorder %s217, %s233
    %p235 = scmp.eq.s32.totalorder %s20, 0
    %p236 = por %p234, %p235
    %p237 = scmp.le.s32.totalorder 1, %s14
    %p238 = scmp.lt.s32.totalorder %s14, 5
    %p239 = pnand %p237, %p238
    %p240 = pneg %p239
    // Predicated region
    $region9: #{tpu_custom_call.1} parent=5 // pred_check
      _
    $region10: #{tpu_custom_call.1} parent=5 // pred_check_branch
      %242 = sbr.rel (%p239) target = $region12
    $region11: #{tpu_custom_call.1} parent=5 // pred_region
      %s243 = ssub.s32 %s14, 1
      // Predicated region
      $region13: #{tpu_custom_call.1} parent=11 // pred_check
        %p244 = pneg %p75
      $region14: #{tpu_custom_call.1} parent=11 // pred_check_branch
        %246 = sbr.rel (%p244) target = $region16
      $region15: #{tpu_custom_call.1} parent=11 // pred_region
        _
      $region16: #{tpu_custom_call.1} parent=11 // pred_fallthru
        _
      // Predicated region
      $region17: #{tpu_custom_call.1} parent=11 // pred_check
        %p247 = pneg %p96
      $region18: #{tpu_custom_call.1} parent=11 // pred_check_branch
        %249 = sbr.rel (%p247) target = $region20
      $region19: #{tpu_custom_call.1} parent=11 // pred_region
        _
      $region20: #{tpu_custom_call.1} parent=11 // pred_fallthru
        _
      // Predicated region
      $region21: #{tpu_custom_call.1} parent=11 // pred_check
        %p250 = pneg %p117
      $region22: #{tpu_custom_call.1} parent=11 // pred_check_branch
        %252 = sbr.rel (%p250) target = $region24
      $region23: #{tpu_custom_call.1} parent=11 // pred_region
        _
      $region24: #{tpu_custom_call.1} parent=11 // pred_fallthru
        _
      // Predicated region
      $region25: #{tpu_custom_call.1} parent=11 // pred_check
        %p253 = pneg %p138
      $region26: #{tpu_custom_call.1} parent=11 // pred_check_branch
        %255 = sbr.rel (%p253) target = $region28
      $region27: #{tpu_custom_call.1} parent=11 // pred_region
        _
      $region28: #{tpu_custom_call.1} parent=11 // pred_fallthru
        _
      // Predicated region
      $region29: #{tpu_custom_call.1} parent=11 // pred_check
        %p256 = pneg %p159
      $region30: #{tpu_custom_call.1} parent=11 // pred_check_branch
        %258 = sbr.rel (%p256) target = $region32
      $region31: #{tpu_custom_call.1} parent=11 // pred_region
        _
      $region32: #{tpu_custom_call.1} parent=11 // pred_fallthru
        _
      // Predicated region
      $region33: #{tpu_custom_call.1} parent=11 // pred_check
        %p259 = pneg %p180
      $region34: #{tpu_custom_call.1} parent=11 // pred_check_branch
        %261 = sbr.rel (%p259) target = $region36
      $region35: #{tpu_custom_call.1} parent=11 // pred_region
        _
      $region36: #{tpu_custom_call.1} parent=11 // pred_fallthru
        _
      // Predicated region
      $region37: #{tpu_custom_call.1} parent=11 // pred_check
        %p262 = pneg %p201
      $region38: #{tpu_custom_call.1} parent=11 // pred_check_branch
        %264 = sbr.rel (%p262) target = $region40
      $region39: #{tpu_custom_call.1} parent=11 // pred_region
        _
      $region40: #{tpu_custom_call.1} parent=11 // pred_fallthru
        _
    $region12: #{tpu_custom_call.1} parent=5 // pred_fallthru
      _
    %p265 = scmp.lt.s32.totalorder %s14, 4
    // Predicated region
    $region41: #{tpu_custom_call.1} parent=5 // pred_check
      %p266 = pneg %p265
    $region42: #{tpu_custom_call.1} parent=5 // pred_check_branch
      %268 = sbr.rel (%p266) target = $region44
    $region43: #{tpu_custom_call.1} parent=5 // pred_region
      // Predicated region
      $region45: #{tpu_custom_call.1} parent=43 // pred_check
        %p269 = pneg %p48
      $region46: #{tpu_custom_call.1} parent=43 // pred_check_branch
        %271 = sbr.rel (%p269) target = $region48
      $region47: #{tpu_custom_call.1} parent=43 // pred_region
        %s272 = smul.u32 8, %s22
        %p273 = scmp.lt.s32.totalorder %s21, 1
        %s274 = scalar_select %p273, %s21, 1
        %p275 = scmp.lt.s32.totalorder %s272, 15
        %s276 = scalar_select %p275, %s272, 15
        %s277 = smul.addr %s274, 16
        %s278 = sadd.s32 %s276, %s277
        %s279 = smul.addr %s278, 4
        %s280 = scalar_lea.vmem %s0, %s279
        %s281 = smul.u32 8, %s22
      $region48: #{tpu_custom_call.1} parent=43 // pred_fallthru
        _
    $region44: #{tpu_custom_call.1} parent=5 // pred_fallthru
      _
    %p282 = scmp.le.s32.totalorder 1, %s14
    %p283 = scmp.lt.s32.totalorder %s14, 5
    %p284 = pnand %p282, %p283
    %p285 = pneg %p284
    // Predicated region
    $region49: #{tpu_custom_call.1} parent=5 // pred_check
      _
    $region50: #{tpu_custom_call.1} parent=5 // pred_check_branch
      %287 = sbr.rel (%p284) target = $region52
    $region51: #{tpu_custom_call.1} parent=5 // pred_region
      %s288 = ssub.s32 %s14, 1
      %s289 = smul.u32 8, %s24
      %p290 = scmp.lt.s32.totalorder %s23, 1
      %s291 = scalar_select %p290, %s23, 1
      %p292 = scmp.lt.s32.totalorder %s289, 15
      %s293 = scalar_select %p292, %s289, 15
      %s294 = smul.addr %s291, 16
      %s295 = sadd.s32 %s293, %s294
      %s296 = smul.addr %s295, 4
      %s297 = scalar_lea.vmem %s0, %s296
      %p298 = pneg %p54
      %p299 = pneg %p51
      %p300 = pneg %p75
      %p301 = pneg %p72
      %p302 = pneg %p96
      %p303 = pneg %p93
      %p304 = pneg %p117
      %p305 = pneg %p114
      %p306 = pneg %p138
      %p307 = pneg %p135
      %p308 = pneg %p159
      %p309 = pneg %p156
      %p310 = pneg %p180
      %p311 = pneg %p177
      %p312 = pneg %p201
      %p313 = pneg %p198
      %p314 = pneg %p229
      %p315 = pneg %p226
      %s316 = smul.u32 8, %s24
      %p317 = scmp.lt.s32.totalorder %s23, 1
      %s318 = scalar_select %p317, %s23, 1
      %p319 = scmp.lt.s32.totalorder %s316, 15
      %s320 = scalar_select %p319, %s316, 15
      %s321 = smul.addr %s318, 16
      %s322 = sadd.s32 %s320, %s321
      %s323 = smul.addr %s322, 8
      %s324 = scalar_lea.vmem %s8, %s323
      %s325 = smul.u32 8, %s24
      %p326 = scmp.lt.s32.totalorder %s23, 1
      %s327 = scalar_select %p326, %s23, 1
      %p328 = scmp.lt.s32.totalorder %s325, 15
      %s329 = scalar_select %p328, %s325, 15
      %s330 = smul.addr %s327, 16
      %s331 = sadd.s32 %s329, %s330
      %s332 = smul.addr %s331, 4
      %s333 = scalar_lea.vmem %s0, %s332
      %s334 = smul.u32 8, %s24
      %s335 = smul.u32 8, %s24
      %p336 = scmp.lt.s32.totalorder %s23, 1
      %s337 = scalar_select %p336, %s23, 1
      %p338 = scmp.lt.s32.totalorder %s335, 15
      %s339 = scalar_select %p338, %s335, 15
      %s340 = smul.addr %s337, 16
      %s341 = sadd.s32 %s339, %s340
      %s342 = smul.addr %s341, 8
      %s343 = scalar_lea.vmem %s8, %s342
      %s344 = smul.u32 8, %s24
      %v346 = vld [vmem:[%s333] sm:$0xf]
      %v347 = vld [vmem:[%s333 + $0x4] sm:$0xf]
      %v348 = vld [vmem:[%s333 + $0x8] sm:$0xf]
      %v349 = vld [vmem:[%s333 + $0xc] sm:$0xf]
      %v350 = vld [vmem:[%s333 + $0x10] sm:$0xf]
      %v351 = vld [vmem:[%s333 + $0x14] sm:$0xf]
      %v352 = vld [vmem:[%s333 + $0x18] sm:$0xf]
      %v353 = vld [vmem:[%s333 + $0x1c] sm:$0xf]
      %v354 = vld [vmem:[%s1] sm:$0xf]
      %v355 = vld [vmem:[%s1 + $0x4] sm:$0xf]
      %v356 = vld [vmem:[%s1 + $0x8] sm:$0xf]
      %v357 = vld [vmem:[%s1 + $0xc] sm:$0xf]
      %v358 = vld [vmem:[%s2] sm:$0x1]
      %v360 = vlaneseq
      %v361 = vshrl.u32 %v360, 7
      %v362 = vsub.s32 0, %v361
      %v363 = vrot.slane %v358, %v362
      %v373 = vunpack.c.l.b16 %v346
      %v374 = vunpack.c.l.b16 %v347
      %v375 = vunpack.c.l.b16 %v348
      %v376 = vunpack.c.l.b16 %v349
      %v377 = vunpack.c.l.b16 %v350
      %v378 = vunpack.c.l.b16 %v351
      %v379 = vunpack.c.l.b16 %v352
      %v380 = vunpack.c.l.b16 %v353
      %v381 = vpack.c.b16 %v374, %v373
      %v382 = vpack.c.b16 %v376, %v375
      %v383 = vpack.c.b16 %v378, %v377
      %v384 = vpack.c.b16 %v380, %v379
      %v389 = vunpack.c.l.b16 %v354
      %v390 = vunpack.c.l.b16 %v355
      %v391 = vunpack.c.l.b16 %v356
      %v392 = vunpack.c.l.b16 %v357
      %v393 = vpack.c.b16 %v390, %v389
      %v394 = vpack.c.b16 %v392, %v391
      %vm397 = vcmask 261120
      %v399 = vsel %vm397, %v381, 0
      %v402 = vsel %vm397, %v382, 0
      %v405 = vsel %vm397, %v383, 0
      %v408 = vsel %vm397, %v384, 0
      %410 = vmatprep.subr.bf16.mxu0 0
      %411 = vmatpush1.bf16.msra.mxu0 %v393
      %412 = vmatprep.subr.bf16.mxu0 0
      %413 = vmatpush1.bf16.msra.mxu0 %v394
      %414 = vmatprep.subr.bf16.mxu0 0
      %415 = vmatpush1.bf16.msra.mxu0 0
      %416 = vmatprep.subr.bf16.mxu0 0
      %417 = vmatpush1.bf16.msra.mxu0 0
      %418 = vmatprep.subr.bf16.mxu0 0
      %419 = vmatpush1.bf16.msra.mxu0 0
      %420 = vmatprep.subr.bf16.mxu0 0
      %421 = vmatpush1.bf16.msra.mxu0 0
      %422 = vmatprep.subr.bf16.mxu0 0
      %423 = vmatpush1.bf16.msra.mxu0 0
      %424 = vmatprep.subr.bf16.mxu0 0
      %425 = vmatpush1.bf16.msra.mxu0 0
      %426 = vmatprep.subr.bf16.mxu0 0
      %427 = vmatpush1.bf16.msra.mxu0 0
      %428 = vmatprep.subr.bf16.mxu0 0
      %429 = vmatpush1.bf16.msra.mxu0 0
      %430 = vmatprep.subr.bf16.mxu0 0
      %431 = vmatpush1.bf16.msra.mxu0 0
      %432 = vmatprep.subr.bf16.mxu0 0
      %433 = vmatpush1.bf16.msra.mxu0 0
      %434 = vmatprep.subr.bf16.mxu0 0
      %435 = vmatpush1.bf16.msra.mxu0 0
      %436 = vmatprep.subr.bf16.mxu0 0
      %437 = vmatpush1.bf16.msra.mxu0 0
      %438 = vmatprep.subr.bf16.mxu0 0
      %439 = vmatpush1.bf16.msra.mxu0 0
      %440 = vmatprep.subr.bf16.mxu0 0
      %441 = vmatpush1.bf16.msra.mxu0 0
      %442 = vmatprep.mubr.bf16.mxu0 0
      %443 = vmatmul.mubr.bf16.gmra.mrb[0].mxu0 %v399
      %v444 = vpop.f32.mrb[0].mxu0
      %v445 = vadd.f32 %v363, %v444
      %v446 = vpop.f32.mrb[0].mxu0
      %v447 = vpop.f32.mrb[0].mxu0
      %v448 = vadd.f32 %v363, %v447
      %v449 = vpop.f32.mrb[0].mxu0
      %450 = vmatprep.mubr.bf16.mxu0 0
      %451 = vmatmul.mubr.bf16.gmra.mrb[0].mxu0 %v402
      %v452 = vpop.f32.mrb[0].mxu0
      %v453 = vadd.f32 %v363, %v452
      %v454 = vpop.f32.mrb[0].mxu0
      %v455 = vpop.f32.mrb[0].mxu0
      %v456 = vadd.f32 %v363, %v455
      %v457 = vpop.f32.mrb[0].mxu0
      %458 = vmatprep.mubr.bf16.mxu0 0
      %459 = vmatmul.mubr.bf16.gmra.mrb[0].mxu0 %v405
      %v460 = vpop.f32.mrb[0].mxu0
      %v461 = vadd.f32 %v363, %v460
      %v462 = vpop.f32.mrb[0].mxu0
      %v463 = vpop.f32.mrb[0].mxu0
      %v464 = vadd.f32 %v363, %v463
      %v465 = vpop.f32.mrb[0].mxu0
      %466 = vmatprep.mubr.bf16.mxu0 0
      %467 = vmatmul.mubr.bf16.gmra.mrb[0].mxu0 %v408
      %v468 = vpop.f32.mrb[0].mxu0
      %v469 = vadd.f32 %v363, %v468
      %v470 = vpop.f32.mrb[0].mxu0
      %v471 = vpop.f32.mrb[0].mxu0
      %v472 = vadd.f32 %v363, %v471
      %v473 = vpop.f32.mrb[0].mxu0
      %474 = vdwg.mxu0
      %vm475 = vcmask 785408
      %476 = vst.msk [vmem:[#allocation2] sm:$0xff] %vm475, %v445
      %477 = vst.msk [vmem:[#allocation2 + $0x8] sm:$0xff] %vm475, %v448
      %478 = vst.msk [vmem:[#allocation2 + $0x10] sm:$0xff] %vm475, %v453
      %479 = vst.msk [vmem:[#allocation2 + $0x18] sm:$0xff] %vm475, %v456
      %480 = vst.msk [vmem:[#allocation2 + $0x20] sm:$0xff] %vm475, %v461
      %481 = vst.msk [vmem:[#allocation2 + $0x28] sm:$0xff] %vm475, %v464
      %482 = vst.msk [vmem:[#allocation2 + $0x30] sm:$0xff] %vm475, %v469
      %483 = vst.msk [vmem:[#allocation2 + $0x38] sm:$0xff] %vm475, %v472
      %v484 = vld [vmem:[%s3] sm:$0xff]
      %v485 = vld [vmem:[%s4] sm:$0xff]
      %v486 = vld [vmem:[%s4 + $0x8] sm:$0xff]
      %v487 = vld [vmem:[%s4 + $0x10] sm:$0xff]
      %v488 = vld [vmem:[%s4 + $0x18] sm:$0xff]
      %v489 = vld [vmem:[%s5] sm:$0xff]
      %v490 = vld [vmem:[%s5 + $0x8] sm:$0xff]
      %v491 = vld [vmem:[%s6] sm:$0xf]
      %v492 = vld [vmem:[%s7] sm:$0xff]
      %v493 = vld [vmem:[%s7 + $0x8] sm:$0xff]
      %v494 = vld [vmem:[%s7 + $0x10] sm:$0xff]
      %v495 = vld [vmem:[%s7 + $0x18] sm:$0xff]
      %v496 = vld [vmem:[#allocation2] sm:$0xff]
      %v497 = vld [vmem:[#allocation2 + $0x8] sm:$0xff]
      %v498 = vld [vmem:[#allocation2 + $0x10] sm:$0xff]
      %v499 = vld [vmem:[#allocation2 + $0x18] sm:$0xff]
      %v500 = vld [vmem:[#allocation2 + $0x20] sm:$0xff]
      %v501 = vld [vmem:[#allocation2 + $0x28] sm:$0xff]
      %v502 = vld [vmem:[#allocation2 + $0x30] sm:$0xff]
      %v503 = vld [vmem:[#allocation2 + $0x38] sm:$0xff]
      %vm504 = vcmask 64512
      %v506 = vsel %vm504, %v496, 0
      %v509 = vsel %vm504, %v497, 0
      %v512 = vsel %vm504, %v498, 0
      %v515 = vsel %vm504, %v499, 0
      %v518 = vsel %vm504, %v500, 0
      %v521 = vsel %vm504, %v501, 0
      %v524 = vsel %vm504, %v502, 0
      %v527 = vsel %vm504, %v503, 0
      %529 = vmatprep.subr.mxu0 0.0
      %530 = vmatpush1.msra.mxu0 %v484
      %531 = vmatprep.subr.mxu0 0.0
      %532 = vmatpush1.msra.mxu0 0.0
      %533 = vmatprep.subr.mxu0 0.0
      %534 = vmatpush1.msra.mxu0 0.0
      %535 = vmatprep.subr.mxu0 0.0
      %536 = vmatpush1.msra.mxu0 0.0
      %537 = vmatprep.subr.mxu0 0.0
      %538 = vmatpush1.msra.mxu0 0.0
      %539 = vmatprep.subr.mxu0 0.0
      %540 = vmatpush1.msra.mxu0 0.0
      %541 = vmatprep.subr.mxu0 0.0
      %542 = vmatpush1.msra.mxu0 0.0
      %543 = vmatprep.subr.mxu0 0.0
      %544 = vmatpush1.msra.mxu0 0.0
      %545 = vmatprep.subr.mxu0 0.0
      %546 = vmatpush1.msra.mxu0 0.0
      %547 = vmatprep.subr.mxu0 0.0
      %548 = vmatpush1.msra.mxu0 0.0
      %549 = vmatprep.subr.mxu0 0.0
      %550 = vmatpush1.msra.mxu0 0.0
      %551 = vmatprep.subr.mxu0 0.0
      %552 = vmatpush1.msra.mxu0 0.0
      %553 = vmatprep.subr.mxu0 0.0
      %554 = vmatpush1.msra.mxu0 0.0
      %555 = vmatprep.subr.mxu0 0.0
      %556 = vmatpush1.msra.mxu0 0.0
      %557 = vmatprep.subr.mxu0 0.0
      %558 = vmatpush1.msra.mxu0 0.0
      %559 = vmatprep.subr.mxu0 0.0
      %560 = vmatpush1.msra.mxu0 0.0
      %561 = vmatprep.subr.mxu0 0.0
      %562 = vmatpush1.msra.mxu0 0.0
      %563 = vmatprep.subr.mxu0 0.0
      %564 = vmatpush1.msra.mxu0 0.0
      %565 = vmatprep.subr.mxu0 0.0
      %566 = vmatpush1.msra.mxu0 0.0
      %567 = vmatprep.subr.mxu0 0.0
      %568 = vmatpush1.msra.mxu0 0.0
      %569 = vmatprep.subr.mxu0 0.0
      %570 = vmatpush1.msra.mxu0 0.0
      %571 = vmatprep.subr.mxu0 0.0
      %572 = vmatpush1.msra.mxu0 0.0
      %573 = vmatprep.subr.mxu0 0.0
      %574 = vmatpush1.msra.mxu0 0.0
      %575 = vmatprep.subr.mxu0 0.0
      %576 = vmatpush1.msra.mxu0 0.0
      %577 = vmatprep.subr.mxu0 0.0
      %578 = vmatpush1.msra.mxu0 0.0
      %579 = vmatprep.subr.mxu0 0.0
      %580 = vmatpush1.msra.mxu0 0.0
      %581 = vmatprep.subr.mxu0 0.0
      %582 = vmatpush1.msra.mxu0 0.0
      %583 = vmatprep.subr.mxu0 0.0
      %584 = vmatpush1.msra.mxu0 0.0
      %585 = vmatprep.subr.mxu0 0.0
      %586 = vmatpush1.msra.mxu0 0.0
      %587 = vmatprep.subr.mxu0 0.0
      %588 = vmatpush1.msra.mxu0 0.0
      %589 = vmatprep.subr.mxu0 0.0
      %590 = vmatpush1.msra.mxu0 0.0
      %591 = vmatprep.subr.mxu0 0.0
      %592 = vmatpush1.msra.mxu0 0.0
      %593 = vmatprep.mubr.f32.mxu0 0.0
      %594 = vmatmul.mubr.f32.gmra.mrb[0].mxu0 %v506
      %v595 = vpop.f32.mrb[0].mxu0
      %v596 = vadd.f32 0.0, %v595
      %v597 = vpop.f32.mrb[0].mxu0
      %598 = vmatprep.mubr.f32.mxu0 0.0
      %599 = vmatmul.mubr.f32.gmra.mrb[0].mxu0 %v509
      %v600 = vpop.f32.mrb[0].mxu0
      %v601 = vadd.f32 0.0, %v600
      %v602 = vpop.f32.mrb[0].mxu0
      %603 = vmatprep.mubr.f32.mxu0 0.0
      %604 = vmatmul.mubr.f32.gmra.mrb[0].mxu0 %v512
      %v605 = vpop.f32.mrb[0].mxu0
      %v606 = vadd.f32 0.0, %v605
      %v607 = vpop.f32.mrb[0].mxu0
      %608 = vmatprep.mubr.f32.mxu0 0.0
      %609 = vmatmul.mubr.f32.gmra.mrb[0].mxu0 %v515
      %v610 = vpop.f32.mrb[0].mxu0
      %v611 = vadd.f32 0.0, %v610
      %v612 = vpop.f32.mrb[0].mxu0
      %613 = vmatprep.mubr.f32.mxu0 0.0
      %614 = vmatmul.mubr.f32.gmra.mrb[0].mxu0 %v518
      %v615 = vpop.f32.mrb[0].mxu0
      %v616 = vadd.f32 0.0, %v615
      %v617 = vpop.f32.mrb[0].mxu0
      %618 = vmatprep.mubr.f32.mxu0 0.0
      %619 = vmatmul.mubr.f32.gmra.mrb[0].mxu0 %v521
      %v620 = vpop.f32.mrb[0].mxu0
      %v621 = vadd.f32 0.0, %v620
      %v622 = vpop.f32.mrb[0].mxu0
      %623 = vmatprep.mubr.f32.mxu0 0.0
      %624 = vmatmul.mubr.f32.gmra.mrb[0].mxu0 %v524
      %v625 = vpop.f32.mrb[0].mxu0
      %v626 = vadd.f32 0.0, %v625
      %v627 = vpop.f32.mrb[0].mxu0
      %628 = vmatprep.mubr.f32.mxu0 0.0
      %629 = vmatmul.mubr.f32.gmra.mrb[0].mxu0 %v527
      %v630 = vpop.f32.mrb[0].mxu0
      %v631 = vadd.f32 0.0, %v630
      %v632 = vpop.f32.mrb[0].mxu0
      %633 = vdwg.mxu0
      %634 = vrot.lane.b32.xlu0 %v496, 96
      %v635 = vpop.permute.xlu0 %634
      %636 = vrot.lane.b32.xlu0 %v497, 96
      %v637 = vpop.permute.xlu0 %636
      %638 = vrot.lane.b32.xlu0 %v498, 96
      %v639 = vpop.permute.xlu0 %638
      %640 = vrot.lane.b32.xlu0 %v499, 96
      %v641 = vpop.permute.xlu0 %640
      %642 = vrot.lane.b32.xlu0 %v500, 96
      %v643 = vpop.permute.xlu0 %642
      %644 = vrot.lane.b32.xlu0 %v501, 96
      %v645 = vpop.permute.xlu0 %644
      %646 = vrot.lane.b32.xlu0 %v502, 96
      %v647 = vpop.permute.xlu0 %646
      %648 = vrot.lane.b32.xlu0 %v503, 96
      %v649 = vpop.permute.xlu0 %648
      %v658 = vmul.f32 %v596, %v635
      %v659 = vmul.f32 %v601, %v637
      %v660 = vmul.f32 %v606, %v639
      %v661 = vmul.f32 %v611, %v641
      %v662 = vmul.f32 %v616, %v643
      %v663 = vmul.f32 %v621, %v645
      %v664 = vmul.f32 %v626, %v647
      %v665 = vmul.f32 %v631, %v649
      %v667 = vsel %vm397, %v658, 0
      %v670 = vsel %vm397, %v659, 0
      %v673 = vsel %vm397, %v660, 0
      %v676 = vsel %vm397, %v661, 0
      %v679 = vsel %vm397, %v662, 0
      %v682 = vsel %vm397, %v663, 0
      %v685 = vsel %vm397, %v664, 0
      %v688 = vsel %vm397, %v665, 0
      %690 = vmatprep.subr.mxu0 0.0
      %691 = vmatpush1.msra.mxu0 %v485
      %692 = vmatprep.subr.mxu0 0.0
      %693 = vmatpush1.msra.mxu0 %v486
      %694 = vmatprep.subr.mxu0 0.0
      %695 = vmatpush1.msra.mxu0 %v487
      %696 = vmatprep.subr.mxu0 0.0
      %697 = vmatpush1.msra.mxu0 %v488
      %698 = vmatprep.subr.mxu0 0.0
      %699 = vmatpush1.msra.mxu0 0.0
      %700 = vmatprep.subr.mxu0 0.0
      %701 = vmatpush1.msra.mxu0 0.0
      %702 = vmatprep.subr.mxu0 0.0
      %703 = vmatpush1.msra.mxu0 0.0
      %704 = vmatprep.subr.mxu0 0.0
      %705 = vmatpush1.msra.mxu0 0.0
      %706 = vmatprep.subr.mxu0 0.0
      %707 = vmatpush1.msra.mxu0 0.0
      %708 = vmatprep.subr.mxu0 0.0
      %709 = vmatpush1.msra.mxu0 0.0
      %710 = vmatprep.subr.mxu0 0.0
      %711 = vmatpush1.msra.mxu0 0.0
      %712 = vmatprep.subr.mxu0 0.0
      %713 = vmatpush1.msra.mxu0 0.0
      %714 = vmatprep.subr.mxu0 0.0
      %715 = vmatpush1.msra.mxu0 0.0
      %716 = vmatprep.subr.mxu0 0.0
      %717 = vmatpush1.msra.mxu0 0.0
      %718 = vmatprep.subr.mxu0 0.0
      %719 = vmatpush1.msra.mxu0 0.0
      %720 = vmatprep.subr.mxu0 0.0
      %721 = vmatpush1.msra.mxu0 0.0
      %722 = vmatprep.subr.mxu0 0.0
      %723 = vmatpush1.msra.mxu0 0.0
      %724 = vmatprep.subr.mxu0 0.0
      %725 = vmatpush1.msra.mxu0 0.0
      %726 = vmatprep.subr.mxu0 0.0
      %727 = vmatpush1.msra.mxu0 0.0
      %728 = vmatprep.subr.mxu0 0.0
      %729 = vmatpush1.msra.mxu0 0.0
      %730 = vmatprep.subr.mxu0 0.0
      %731 = vmatpush1.msra.mxu0 0.0
      %732 = vmatprep.subr.mxu0 0.0
      %733 = vmatpush1.msra.mxu0 0.0
      %734 = vmatprep.subr.mxu0 0.0
      %735 = vmatpush1.msra.mxu0 0.0
      %736 = vmatprep.subr.mxu0 0.0
      %737 = vmatpush1.msra.mxu0 0.0
      %738 = vmatprep.subr.mxu0 0.0
      %739 = vmatpush1.msra.mxu0 0.0
      %740 = vmatprep.subr.mxu0 0.0
      %741 = vmatpush1.msra.mxu0 0.0
      %742 = vmatprep.subr.mxu0 0.0
      %743 = vmatpush1.msra.mxu0 0.0
      %744 = vmatprep.subr.mxu0 0.0
      %745 = vmatpush1.msra.mxu0 0.0
      %746 = vmatprep.subr.mxu0 0.0
      %747 = vmatpush1.msra.mxu0 0.0
      %748 = vmatprep.subr.mxu0 0.0
      %749 = vmatpush1.msra.mxu0 0.0
      %750 = vmatprep.subr.mxu0 0.0
      %751 = vmatpush1.msra.mxu0 0.0
      %752 = vmatprep.subr.mxu0 0.0
      %753 = vmatpush1.msra.mxu0 0.0
      %754 = vmatprep.mubr.f32.mxu0 0.0
      %755 = vmatmul.mubr.f32.gmra.mrb[0].mxu0 %v667
      %v756 = vpop.f32.mrb[0].mxu0
      %v757 = vadd.f32 0.0, %v756
      %v758 = vpop.f32.mrb[0].mxu0
      %759 = vmatprep.mubr.f32.mxu0 0.0
      %760 = vmatmul.mubr.f32.gmra.mrb[0].mxu0 %v670
      %v761 = vpop.f32.mrb[0].mxu0
      %v762 = vadd.f32 0.0, %v761
      %v763 = vpop.f32.mrb[0].mxu0
      %764 = vmatprep.mubr.f32.mxu0 0.0
      %765 = vmatmul.mubr.f32.gmra.mrb[0].mxu0 %v673
      %v766 = vpop.f32.mrb[0].mxu0
      %v767 = vadd.f32 0.0, %v766
      %v768 = vpop.f32.mrb[0].mxu0
      %769 = vmatprep.mubr.f32.mxu0 0.0
      %770 = vmatmul.mubr.f32.gmra.mrb[0].mxu0 %v676
      %v771 = vpop.f32.mrb[0].mxu0
      %v772 = vadd.f32 0.0, %v771
      %v773 = vpop.f32.mrb[0].mxu0
      %774 = vmatprep.mubr.f32.mxu0 0.0
      %775 = vmatmul.mubr.f32.gmra.mrb[0].mxu0 %v679
      %v776 = vpop.f32.mrb[0].mxu0
      %v777 = vadd.f32 0.0, %v776
      %v778 = vpop.f32.mrb[0].mxu0
      %779 = vmatprep.mubr.f32.mxu0 0.0
      %780 = vmatmul.mubr.f32.gmra.mrb[0].mxu0 %v682
      %v781 = vpop.f32.mrb[0].mxu0
      %v782 = vadd.f32 0.0, %v781
      %v783 = vpop.f32.mrb[0].mxu0
      %784 = vmatprep.mubr.f32.mxu0 0.0
      %785 = vmatmul.mubr.f32.gmra.mrb[0].mxu0 %v685
      %v786 = vpop.f32.mrb[0].mxu0
      %v787 = vadd.f32 0.0, %v786
      %v788 = vpop.f32.mrb[0].mxu0
      %789 = vmatprep.mubr.f32.mxu0 0.0
      %790 = vmatmul.mubr.f32.gmra.mrb[0].mxu0 %v688
      %v791 = vpop.f32.mrb[0].mxu0
      %v792 = vadd.f32 0.0, %v791
      %v793 = vpop.f32.mrb[0].mxu0
      %794 = vdwg.mxu0
      %795 = vrot.lane.b32.xlu0 %v496, 120
      %v796 = vpop.permute.xlu0 %795
      %797 = vrot.lane.b32.xlu0 %v497, 120
      %v798 = vpop.permute.xlu0 %797
      %799 = vrot.lane.b32.xlu0 %v498, 120
      %v800 = vpop.permute.xlu0 %799
      %801 = vrot.lane.b32.xlu0 %v499, 120
      %v802 = vpop.permute.xlu0 %801
      %803 = vrot.lane.b32.xlu0 %v500, 120
      %v804 = vpop.permute.xlu0 %803
      %805 = vrot.lane.b32.xlu0 %v501, 120
      %v806 = vpop.permute.xlu0 %805
      %807 = vrot.lane.b32.xlu0 %v502, 120
      %v808 = vpop.permute.xlu0 %807
      %809 = vrot.lane.b32.xlu0 %v503, 120
      %v810 = vpop.permute.xlu0 %809
      %v811 = vsel %vm504, %v796, 0
      %v813 = vsel %vm504, %v798, 0
      %v815 = vsel %vm504, %v800, 0
      %v817 = vsel %vm504, %v802, 0
      %v819 = vsel %vm504, %v804, 0
      %v821 = vsel %vm504, %v806, 0
      %v823 = vsel %vm504, %v808, 0
      %v825 = vsel %vm504, %v810, 0
      %827 = vmatprep.subr.mxu0 0.0
      %828 = vmatpush1.msra.mxu0 %v484
      %829 = vmatprep.subr.mxu0 0.0
      %830 = vmatpush1.msra.mxu0 0.0
      %831 = vmatprep.subr.mxu0 0.0
      %832 = vmatpush1.msra.mxu0 0.0
      %833 = vmatprep.subr.mxu0 0.0
      %834 = vmatpush1.msra.mxu0 0.0
      %835 = vmatprep.subr.mxu0 0.0
      %836 = vmatpush1.msra.mxu0 0.0
      %837 = vmatprep.subr.mxu0 0.0
      %838 = vmatpush1.msra.mxu0 0.0
      %839 = vmatprep.subr.mxu0 0.0
      %840 = vmatpush1.msra.mxu0 0.0
      %841 = vmatprep.subr.mxu0 0.0
      %842 = vmatpush1.msra.mxu0 0.0
      %843 = vmatprep.subr.mxu0 0.0
      %844 = vmatpush1.msra.mxu0 0.0
      %845 = vmatprep.subr.mxu0 0.0
      %846 = vmatpush1.msra.mxu0 0.0
      %847 = vmatprep.subr.mxu0 0.0
      %848 = vmatpush1.msra.mxu0 0.0
      %849 = vmatprep.subr.mxu0 0.0
      %850 = vmatpush1.msra.mxu0 0.0
      %851 = vmatprep.subr.mxu0 0.0
      %852 = vmatpush1.msra.mxu0 0.0
      %853 = vmatprep.subr.mxu0 0.0
      %854 = vmatpush1.msra.mxu0 0.0
      %855 = vmatprep.subr.mxu0 0.0
      %856 = vmatpush1.msra.mxu0 0.0
      %857 = vmatprep.subr.mxu0 0.0
      %858 = vmatpush1.msra.mxu0 0.0
      %859 = vmatprep.subr.mxu0 0.0
      %860 = vmatpush1.msra.mxu0 0.0
      %861 = vmatprep.subr.mxu0 0.0
      %862 = vmatpush1.msra.mxu0 0.0
      %863 = vmatprep.subr.mxu0 0.0
      %864 = vmatpush1.msra.mxu0 0.0
      %865 = vmatprep.subr.mxu0 0.0
      %866 = vmatpush1.msra.mxu0 0.0
      %867 = vmatprep.subr.mxu0 0.0
      %868 = vmatpush1.msra.mxu0 0.0
      %869 = vmatprep.subr.mxu0 0.0
      %870 = vmatpush1.msra.mxu0 0.0
      %871 = vmatprep.subr.mxu0 0.0
      %872 = vmatpush1.msra.mxu0 0.0
      %873 = vmatprep.subr.mxu0 0.0
      %874 = vmatpush1.msra.mxu0 0.0
      %875 = vmatprep.subr.mxu0 0.0
      %876 = vmatpush1.msra.mxu0 0.0
      %877 = vmatprep.subr.mxu0 0.0
      %878 = vmatpush1.msra.mxu0 0.0
      %879 = vmatprep.subr.mxu0 0.0
      %880 = vmatpush1.msra.mxu0 0.0
      %881 = vmatprep.subr.mxu0 0.0
      %882 = vmatpush1.msra.mxu0 0.0
      %883 = vmatprep.subr.mxu0 0.0
      %884 = vmatpush1.msra.mxu0 0.0
      %885 = vmatprep.subr.mxu0 0.0
      %886 = vmatpush1.msra.mxu0 0.0
      %887 = vmatprep.subr.mxu0 0.0
      %888 = vmatpush1.msra.mxu0 0.0
      %889 = vmatprep.subr.mxu0 0.0
      %890 = vmatpush1.msra.mxu0 0.0
      %891 = vmatprep.mubr.f32.mxu0 0.0
      %892 = vmatmul.mubr.f32.gmra.mrb[0].mxu0 %v811
      %v893 = vpop.f32.mrb[0].mxu0
      %v894 = vadd.f32 0.0, %v893
      %v895 = vpop.f32.mrb[0].mxu0
      %896 = vmatprep.mubr.f32.mxu0 0.0
      %897 = vmatmul.mubr.f32.gmra.mrb[0].mxu0 %v813
      %v898 = vpop.f32.mrb[0].mxu0
      %v899 = vadd.f32 0.0, %v898
      %v900 = vpop.f32.mrb[0].mxu0
      %901 = vmatprep.mubr.f32.mxu0 0.0
      %902 = vmatmul.mubr.f32.gmra.mrb[0].mxu0 %v815
      %v903 = vpop.f32.mrb[0].mxu0
      %v904 = vadd.f32 0.0, %v903
      %v905 = vpop.f32.mrb[0].mxu0
      %906 = vmatprep.mubr.f32.mxu0 0.0
      %907 = vmatmul.mubr.f32.gmra.mrb[0].mxu0 %v817
      %v908 = vpop.f32.mrb[0].mxu0
      %v909 = vadd.f32 0.0, %v908
      %v910 = vpop.f32.mrb[0].mxu0
      %911 = vmatprep.mubr.f32.mxu0 0.0
      %912 = vmatmul.mubr.f32.gmra.mrb[0].mxu0 %v819
      %v913 = vpop.f32.mrb[0].mxu0
      %v914 = vadd.f32 0.0, %v913
      %v915 = vpop.f32.mrb[0].mxu0
      %916 = vmatprep.mubr.f32.mxu0 0.0
      %917 = vmatmul.mubr.f32.gmra.mrb[0].mxu0 %v821
      %v918 = vpop.f32.mrb[0].mxu0
      %v919 = vadd.f32 0.0, %v918
      %v920 = vpop.f32.mrb[0].mxu0
      %921 = vmatprep.mubr.f32.mxu0 0.0
      %922 = vmatmul.mubr.f32.gmra.mrb[0].mxu0 %v823
      %v923 = vpop.f32.mrb[0].mxu0
      %v924 = vadd.f32 0.0, %v923
      %v925 = vpop.f32.mrb[0].mxu0
      %926 = vmatprep.mubr.f32.mxu0 0.0
      %927 = vmatmul.mubr.f32.gmra.mrb[0].mxu0 %v825
      %v928 = vpop.f32.mrb[0].mxu0
      %v929 = vadd.f32 0.0, %v928
      %v930 = vpop.f32.mrb[0].mxu0
      %931 = vdwg.mxu0
      %v932 = vmul.f32 %v894, %v635
      %v933 = vmul.f32 %v899, %v637
      %v934 = vmul.f32 %v904, %v639
      %v935 = vmul.f32 %v909, %v641
      %v936 = vmul.f32 %v914, %v643
      %v937 = vmul.f32 %v919, %v645
      %v938 = vmul.f32 %v924, %v647
      %v939 = vmul.f32 %v929, %v649
      %v941 = vsel %vm397, %v932, 0
      %v944 = vsel %vm397, %v933, 0
      %v947 = vsel %vm397, %v934, 0
      %v950 = vsel %vm397, %v935, 0
      %v953 = vsel %vm397, %v936, 0
      %v956 = vsel %vm397, %v937, 0
      %v959 = vsel %vm397, %v938, 0
      %v962 = vsel %vm397, %v939, 0
      %964 = vmatprep.subr.mxu0 0.0
      %965 = vmatpush1.msra.mxu0 %v485
      %966 = vmatprep.subr.mxu0 0.0
      %967 = vmatpush1.msra.mxu0 %v486
      %968 = vmatprep.subr.mxu0 0.0
      %969 = vmatpush1.msra.mxu0 %v487
      %970 = vmatprep.subr.mxu0 0.0
      %971 = vmatpush1.msra.mxu0 %v488
      %972 = vmatprep.subr.mxu0 0.0
      %973 = vmatpush1.msra.mxu0 0.0
      %974 = vmatprep.subr.mxu0 0.0
      %975 = vmatpush1.msra.mxu0 0.0
      %976 = vmatprep.subr.mxu0 0.0
      %977 = vmatpush1.msra.mxu0 0.0
      %978 = vmatprep.subr.mxu0 0.0
      %979 = vmatpush1.msra.mxu0 0.0
      %980 = vmatprep.subr.mxu0 0.0
      %981 = vmatpush1.msra.mxu0 0.0
      %982 = vmatprep.subr.mxu0 0.0
      %983 = vmatpush1.msra.mxu0 0.0
      %984 = vmatprep.subr.mxu0 0.0
      %985 = vmatpush1.msra.mxu0 0.0
      %986 = vmatprep.subr.mxu0 0.0
      %987 = vmatpush1.msra.mxu0 0.0
      %988 = vmatprep.subr.mxu0 0.0
      %989 = vmatpush1.msra.mxu0 0.0
      %990 = vmatprep.subr.mxu0 0.0
      %991 = vmatpush1.msra.mxu0 0.0
      %992 = vmatprep.subr.mxu0 0.0
      %993 = vmatpush1.msra.mxu0 0.0
      %994 = vmatprep.subr.mxu0 0.0
      %995 = vmatpush1.msra.mxu0 0.0
      %996 = vmatprep.subr.mxu0 0.0
      %997 = vmatpush1.msra.mxu0 0.0
      %998 = vmatprep.subr.mxu0 0.0
      %999 = vmatpush1.msra.mxu0 0.0
      %1000 = vmatprep.subr.mxu0 0.0
      %1001 = vmatpush1.msra.mxu0 0.0
      %1002 = vmatprep.subr.mxu0 0.0
      %1003 = vmatpush1.msra.mxu0 0.0
      %1004 = vmatprep.subr.mxu0 0.0
      %1005 = vmatpush1.msra.mxu0 0.0
      %1006 = vmatprep.subr.mxu0 0.0
      %1007 = vmatpush1.msra.mxu0 0.0
      %1008 = vmatprep.subr.mxu0 0.0
      %1009 = vmatpush1.msra.mxu0 0.0
      %1010 = vmatprep.subr.mxu0 0.0
      %1011 = vmatpush1.msra.mxu0 0.0
      %1012 = vmatprep.subr.mxu0 0.0
      %1013 = vmatpush1.msra.mxu0 0.0
      %1014 = vmatprep.subr.mxu0 0.0
      %1015 = vmatpush1.msra.mxu0 0.0
      %1016 = vmatprep.subr.mxu0 0.0
      %1017 = vmatpush1.msra.mxu0 0.0
      %1018 = vmatprep.subr.mxu0 0.0
      %1019 = vmatpush1.msra.mxu0 0.0
      %1020 = vmatprep.subr.mxu0 0.0
      %1021 = vmatpush1.msra.mxu0 0.0
      %1022 = vmatprep.subr.mxu0 0.0
      %1023 = vmatpush1.msra.mxu0 0.0
      %1024 = vmatprep.subr.mxu0 0.0
      %1025 = vmatpush1.msra.mxu0 0.0
      %1026 = vmatprep.subr.mxu0 0.0
      %1027 = vmatpush1.msra.mxu0 0.0
      %1028 = vmatprep.mubr.f32.mxu0 0.0
      %1029 = vmatmul.mubr.f32.gmra.mrb[0].mxu0 %v941
      %v1030 = vpop.f32.mrb[0].mxu0
      %v1031 = vadd.f32 0.0, %v1030
      %v1032 = vpop.f32.mrb[0].mxu0
      %1033 = vmatprep.mubr.f32.mxu0 0.0
      %1034 = vmatmul.mubr.f32.gmra.mrb[0].mxu0 %v944
      %v1035 = vpop.f32.mrb[0].mxu0
      %v1036 = vadd.f32 0.0, %v1035
      %v1037 = vpop.f32.mrb[0].mxu0
      %1038 = vmatprep.mubr.f32.mxu0 0.0
      %1039 = vmatmul.mubr.f32.gmra.mrb[0].mxu0 %v947
      %v1040 = vpop.f32.mrb[0].mxu0
      %v1041 = vadd.f32 0.0, %v1040
      %v1042 = vpop.f32.mrb[0].mxu0
      %1043 = vmatprep.mubr.f32.mxu0 0.0
      %1044 = vmatmul.mubr.f32.gmra.mrb[0].mxu0 %v950
      %v1045 = vpop.f32.mrb[0].mxu0
      %v1046 = vadd.f32 0.0, %v1045
      %v1047 = vpop.f32.mrb[0].mxu0
      %1048 = vmatprep.mubr.f32.mxu0 0.0
      %1049 = vmatmul.mubr.f32.gmra.mrb[0].mxu0 %v953
      %v1050 = vpop.f32.mrb[0].mxu0
      %v1051 = vadd.f32 0.0, %v1050
      %v1052 = vpop.f32.mrb[0].mxu0
      %1053 = vmatprep.mubr.f32.mxu0 0.0
      %1054 = vmatmul.mubr.f32.gmra.mrb[0].mxu0 %v956
      %v1055 = vpop.f32.mrb[0].mxu0
      %v1056 = vadd.f32 0.0, %v1055
      %v1057 = vpop.f32.mrb[0].mxu0
      %1058 = vmatprep.mubr.f32.mxu0 0.0
      %1059 = vmatmul.mubr.f32.gmra.mrb[0].mxu0 %v959
      %v1060 = vpop.f32.mrb[0].mxu0
      %v1061 = vadd.f32 0.0, %v1060
      %v1062 = vpop.f32.mrb[0].mxu0
      %1063 = vmatprep.mubr.f32.mxu0 0.0
      %1064 = vmatmul.mubr.f32.gmra.mrb[0].mxu0 %v962
      %v1065 = vpop.f32.mrb[0].mxu0
      %v1066 = vadd.f32 0.0, %v1065
      %v1067 = vpop.f32.mrb[0].mxu0
      %1068 = vdwg.mxu0
      %1069 = vrot.lane.b32.xlu0 %v496, 112
      %v1070 = vpop.permute.xlu0 %1069
      %1071 = vrot.lane.b32.xlu0 %v497, 112
      %v1072 = vpop.permute.xlu0 %1071
      %1073 = vrot.lane.b32.xlu0 %v498, 112
      %v1074 = vpop.permute.xlu0 %1073
      %1075 = vrot.lane.b32.xlu0 %v499, 112
      %v1076 = vpop.permute.xlu0 %1075
      %1077 = vrot.lane.b32.xlu0 %v500, 112
      %v1078 = vpop.permute.xlu0 %1077
      %1079 = vrot.lane.b32.xlu0 %v501, 112
      %v1080 = vpop.permute.xlu0 %1079
      %1081 = vrot.lane.b32.xlu0 %v502, 112
      %v1082 = vpop.permute.xlu0 %1081
      %1083 = vrot.lane.b32.xlu0 %v503, 112
      %v1084 = vpop.permute.xlu0 %1083
      %v1085 = vsel %vm504, %v1070, 0
      %v1087 = vsel %vm504, %v1072, 0
      %v1089 = vsel %vm504, %v1074, 0
      %v1091 = vsel %vm504, %v1076, 0
      %v1093 = vsel %vm504, %v1078, 0
      %v1095 = vsel %vm504, %v1080, 0
      %v1097 = vsel %vm504, %v1082, 0
      %v1099 = vsel %vm504, %v1084, 0
      %1101 = vmatprep.subr.mxu0 0.0
      %1102 = vmatpush1.msra.mxu0 %v484
      %1103 = vmatprep.subr.mxu0 0.0
      %1104 = vmatpush1.msra.mxu0 0.0
      %1105 = vmatprep.subr.mxu0 0.0
      %1106 = vmatpush1.msra.mxu0 0.0
      %1107 = vmatprep.subr.mxu0 0.0
      %1108 = vmatpush1.msra.mxu0 0.0
      %1109 = vmatprep.subr.mxu0 0.0
      %1110 = vmatpush1.msra.mxu0 0.0
      %1111 = vmatprep.subr.mxu0 0.0
      %1112 = vmatpush1.msra.mxu0 0.0
      %1113 = vmatprep.subr.mxu0 0.0
      %1114 = vmatpush1.msra.mxu0 0.0
      %1115 = vmatprep.subr.mxu0 0.0
      %1116 = vmatpush1.msra.mxu0 0.0
      %1117 = vmatprep.subr.mxu0 0.0
      %1118 = vmatpush1.msra.mxu0 0.0
      %1119 = vmatprep.subr.mxu0 0.0
      %1120 = vmatpush1.msra.mxu0 0.0
      %1121 = vmatprep.subr.mxu0 0.0
      %1122 = vmatpush1.msra.mxu0 0.0
      %1123 = vmatprep.subr.mxu0 0.0
      %1124 = vmatpush1.msra.mxu0 0.0
      %1125 = vmatprep.subr.mxu0 0.0
      %1126 = vmatpush1.msra.mxu0 0.0
      %1127 = vmatprep.subr.mxu0 0.0
      %1128 = vmatpush1.msra.mxu0 0.0
      %1129 = vmatprep.subr.mxu0 0.0
      %1130 = vmatpush1.msra.mxu0 0.0
      %1131 = vmatprep.subr.mxu0 0.0
      %1132 = vmatpush1.msra.mxu0 0.0
      %1133 = vmatprep.subr.mxu0 0.0
      %1134 = vmatpush1.msra.mxu0 0.0
      %1135 = vmatprep.subr.mxu0 0.0
      %1136 = vmatpush1.msra.mxu0 0.0
      %1137 = vmatprep.subr.mxu0 0.0
      %1138 = vmatpush1.msra.mxu0 0.0
      %1139 = vmatprep.subr.mxu0 0.0
      %1140 = vmatpush1.msra.mxu0 0.0
      %1141 = vmatprep.subr.mxu0 0.0
      %1142 = vmatpush1.msra.mxu0 0.0
      %1143 = vmatprep.subr.mxu0 0.0
      %1144 = vmatpush1.msra.mxu0 0.0
      %1145 = vmatprep.subr.mxu0 0.0
      %1146 = vmatpush1.msra.mxu0 0.0
      %1147 = vmatprep.subr.mxu0 0.0
      %1148 = vmatpush1.msra.mxu0 0.0
      %1149 = vmatprep.subr.mxu0 0.0
      %1150 = vmatpush1.msra.mxu0 0.0
      %1151 = vmatprep.subr.mxu0 0.0
      %1152 = vmatpush1.msra.mxu0 0.0
      %1153 = vmatprep.subr.mxu0 0.0
      %1154 = vmatpush1.msra.mxu0 0.0
      %1155 = vmatprep.subr.mxu0 0.0
      %1156 = vmatpush1.msra.mxu0 0.0
      %1157 = vmatprep.subr.mxu0 0.0
      %1158 = vmatpush1.msra.mxu0 0.0
      %1159 = vmatprep.subr.mxu0 0.0
      %1160 = vmatpush1.msra.mxu0 0.0
      %1161 = vmatprep.subr.mxu0 0.0
      %1162 = vmatpush1.msra.mxu0 0.0
      %1163 = vmatprep.subr.mxu0 0.0
      %1164 = vmatpush1.msra.mxu0 0.0
      %1165 = vmatprep.mubr.f32.mxu0 0.0
      %1166 = vmatmul.mubr.f32.gmra.mrb[0].mxu0 %v1085
      %v1167 = vpop.f32.mrb[0].mxu0
      %v1168 = vadd.f32 0.0, %v1167
      %v1169 = vpop.f32.mrb[0].mxu0
      %1170 = vmatprep.mubr.f32.mxu0 0.0
      %1171 = vmatmul.mubr.f32.gmra.mrb[0].mxu0 %v1087
      %v1172 = vpop.f32.mrb[0].mxu0
      %v1173 = vadd.f32 0.0, %v1172
      %v1174 = vpop.f32.mrb[0].mxu0
      %1175 = vmatprep.mubr.f32.mxu0 0.0
      %1176 = vmatmul.mubr.f32.gmra.mrb[0].mxu0 %v1089
      %v1177 = vpop.f32.mrb[0].mxu0
      %v1178 = vadd.f32 0.0, %v1177
      %v1179 = vpop.f32.mrb[0].mxu0
      %1180 = vmatprep.mubr.f32.mxu0 0.0
      %1181 = vmatmul.mubr.f32.gmra.mrb[0].mxu0 %v1091
      %v1182 = vpop.f32.mrb[0].mxu0
      %v1183 = vadd.f32 0.0, %v1182
      %v1184 = vpop.f32.mrb[0].mxu0
      %1185 = vmatprep.mubr.f32.mxu0 0.0
      %1186 = vmatmul.mubr.f32.gmra.mrb[0].mxu0 %v1093
      %v1187 = vpop.f32.mrb[0].mxu0
      %v1188 = vadd.f32 0.0, %v1187
      %v1189 = vpop.f32.mrb[0].mxu0
      %1190 = vmatprep.mubr.f32.mxu0 0.0
      %1191 = vmatmul.mubr.f32.gmra.mrb[0].mxu0 %v1095
      %v1192 = vpop.f32.mrb[0].mxu0
      %v1193 = vadd.f32 0.0, %v1192
      %v1194 = vpop.f32.mrb[0].mxu0
      %1195 = vmatprep.mubr.f32.mxu0 0.0
      %1196 = vmatmul.mubr.f32.gmra.mrb[0].mxu0 %v1097
      %v1197 = vpop.f32.mrb[0].mxu0
      %v1198 = vadd.f32 0.0, %v1197
      %v1199 = vpop.f32.mrb[0].mxu0
      %1200 = vmatprep.mubr.f32.mxu0 0.0
      %1201 = vmatmul.mubr.f32.gmra.mrb[0].mxu0 %v1099
      %v1202 = vpop.f32.mrb[0].mxu0
      %v1203 = vadd.f32 0.0, %v1202
      %v1204 = vpop.f32.mrb[0].mxu0
      %1205 = vdwg.mxu0
      %v1206 = vmul.f32 %v1168, %v635
      %v1207 = vmul.f32 %v1173, %v637
      %v1208 = vmul.f32 %v1178, %v639
      %v1209 = vmul.f32 %v1183, %v641
      %v1210 = vmul.f32 %v1188, %v643
      %v1211 = vmul.f32 %v1193, %v645
      %v1212 = vmul.f32 %v1198, %v647
      %v1213 = vmul.f32 %v1203, %v649
      %v1215 = vsel %vm397, %v1206, 0
      %v1218 = vsel %vm397, %v1207, 0
      %v1221 = vsel %vm397, %v1208, 0
      %v1224 = vsel %vm397, %v1209, 0
      %v1227 = vsel %vm397, %v1210, 0
      %v1230 = vsel %vm397, %v1211, 0
      %v1233 = vsel %vm397, %v1212, 0
      %v1236 = vsel %vm397, %v1213, 0
      %1238 = vmatprep.subr.mxu0 0.0
      %1239 = vmatpush1.msra.mxu0 %v485
      %1240 = vmatprep.subr.mxu0 0.0
      %1241 = vmatpush1.msra.mxu0 %v486
      %1242 = vmatprep.subr.mxu0 0.0
      %1243 = vmatpush1.msra.mxu0 %v487
      %1244 = vmatprep.subr.mxu0 0.0
      %1245 = vmatpush1.msra.mxu0 %v488
      %1246 = vmatprep.subr.mxu0 0.0
      %1247 = vmatpush1.msra.mxu0 0.0
      %1248 = vmatprep.subr.mxu0 0.0
      %1249 = vmatpush1.msra.mxu0 0.0
      %1250 = vmatprep.subr.mxu0 0.0
      %1251 = vmatpush1.msra.mxu0 0.0
      %1252 = vmatprep.subr.mxu0 0.0
      %1253 = vmatpush1.msra.mxu0 0.0
      %1254 = vmatprep.subr.mxu0 0.0
      %1255 = vmatpush1.msra.mxu0 0.0
      %1256 = vmatprep.subr.mxu0 0.0
      %1257 = vmatpush1.msra.mxu0 0.0
      %1258 = vmatprep.subr.mxu0 0.0
      %1259 = vmatpush1.msra.mxu0 0.0
      %1260 = vmatprep.subr.mxu0 0.0
      %1261 = vmatpush1.msra.mxu0 0.0
      %1262 = vmatprep.subr.mxu0 0.0
      %1263 = vmatpush1.msra.mxu0 0.0
      %1264 = vmatprep.subr.mxu0 0.0
      %1265 = vmatpush1.msra.mxu0 0.0
      %1266 = vmatprep.subr.mxu0 0.0
      %1267 = vmatpush1.msra.mxu0 0.0
      %1268 = vmatprep.subr.mxu0 0.0
      %1269 = vmatpush1.msra.mxu0 0.0
      %1270 = vmatprep.subr.mxu0 0.0
      %1271 = vmatpush1.msra.mxu0 0.0
      %1272 = vmatprep.subr.mxu0 0.0
      %1273 = vmatpush1.msra.mxu0 0.0
      %1274 = vmatprep.subr.mxu0 0.0
      %1275 = vmatpush1.msra.mxu0 0.0
      %1276 = vmatprep.subr.mxu0 0.0
      %1277 = vmatpush1.msra.mxu0 0.0
      %1278 = vmatprep.subr.mxu0 0.0
      %1279 = vmatpush1.msra.mxu0 0.0
      %1280 = vmatprep.subr.mxu0 0.0
      %1281 = vmatpush1.msra.mxu0 0.0
      %1282 = vmatprep.subr.mxu0 0.0
      %1283 = vmatpush1.msra.mxu0 0.0
      %1284 = vmatprep.subr.mxu0 0.0
      %1285 = vmatpush1.msra.mxu0 0.0
      %1286 = vmatprep.subr.mxu0 0.0
      %1287 = vmatpush1.msra.mxu0 0.0
      %1288 = vmatprep.subr.mxu0 0.0
      %1289 = vmatpush1.msra.mxu0 0.0
      %1290 = vmatprep.subr.mxu0 0.0
      %1291 = vmatpush1.msra.mxu0 0.0
      %1292 = vmatprep.subr.mxu0 0.0
      %1293 = vmatpush1.msra.mxu0 0.0
      %1294 = vmatprep.subr.mxu0 0.0
      %1295 = vmatpush1.msra.mxu0 0.0
      %1296 = vmatprep.subr.mxu0 0.0
      %1297 = vmatpush1.msra.mxu0 0.0
      %1298 = vmatprep.subr.mxu0 0.0
      %1299 = vmatpush1.msra.mxu0 0.0
      %1300 = vmatprep.subr.mxu0 0.0
      %1301 = vmatpush1.msra.mxu0 0.0
      %1302 = vmatprep.mubr.f32.mxu0 0.0
      %1303 = vmatmul.mubr.f32.gmra.mrb[0].mxu0 %v1215
      %v1304 = vpop.f32.mrb[0].mxu0
      %v1305 = vadd.f32 0.0, %v1304
      %v1306 = vpop.f32.mrb[0].mxu0
      %1307 = vmatprep.mubr.f32.mxu0 0.0
      %1308 = vmatmul.mubr.f32.gmra.mrb[0].mxu0 %v1218
      %v1309 = vpop.f32.mrb[0].mxu0
      %v1310 = vadd.f32 0.0, %v1309
      %v1311 = vpop.f32.mrb[0].mxu0
      %1312 = vmatprep.mubr.f32.mxu0 0.0
      %1313 = vmatmul.mubr.f32.gmra.mrb[0].mxu0 %v1221
      %v1314 = vpop.f32.mrb[0].mxu0
      %v1315 = vadd.f32 0.0, %v1314
      %v1316 = vpop.f32.mrb[0].mxu0
      %1317 = vmatprep.mubr.f32.mxu0 0.0
      %1318 = vmatmul.mubr.f32.gmra.mrb[0].mxu0 %v1224
      %v1319 = vpop.f32.mrb[0].mxu0
      %v1320 = vadd.f32 0.0, %v1319
      %v1321 = vpop.f32.mrb[0].mxu0
      %1322 = vmatprep.mubr.f32.mxu0 0.0
      %1323 = vmatmul.mubr.f32.gmra.mrb[0].mxu0 %v1227
      %v1324 = vpop.f32.mrb[0].mxu0
      %v1325 = vadd.f32 0.0, %v1324
      %v1326 = vpop.f32.mrb[0].mxu0
      %1327 = vmatprep.mubr.f32.mxu0 0.0
      %1328 = vmatmul.mubr.f32.gmra.mrb[0].mxu0 %v1230
      %v1329 = vpop.f32.mrb[0].mxu0
      %v1330 = vadd.f32 0.0, %v1329
      %v1331 = vpop.f32.mrb[0].mxu0
      %1332 = vmatprep.mubr.f32.mxu0 0.0
      %1333 = vmatmul.mubr.f32.gmra.mrb[0].mxu0 %v1233
      %v1334 = vpop.f32.mrb[0].mxu0
      %v1335 = vadd.f32 0.0, %v1334
      %v1336 = vpop.f32.mrb[0].mxu0
      %1337 = vmatprep.mubr.f32.mxu0 0.0
      %1338 = vmatmul.mubr.f32.gmra.mrb[0].mxu0 %v1236
      %v1339 = vpop.f32.mrb[0].mxu0
      %v1340 = vadd.f32 0.0, %v1339
      %v1341 = vpop.f32.mrb[0].mxu0
      %1342 = vdwg.mxu0
      %1343 = vrot.lane.b32.xlu0 %v496, 104
      %v1344 = vpop.permute.xlu0 %1343
      %1345 = vrot.lane.b32.xlu0 %v497, 104
      %v1346 = vpop.permute.xlu0 %1345
      %1347 = vrot.lane.b32.xlu0 %v498, 104
      %v1348 = vpop.permute.xlu0 %1347
      %1349 = vrot.lane.b32.xlu0 %v499, 104
      %v1350 = vpop.permute.xlu0 %1349
      %1351 = vrot.lane.b32.xlu0 %v500, 104
      %v1352 = vpop.permute.xlu0 %1351
      %1353 = vrot.lane.b32.xlu0 %v501, 104
      %v1354 = vpop.permute.xlu0 %1353
      %1355 = vrot.lane.b32.xlu0 %v502, 104
      %v1356 = vpop.permute.xlu0 %1355
      %1357 = vrot.lane.b32.xlu0 %v503, 104
      %v1358 = vpop.permute.xlu0 %1357
      %v1359 = vsel %vm504, %v1344, 0
      %v1361 = vsel %vm504, %v1346, 0
      %v1363 = vsel %vm504, %v1348, 0
      %v1365 = vsel %vm504, %v1350, 0
      %v1367 = vsel %vm504, %v1352, 0
      %v1369 = vsel %vm504, %v1354, 0
      %v1371 = vsel %vm504, %v1356, 0
      %v1373 = vsel %vm504, %v1358, 0
      %1375 = vmatprep.subr.mxu0 0.0
      %1376 = vmatpush1.msra.mxu0 %v484
      %1377 = vmatprep.subr.mxu0 0.0
      %1378 = vmatpush1.msra.mxu0 0.0
      %1379 = vmatprep.subr.mxu0 0.0
      %1380 = vmatpush1.msra.mxu0 0.0
      %1381 = vmatprep.subr.mxu0 0.0
      %1382 = vmatpush1.msra.mxu0 0.0
      %1383 = vmatprep.subr.mxu0 0.0
      %1384 = vmatpush1.msra.mxu0 0.0
      %1385 = vmatprep.subr.mxu0 0.0
      %1386 = vmatpush1.msra.mxu0 0.0
      %1387 = vmatprep.subr.mxu0 0.0
      %1388 = vmatpush1.msra.mxu0 0.0
      %1389 = vmatprep.subr.mxu0 0.0
      %1390 = vmatpush1.msra.mxu0 0.0
      %1391 = vmatprep.subr.mxu0 0.0
      %1392 = vmatpush1.msra.mxu0 0.0
      %1393 = vmatprep.subr.mxu0 0.0
      %1394 = vmatpush1.msra.mxu0 0.0
      %1395 = vmatprep.subr.mxu0 0.0
      %1396 = vmatpush1.msra.mxu0 0.0
      %1397 = vmatprep.subr.mxu0 0.0
      %1398 = vmatpush1.msra.mxu0 0.0
      %1399 = vmatprep.subr.mxu0 0.0
      %1400 = vmatpush1.msra.mxu0 0.0
      %1401 = vmatprep.subr.mxu0 0.0
      %1402 = vmatpush1.msra.mxu0 0.0
      %1403 = vmatprep.subr.mxu0 0.0
      %1404 = vmatpush1.msra.mxu0 0.0
      %1405 = vmatprep.subr.mxu0 0.0
      %1406 = vmatpush1.msra.mxu0 0.0
      %1407 = vmatprep.subr.mxu0 0.0
      %1408 = vmatpush1.msra.mxu0 0.0
      %1409 = vmatprep.subr.mxu0 0.0
      %1410 = vmatpush1.msra.mxu0 0.0
      %1411 = vmatprep.subr.mxu0 0.0
      %1412 = vmatpush1.msra.mxu0 0.0
      %1413 = vmatprep.subr.mxu0 0.0
      %1414 = vmatpush1.msra.mxu0 0.0
      %1415 = vmatprep.subr.mxu0 0.0
      %1416 = vmatpush1.msra.mxu0 0.0
      %1417 = vmatprep.subr.mxu0 0.0
      %1418 = vmatpush1.msra.mxu0 0.0
      %1419 = vmatprep.subr.mxu0 0.0
      %1420 = vmatpush1.msra.mxu0 0.0
      %1421 = vmatprep.subr.mxu0 0.0
      %1422 = vmatpush1.msra.mxu0 0.0
      %1423 = vmatprep.subr.mxu0 0.0
      %1424 = vmatpush1.msra.mxu0 0.0
      %1425 = vmatprep.subr.mxu0 0.0
      %1426 = vmatpush1.msra.mxu0 0.0
      %1427 = vmatprep.subr.mxu0 0.0
      %1428 = vmatpush1.msra.mxu0 0.0
      %1429 = vmatprep.subr.mxu0 0.0
      %1430 = vmatpush1.msra.mxu0 0.0
      %1431 = vmatprep.subr.mxu0 0.0
      %1432 = vmatpush1.msra.mxu0 0.0
      %1433 = vmatprep.subr.mxu0 0.0
      %1434 = vmatpush1.msra.mxu0 0.0
      %1435 = vmatprep.subr.mxu0 0.0
      %1436 = vmatpush1.msra.mxu0 0.0
      %1437 = vmatprep.subr.mxu0 0.0
      %1438 = vmatpush1.msra.mxu0 0.0
      %1439 = vmatprep.mubr.f32.mxu0 0.0
      %1440 = vmatmul.mubr.f32.gmra.mrb[0].mxu0 %v1359
      %v1441 = vpop.f32.mrb[0].mxu0
      %v1442 = vadd.f32 0.0, %v1441
      %v1443 = vpop.f32.mrb[0].mxu0
      %1444 = vmatprep.mubr.f32.mxu0 0.0
      %1445 = vmatmul.mubr.f32.gmra.mrb[0].mxu0 %v1361
      %v1446 = vpop.f32.mrb[0].mxu0
      %v1447 = vadd.f32 0.0, %v1446
      %v1448 = vpop.f32.mrb[0].mxu0
      %1449 = vmatprep.mubr.f32.mxu0 0.0
      %1450 = vmatmul.mubr.f32.gmra.mrb[0].mxu0 %v1363
      %v1451 = vpop.f32.mrb[0].mxu0
      %v1452 = vadd.f32 0.0, %v1451
      %v1453 = vpop.f32.mrb[0].mxu0
      %1454 = vmatprep.mubr.f32.mxu0 0.0
      %1455 = vmatmul.mubr.f32.gmra.mrb[0].mxu0 %v1365
      %v1456 = vpop.f32.mrb[0].mxu0
      %v1457 = vadd.f32 0.0, %v1456
      %v1458 = vpop.f32.mrb[0].mxu0
      %1459 = vmatprep.mubr.f32.mxu0 0.0
      %1460 = vmatmul.mubr.f32.gmra.mrb[0].mxu0 %v1367
      %v1461 = vpop.f32.mrb[0].mxu0
      %v1462 = vadd.f32 0.0, %v1461
      %v1463 = vpop.f32.mrb[0].mxu0
      %1464 = vmatprep.mubr.f32.mxu0 0.0
      %1465 = vmatmul.mubr.f32.gmra.mrb[0].mxu0 %v1369
      %v1466 = vpop.f32.mrb[0].mxu0
      %v1467 = vadd.f32 0.0, %v1466
      %v1468 = vpop.f32.mrb[0].mxu0
      %1469 = vmatprep.mubr.f32.mxu0 0.0
      %1470 = vmatmul.mubr.f32.gmra.mrb[0].mxu0 %v1371
      %v1471 = vpop.f32.mrb[0].mxu0
      %v1472 = vadd.f32 0.0, %v1471
      %v1473 = vpop.f32.mrb[0].mxu0
      %1474 = vmatprep.mubr.f32.mxu0 0.0
      %1475 = vmatmul.mubr.f32.gmra.mrb[0].mxu0 %v1373
      %v1476 = vpop.f32.mrb[0].mxu0
      %v1477 = vadd.f32 0.0, %v1476
      %v1478 = vpop.f32.mrb[0].mxu0
      %1479 = vdwg.mxu0
      %v1480 = vmul.f32 %v1442, %v635
      %v1481 = vmul.f32 %v1447, %v637
      %v1482 = vmul.f32 %v1452, %v639
      %v1483 = vmul.f32 %v1457, %v641
      %v1484 = vmul.f32 %v1462, %v643
      %v1485 = vmul.f32 %v1467, %v645
      %v1486 = vmul.f32 %v1472, %v647
      %v1487 = vmul.f32 %v1477, %v649
      %v1489 = vsel %vm397, %v1480, 0
      %v1492 = vsel %vm397, %v1481, 0
      %v1495 = vsel %vm397, %v1482, 0
      %v1498 = vsel %vm397, %v1483, 0
      %v1501 = vsel %vm397, %v1484, 0
      %v1504 = vsel %vm397, %v1485, 0
      %v1507 = vsel %vm397, %v1486, 0
      %v1510 = vsel %vm397, %v1487, 0
      %1512 = vmatprep.subr.mxu0 0.0
      %1513 = vmatpush1.msra.mxu0 %v485
      %1514 = vmatprep.subr.mxu0 0.0
      %1515 = vmatpush1.msra.mxu0 %v486
      %1516 = vmatprep.subr.mxu0 0.0
      %1517 = vmatpush1.msra.mxu0 %v487
      %1518 = vmatprep.subr.mxu0 0.0
      %1519 = vmatpush1.msra.mxu0 %v488
      %1520 = vmatprep.subr.mxu0 0.0
      %1521 = vmatpush1.msra.mxu0 0.0
      %1522 = vmatprep.subr.mxu0 0.0
      %1523 = vmatpush1.msra.mxu0 0.0
      %1524 = vmatprep.subr.mxu0 0.0
      %1525 = vmatpush1.msra.mxu0 0.0
      %1526 = vmatprep.subr.mxu0 0.0
      %1527 = vmatpush1.msra.mxu0 0.0
      %1528 = vmatprep.subr.mxu0 0.0
      %1529 = vmatpush1.msra.mxu0 0.0
      %1530 = vmatprep.subr.mxu0 0.0
      %1531 = vmatpush1.msra.mxu0 0.0
      %1532 = vmatprep.subr.mxu0 0.0
      %1533 = vmatpush1.msra.mxu0 0.0
      %1534 = vmatprep.subr.mxu0 0.0
      %1535 = vmatpush1.msra.mxu0 0.0
      %1536 = vmatprep.subr.mxu0 0.0
      %1537 = vmatpush1.msra.mxu0 0.0
      %1538 = vmatprep.subr.mxu0 0.0
      %1539 = vmatpush1.msra.mxu0 0.0
      %1540 = vmatprep.subr.mxu0 0.0
      %1541 = vmatpush1.msra.mxu0 0.0
      %1542 = vmatprep.subr.mxu0 0.0
      %1543 = vmatpush1.msra.mxu0 0.0
      %1544 = vmatprep.subr.mxu0 0.0
      %1545 = vmatpush1.msra.mxu0 0.0
      %1546 = vmatprep.subr.mxu0 0.0
      %1547 = vmatpush1.msra.mxu0 0.0
      %1548 = vmatprep.subr.mxu0 0.0
      %1549 = vmatpush1.msra.mxu0 0.0
      %1550 = vmatprep.subr.mxu0 0.0
      %1551 = vmatpush1.msra.mxu0 0.0
      %1552 = vmatprep.subr.mxu0 0.0
      %1553 = vmatpush1.msra.mxu0 0.0
      %1554 = vmatprep.subr.mxu0 0.0
      %1555 = vmatpush1.msra.mxu0 0.0
      %1556 = vmatprep.subr.mxu0 0.0
      %1557 = vmatpush1.msra.mxu0 0.0
      %1558 = vmatprep.subr.mxu0 0.0
      %1559 = vmatpush1.msra.mxu0 0.0
      %1560 = vmatprep.subr.mxu0 0.0
      %1561 = vmatpush1.msra.mxu0 0.0
      %1562 = vmatprep.subr.mxu0 0.0
      %1563 = vmatpush1.msra.mxu0 0.0
      %1564 = vmatprep.subr.mxu0 0.0
      %1565 = vmatpush1.msra.mxu0 0.0
      %1566 = vmatprep.subr.mxu0 0.0
      %1567 = vmatpush1.msra.mxu0 0.0
      %1568 = vmatprep.subr.mxu0 0.0
      %1569 = vmatpush1.msra.mxu0 0.0
      %1570 = vmatprep.subr.mxu0 0.0
      %1571 = vmatpush1.msra.mxu0 0.0
      %1572 = vmatprep.subr.mxu0 0.0
      %1573 = vmatpush1.msra.mxu0 0.0
      %1574 = vmatprep.subr.mxu0 0.0
      %1575 = vmatpush1.msra.mxu0 0.0
      %1576 = vmatprep.mubr.f32.mxu0 0.0
      %1577 = vmatmul.mubr.f32.gmra.mrb[0].mxu0 %v1489
      %v1578 = vpop.f32.mrb[0].mxu0
      %v1579 = vadd.f32 0.0, %v1578
      %v1580 = vpop.f32.mrb[0].mxu0
      %1581 = vmatprep.mubr.f32.mxu0 0.0
      %1582 = vmatmul.mubr.f32.gmra.mrb[0].mxu0 %v1492
      %v1583 = vpop.f32.mrb[0].mxu0
      %v1584 = vadd.f32 0.0, %v1583
      %v1585 = vpop.f32.mrb[0].mxu0
      %1586 = vmatprep.mubr.f32.mxu0 0.0
      %1587 = vmatmul.mubr.f32.gmra.mrb[0].mxu0 %v1495
      %v1588 = vpop.f32.mrb[0].mxu0
      %v1589 = vadd.f32 0.0, %v1588
      %v1590 = vpop.f32.mrb[0].mxu0
      %1591 = vmatprep.mubr.f32.mxu0 0.0
      %1592 = vmatmul.mubr.f32.gmra.mrb[0].mxu0 %v1498
      %v1593 = vpop.f32.mrb[0].mxu0
      %v1594 = vadd.f32 0.0, %v1593
      %v1595 = vpop.f32.mrb[0].mxu0
      %1596 = vmatprep.mubr.f32.mxu0 0.0
      %1597 = vmatmul.mubr.f32.gmra.mrb[0].mxu0 %v1501
      %v1598 = vpop.f32.mrb[0].mxu0
      %v1599 = vadd.f32 0.0, %v1598
      %v1600 = vpop.f32.mrb[0].mxu0
      %1601 = vmatprep.mubr.f32.mxu0 0.0
      %1602 = vmatmul.mubr.f32.gmra.mrb[0].mxu0 %v1504
      %v1603 = vpop.f32.mrb[0].mxu0
      %v1604 = vadd.f32 0.0, %v1603
      %v1605 = vpop.f32.mrb[0].mxu0
      %1606 = vmatprep.mubr.f32.mxu0 0.0
      %1607 = vmatmul.mubr.f32.gmra.mrb[0].mxu0 %v1507
      %v1608 = vpop.f32.mrb[0].mxu0
      %v1609 = vadd.f32 0.0, %v1608
      %v1610 = vpop.f32.mrb[0].mxu0
      %1611 = vmatprep.mubr.f32.mxu0 0.0
      %1612 = vmatmul.mubr.f32.gmra.mrb[0].mxu0 %v1510
      %v1613 = vpop.f32.mrb[0].mxu0
      %v1614 = vadd.f32 0.0, %v1613
      %v1615 = vpop.f32.mrb[0].mxu0
      %1616 = vdwg.mxu0
      %1625 = vrot.lane.b32.xlu0 %v1031, 4
      %v1626 = vpop.permute.xlu0 %1625
      %1627 = vrot.lane.b32.xlu0 %v1036, 4
      %v1628 = vpop.permute.xlu0 %1627
      %1629 = vrot.lane.b32.xlu0 %v1041, 4
      %v1630 = vpop.permute.xlu0 %1629
      %1631 = vrot.lane.b32.xlu0 %v1046, 4
      %v1632 = vpop.permute.xlu0 %1631
      %1633 = vrot.lane.b32.xlu0 %v1051, 4
      %v1634 = vpop.permute.xlu0 %1633
      %1635 = vrot.lane.b32.xlu0 %v1056, 4
      %v1636 = vpop.permute.xlu0 %1635
      %1637 = vrot.lane.b32.xlu0 %v1061, 4
      %v1638 = vpop.permute.xlu0 %1637
      %1639 = vrot.lane.b32.xlu0 %v1066, 4
      %v1640 = vpop.permute.xlu0 %1639
      %1657 = vrot.lane.b32.xlu0 %v1305, 8
      %v1658 = vpop.permute.xlu0 %1657
      %1659 = vrot.lane.b32.xlu0 %v1310, 8
      %v1660 = vpop.permute.xlu0 %1659
      %1661 = vrot.lane.b32.xlu0 %v1315, 8
      %v1662 = vpop.permute.xlu0 %1661
      %1663 = vrot.lane.b32.xlu0 %v1320, 8
      %v1664 = vpop.permute.xlu0 %1663
      %1665 = vrot.lane.b32.xlu0 %v1325, 8
      %v1666 = vpop.permute.xlu0 %1665
      %1667 = vrot.lane.b32.xlu0 %v1330, 8
      %v1668 = vpop.permute.xlu0 %1667
      %1669 = vrot.lane.b32.xlu0 %v1335, 8
      %v1670 = vpop.permute.xlu0 %1669
      %1671 = vrot.lane.b32.xlu0 %v1340, 8
      %v1672 = vpop.permute.xlu0 %1671
      %1689 = vrot.lane.b32.xlu0 %v1579, 12
      %v1690 = vpop.permute.xlu0 %1689
      %1691 = vrot.lane.b32.xlu0 %v1584, 12
      %v1692 = vpop.permute.xlu0 %1691
      %1693 = vrot.lane.b32.xlu0 %v1589, 12
      %v1694 = vpop.permute.xlu0 %1693
      %1695 = vrot.lane.b32.xlu0 %v1594, 12
      %v1696 = vpop.permute.xlu0 %1695
      %1697 = vrot.lane.b32.xlu0 %v1599, 12
      %v1698 = vpop.permute.xlu0 %1697
      %1699 = vrot.lane.b32.xlu0 %v1604, 12
      %v1700 = vpop.permute.xlu0 %1699
      %1701 = vrot.lane.b32.xlu0 %v1609, 12
      %v1702 = vpop.permute.xlu0 %1701
      %1703 = vrot.lane.b32.xlu0 %v1614, 12
      %v1704 = vpop.permute.xlu0 %1703
      %vm1713 = vcmask 31744
      %v1714 = vsel %vm1713, %v757, %v1626
      %v1715 = vsel %vm1713, %v762, %v1628
      %v1716 = vsel %vm1713, %v767, %v1630
      %v1717 = vsel %vm1713, %v772, %v1632
      %v1718 = vsel %vm1713, %v777, %v1634
      %v1719 = vsel %vm1713, %v782, %v1636
      %v1720 = vsel %vm1713, %v787, %v1638
      %v1721 = vsel %vm1713, %v792, %v1640
      %v1722 = vsel %vm504, %v1714, %v1658
      %v1723 = vsel %vm504, %v1715, %v1660
      %v1724 = vsel %vm504, %v1716, %v1662
      %v1725 = vsel %vm504, %v1717, %v1664
      %v1726 = vsel %vm504, %v1718, %v1666
      %v1727 = vsel %vm504, %v1719, %v1668
      %v1728 = vsel %vm504, %v1720, %v1670
      %v1729 = vsel %vm504, %v1721, %v1672
      %vm1730 = vcmask 97280
      %v1731 = vsel %vm1730, %v1722, %v1690
      %v1732 = vsel %vm1730, %v1723, %v1692
      %v1733 = vsel %vm1730, %v1724, %v1694
      %v1734 = vsel %vm1730, %v1725, %v1696
      %v1735 = vsel %vm1730, %v1726, %v1698
      %v1736 = vsel %vm1730, %v1727, %v1700
      %v1737 = vsel %vm1730, %v1728, %v1702
      %v1738 = vsel %vm1730, %v1729, %v1704
      %v1739 = vsub.f32 %v1731, 5.0
      %v1740 = vsub.f32 %v1732, 5.0
      %v1741 = vsub.f32 %v1733, 5.0
      %v1742 = vsub.f32 %v1734, 5.0
      %v1743 = vsub.f32 %v1735, 5.0
      %v1744 = vsub.f32 %v1736, 5.0
      %v1745 = vsub.f32 %v1737, 5.0
      %v1746 = vsub.f32 %v1738, 5.0
      %v1747 = vmul.f32 %v1739, 1.442695
      %v1748 = vpow.pop %v1747
      %v1749 = vmul.f32 %v1740, 1.442695
      %v1750 = vpow.pop %v1749
      %v1751 = vmul.f32 %v1741, 1.442695
      %v1752 = vpow.pop %v1751
      %v1753 = vmul.f32 %v1742, 1.442695
      %v1754 = vpow.pop %v1753
      %v1755 = vmul.f32 %v1743, 1.442695
      %v1756 = vpow.pop %v1755
      %v1757 = vmul.f32 %v1744, 1.442695
      %v1758 = vpow.pop %v1757
      %v1759 = vmul.f32 %v1745, 1.442695
      %v1760 = vpow.pop %v1759
      %v1761 = vmul.f32 %v1746, 1.442695
      %v1762 = vpow.pop %v1761
      %vm1763 = vcmp.gt.f32.partialorder %v1739, 5.0
      %vm1764 = vcmp.gt.f32.partialorder %v1740, 5.0
      %vm1765 = vcmp.gt.f32.partialorder %v1741, 5.0
      %vm1766 = vcmp.gt.f32.partialorder %v1742, 5.0
      %vm1767 = vcmp.gt.f32.partialorder %v1743, 5.0
      %vm1768 = vcmp.gt.f32.partialorder %v1744, 5.0
      %vm1769 = vcmp.gt.f32.partialorder %v1745, 5.0
      %vm1770 = vcmp.gt.f32.partialorder %v1746, 5.0
      %vm1771 = vcmp.lt.f32.partialorder %v1739, -5.0
      %vm1772 = vcmp.lt.f32.partialorder %v1740, -5.0
      %vm1773 = vcmp.lt.f32.partialorder %v1741, -5.0
      %vm1774 = vcmp.lt.f32.partialorder %v1742, -5.0
      %vm1775 = vcmp.lt.f32.partialorder %v1743, -5.0
      %vm1776 = vcmp.lt.f32.partialorder %v1744, -5.0
      %vm1777 = vcmp.lt.f32.partialorder %v1745, -5.0
      %vm1778 = vcmp.lt.f32.partialorder %v1746, -5.0
      %vm1779 = vmor %vm1763, %vm1771
      %vm1780 = vmor %vm1764, %vm1772
      %vm1781 = vmor %vm1765, %vm1773
      %vm1782 = vmor %vm1766, %vm1774
      %vm1783 = vmor %vm1767, %vm1775
      %vm1784 = vmor %vm1768, %vm1776
      %vm1785 = vmor %vm1769, %vm1777
      %vm1786 = vmor %vm1770, %vm1778
      %v1787 = vsel %vm1779, 0.0, %v1748
      %v1788 = vsel %vm1780, 0.0, %v1750
      %v1789 = vsel %vm1781, 0.0, %v1752
      %v1790 = vsel %vm1782, 0.0, %v1754
      %v1791 = vsel %vm1783, 0.0, %v1756
      %v1792 = vsel %vm1784, 0.0, %v1758
      %v1793 = vsel %vm1785, 0.0, %v1760
      %v1794 = vsel %vm1786, 0.0, %v1762
      %vm1795 = vcmask 130048
      %v1797 = vsel %vm1795, %v1787, 0
      %v1800 = vsel %vm1795, %v1788, 0
      %v1803 = vsel %vm1795, %v1789, 0
      %v1806 = vsel %vm1795, %v1790, 0
      %v1809 = vsel %vm1795, %v1791, 0
      %v1812 = vsel %vm1795, %v1792, 0
      %v1815 = vsel %vm1795, %v1793, 0
      %v1818 = vsel %vm1795, %v1794, 0
      %1820 = vmatprep.subr.mxu0 0.0
      %1821 = vmatpush1.msra.mxu0 %v489
      %1822 = vmatprep.subr.mxu0 0.0
      %1823 = vmatpush1.msra.mxu0 %v490
      %1824 = vmatprep.subr.mxu0 0.0
      %1825 = vmatpush1.msra.mxu0 0.0
      %1826 = vmatprep.subr.mxu0 0.0
      %1827 = vmatpush1.msra.mxu0 0.0
      %1828 = vmatprep.subr.mxu0 0.0
      %1829 = vmatpush1.msra.mxu0 0.0
      %1830 = vmatprep.subr.mxu0 0.0
      %1831 = vmatpush1.msra.mxu0 0.0
      %1832 = vmatprep.subr.mxu0 0.0
      %1833 = vmatpush1.msra.mxu0 0.0
      %1834 = vmatprep.subr.mxu0 0.0
      %1835 = vmatpush1.msra.mxu0 0.0
      %1836 = vmatprep.subr.mxu0 0.0
      %1837 = vmatpush1.msra.mxu0 0.0
      %1838 = vmatprep.subr.mxu0 0.0
      %1839 = vmatpush1.msra.mxu0 0.0
      %1840 = vmatprep.subr.mxu0 0.0
      %1841 = vmatpush1.msra.mxu0 0.0
      %1842 = vmatprep.subr.mxu0 0.0
      %1843 = vmatpush1.msra.mxu0 0.0
      %1844 = vmatprep.subr.mxu0 0.0
      %1845 = vmatpush1.msra.mxu0 0.0
      %1846 = vmatprep.subr.mxu0 0.0
      %1847 = vmatpush1.msra.mxu0 0.0
      %1848 = vmatprep.subr.mxu0 0.0
      %1849 = vmatpush1.msra.mxu0 0.0
      %1850 = vmatprep.subr.mxu0 0.0
      %1851 = vmatpush1.msra.mxu0 0.0
      %1852 = vmatprep.subr.mxu0 0.0
      %1853 = vmatpush1.msra.mxu0 0.0
      %1854 = vmatprep.subr.mxu0 0.0
      %1855 = vmatpush1.msra.mxu0 0.0
      %1856 = vmatprep.subr.mxu0 0.0
      %1857 = vmatpush1.msra.mxu0 0.0
      %1858 = vmatprep.subr.mxu0 0.0
      %1859 = vmatpush1.msra.mxu0 0.0
      %1860 = vmatprep.subr.mxu0 0.0
      %1861 = vmatpush1.msra.mxu0 0.0
      %1862 = vmatprep.subr.mxu0 0.0
      %1863 = vmatpush1.msra.mxu0 0.0
      %1864 = vmatprep.subr.mxu0 0.0
      %1865 = vmatpush1.msra.mxu0 0.0
      %1866 = vmatprep.subr.mxu0 0.0
      %1867 = vmatpush1.msra.mxu0 0.0
      %1868 = vmatprep.subr.mxu0 0.0
      %1869 = vmatpush1.msra.mxu0 0.0
      %1870 = vmatprep.subr.mxu0 0.0
      %1871 = vmatpush1.msra.mxu0 0.0
      %1872 = vmatprep.subr.mxu0 0.0
      %1873 = vmatpush1.msra.mxu0 0.0
      %1874 = vmatprep.subr.mxu0 0.0
      %1875 = vmatpush1.msra.mxu0 0.0
      %1876 = vmatprep.subr.mxu0 0.0
      %1877 = vmatpush1.msra.mxu0 0.0
      %1878 = vmatprep.subr.mxu0 0.0
      %1879 = vmatpush1.msra.mxu0 0.0
      %1880 = vmatprep.subr.mxu0 0.0
      %1881 = vmatpush1.msra.mxu0 0.0
      %1882 = vmatprep.subr.mxu0 0.0
      %1883 = vmatpush1.msra.mxu0 0.0
      %1884 = vmatprep.mubr.f32.mxu0 0.0
      %1885 = vmatmul.mubr.f32.gmra.mrb[0].mxu0 %v1797
      %v1886 = vpop.f32.mrb[0].mxu0
      %v1887 = vadd.f32 0.0, %v1886
      %v1888 = vpop.f32.mrb[0].mxu0
      %1889 = vmatprep.mubr.f32.mxu0 0.0
      %1890 = vmatmul.mubr.f32.gmra.mrb[0].mxu0 %v1800
      %v1891 = vpop.f32.mrb[0].mxu0
      %v1892 = vadd.f32 0.0, %v1891
      %v1893 = vpop.f32.mrb[0].mxu0
      %1894 = vmatprep.mubr.f32.mxu0 0.0
      %1895 = vmatmul.mubr.f32.gmra.mrb[0].mxu0 %v1803
      %v1896 = vpop.f32.mrb[0].mxu0
      %v1897 = vadd.f32 0.0, %v1896
      %v1898 = vpop.f32.mrb[0].mxu0
      %1899 = vmatprep.mubr.f32.mxu0 0.0
      %1900 = vmatmul.mubr.f32.gmra.mrb[0].mxu0 %v1806
      %v1901 = vpop.f32.mrb[0].mxu0
      %v1902 = vadd.f32 0.0, %v1901
      %v1903 = vpop.f32.mrb[0].mxu0
      %1904 = vmatprep.mubr.f32.mxu0 0.0
      %1905 = vmatmul.mubr.f32.gmra.mrb[0].mxu0 %v1809
      %v1906 = vpop.f32.mrb[0].mxu0
      %v1907 = vadd.f32 0.0, %v1906
      %v1908 = vpop.f32.mrb[0].mxu0
      %1909 = vmatprep.mubr.f32.mxu0 0.0
      %1910 = vmatmul.mubr.f32.gmra.mrb[0].mxu0 %v1812
      %v1911 = vpop.f32.mrb[0].mxu0
      %v1912 = vadd.f32 0.0, %v1911
      %v1913 = vpop.f32.mrb[0].mxu0
      %1914 = vmatprep.mubr.f32.mxu0 0.0
      %1915 = vmatmul.mubr.f32.gmra.mrb[0].mxu0 %v1815
      %v1916 = vpop.f32.mrb[0].mxu0
      %v1917 = vadd.f32 0.0, %v1916
      %v1918 = vpop.f32.mrb[0].mxu0
      %1919 = vmatprep.mubr.f32.mxu0 0.0
      %1920 = vmatmul.mubr.f32.gmra.mrb[0].mxu0 %v1818
      %v1921 = vpop.f32.mrb[0].mxu0
      %v1922 = vadd.f32 0.0, %v1921
      %v1923 = vpop.f32.mrb[0].mxu0
      %1924 = vdwg.mxu0
      %v1925 = vrcp.pop %v1887
      %v1926 = vrcp.pop %v1892
      %v1927 = vrcp.pop %v1897
      %v1928 = vrcp.pop %v1902
      %v1929 = vrcp.pop %v1907
      %v1930 = vrcp.pop %v1912
      %v1931 = vrcp.pop %v1917
      %v1932 = vrcp.pop %v1922
      %vm1933 = vcmp.eq.f32.partialorder %v1887, 0.0
      %vm1934 = vcmp.eq.f32.partialorder %v1892, 0.0
      %vm1935 = vcmp.eq.f32.partialorder %v1897, 0.0
      %vm1936 = vcmp.eq.f32.partialorder %v1902, 0.0
      %vm1937 = vcmp.eq.f32.partialorder %v1907, 0.0
      %vm1938 = vcmp.eq.f32.partialorder %v1912, 0.0
      %vm1939 = vcmp.eq.f32.partialorder %v1917, 0.0
      %vm1940 = vcmp.eq.f32.partialorder %v1922, 0.0
      %v1941 = vsel %vm1933, nan, %v1925
      %v1942 = vsel %vm1934, nan, %v1926
      %v1943 = vsel %vm1935, nan, %v1927
      %v1944 = vsel %vm1936, nan, %v1928
      %v1945 = vsel %vm1937, nan, %v1929
      %v1946 = vsel %vm1938, nan, %v1930
      %v1947 = vsel %vm1939, nan, %v1931
      %v1948 = vsel %vm1940, nan, %v1932
      %1950 = vset.pattern.permute.xlu0 0
      %1951 = vperm.xlu0 %1950, %v1941
      %v1952 = vpop.permute.xlu0 %1951
      %1955 = vset.pattern.permute.xlu0 0
      %1956 = vperm.xlu0 %1955, %v1942
      %v1957 = vpop.permute.xlu0 %1956
      %1960 = vset.pattern.permute.xlu0 0
      %1961 = vperm.xlu0 %1960, %v1943
      %v1962 = vpop.permute.xlu0 %1961
      %1965 = vset.pattern.permute.xlu0 0
      %1966 = vperm.xlu0 %1965, %v1944
      %v1967 = vpop.permute.xlu0 %1966
      %1970 = vset.pattern.permute.xlu0 0
      %1971 = vperm.xlu0 %1970, %v1945
      %v1972 = vpop.permute.xlu0 %1971
      %1975 = vset.pattern.permute.xlu0 0
      %1976 = vperm.xlu0 %1975, %v1946
      %v1977 = vpop.permute.xlu0 %1976
      %1980 = vset.pattern.permute.xlu0 0
      %1981 = vperm.xlu0 %1980, %v1947
      %v1982 = vpop.permute.xlu0 %1981
      %1985 = vset.pattern.permute.xlu0 0
      %1986 = vperm.xlu0 %1985, %v1948
      %v1987 = vpop.permute.xlu0 %1986
      %v1989 = vmul.f32 %v1787, %v1952
      %v1990 = vmul.f32 %v1788, %v1957
      %v1991 = vmul.f32 %v1789, %v1962
      %v1992 = vmul.f32 %v1790, %v1967
      %v1993 = vmul.f32 %v1791, %v1972
      %v1994 = vmul.f32 %v1792, %v1977
      %v1995 = vmul.f32 %v1793, %v1982
      %v1996 = vmul.f32 %v1794, %v1987
      %v1998 = vsel %vm1713, %v1989, 0
      %v2001 = vsel %vm1713, %v1990, 0
      %v2004 = vsel %vm1713, %v1991, 0
      %v2007 = vsel %vm1713, %v1992, 0
      %v2010 = vsel %vm1713, %v1993, 0
      %v2013 = vsel %vm1713, %v1994, 0
      %v2016 = vsel %vm1713, %v1995, 0
      %v2019 = vsel %vm1713, %v1996, 0
      %vm2021 = vcmask 1043456
      %v2023 = vsel %vm2021, %v491, 0
      %2025 = vmatprep.subr.mxu0 0.0
      %2026 = vmatpush1.msra.mxu0 %v2023
      %2027 = vmatprep.subr.mxu0 0.0
      %2028 = vmatpush1.msra.mxu0 0.0
      %2029 = vmatprep.subr.mxu0 0.0
      %2030 = vmatpush1.msra.mxu0 0.0
      %2031 = vmatprep.subr.mxu0 0.0
      %2032 = vmatpush1.msra.mxu0 0.0
      %2033 = vmatprep.subr.mxu0 0.0
      %2034 = vmatpush1.msra.mxu0 0.0
      %2035 = vmatprep.subr.mxu0 0.0
      %2036 = vmatpush1.msra.mxu0 0.0
      %2037 = vmatprep.subr.mxu0 0.0
      %2038 = vmatpush1.msra.mxu0 0.0
      %2039 = vmatprep.subr.mxu0 0.0
      %2040 = vmatpush1.msra.mxu0 0.0
      %2041 = vmatprep.subr.mxu0 0.0
      %2042 = vmatpush1.msra.mxu0 0.0
      %2043 = vmatprep.subr.mxu0 0.0
      %2044 = vmatpush1.msra.mxu0 0.0
      %2045 = vmatprep.subr.mxu0 0.0
      %2046 = vmatpush1.msra.mxu0 0.0
      %2047 = vmatprep.subr.mxu0 0.0
      %2048 = vmatpush1.msra.mxu0 0.0
      %2049 = vmatprep.subr.mxu0 0.0
      %2050 = vmatpush1.msra.mxu0 0.0
      %2051 = vmatprep.subr.mxu0 0.0
      %2052 = vmatpush1.msra.mxu0 0.0
      %2053 = vmatprep.subr.mxu0 0.0
      %2054 = vmatpush1.msra.mxu0 0.0
      %2055 = vmatprep.subr.mxu0 0.0
      %2056 = vmatpush1.msra.mxu0 0.0
      %2057 = vmatprep.subr.mxu0 0.0
      %2058 = vmatpush1.msra.mxu0 0.0
      %2059 = vmatprep.subr.mxu0 0.0
      %2060 = vmatpush1.msra.mxu0 0.0
      %2061 = vmatprep.subr.mxu0 0.0
      %2062 = vmatpush1.msra.mxu0 0.0
      %2063 = vmatprep.subr.mxu0 0.0
      %2064 = vmatpush1.msra.mxu0 0.0
      %2065 = vmatprep.subr.mxu0 0.0
      %2066 = vmatpush1.msra.mxu0 0.0
      %2067 = vmatprep.subr.mxu0 0.0
      %2068 = vmatpush1.msra.mxu0 0.0
      %2069 = vmatprep.subr.mxu0 0.0
      %2070 = vmatpush1.msra.mxu0 0.0
      %2071 = vmatprep.subr.mxu0 0.0
      %2072 = vmatpush1.msra.mxu0 0.0
      %2073 = vmatprep.subr.mxu0 0.0
      %2074 = vmatpush1.msra.mxu0 0.0
      %2075 = vmatprep.subr.mxu0 0.0
      %2076 = vmatpush1.msra.mxu0 0.0
      %2077 = vmatprep.subr.mxu0 0.0
      %2078 = vmatpush1.msra.mxu0 0.0
      %2079 = vmatprep.subr.mxu0 0.0
      %2080 = vmatpush1.msra.mxu0 0.0
      %2081 = vmatprep.subr.mxu0 0.0
      %2082 = vmatpush1.msra.mxu0 0.0
      %2083 = vmatprep.subr.mxu0 0.0
      %2084 = vmatpush1.msra.mxu0 0.0
      %2085 = vmatprep.subr.mxu0 0.0
      %2086 = vmatpush1.msra.mxu0 0.0
      %2087 = vmatprep.subr.mxu0 0.0
      %2088 = vmatpush1.msra.mxu0 0.0
      %2089 = vmatprep.mubr.f32.mxu0 0.0
      %2090 = vmatmul.mubr.f32.gmra.mrb[0].mxu0 %v1998
      %v2091 = vpop.f32.mrb[0].mxu0
      %v2092 = vadd.f32 0.0, %v2091
      %v2093 = vpop.f32.mrb[0].mxu0
      %2094 = vmatprep.mubr.f32.mxu0 0.0
      %2095 = vmatmul.mubr.f32.gmra.mrb[0].mxu0 %v2001
      %v2096 = vpop.f32.mrb[0].mxu0
      %v2097 = vadd.f32 0.0, %v2096
      %v2098 = vpop.f32.mrb[0].mxu0
      %2099 = vmatprep.mubr.f32.mxu0 0.0
      %2100 = vmatmul.mubr.f32.gmra.mrb[0].mxu0 %v2004
      %v2101 = vpop.f32.mrb[0].mxu0
      %v2102 = vadd.f32 0.0, %v2101
      %v2103 = vpop.f32.mrb[0].mxu0
      %2104 = vmatprep.mubr.f32.mxu0 0.0
      %2105 = vmatmul.mubr.f32.gmra.mrb[0].mxu0 %v2007
      %v2106 = vpop.f32.mrb[0].mxu0
      %v2107 = vadd.f32 0.0, %v2106
      %v2108 = vpop.f32.mrb[0].mxu0
      %2109 = vmatprep.mubr.f32.mxu0 0.0
      %2110 = vmatmul.mubr.f32.gmra.mrb[0].mxu0 %v2010
      %v2111 = vpop.f32.mrb[0].mxu0
      %v2112 = vadd.f32 0.0, %v2111
      %v2113 = vpop.f32.mrb[0].mxu0
      %2114 = vmatprep.mubr.f32.mxu0 0.0
      %2115 = vmatmul.mubr.f32.gmra.mrb[0].mxu0 %v2013
      %v2116 = vpop.f32.mrb[0].mxu0
      %v2117 = vadd.f32 0.0, %v2116
      %v2118 = vpop.f32.mrb[0].mxu0
      %2119 = vmatprep.mubr.f32.mxu0 0.0
      %2120 = vmatmul.mubr.f32.gmra.mrb[0].mxu0 %v2016
      %v2121 = vpop.f32.mrb[0].mxu0
      %v2122 = vadd.f32 0.0, %v2121
      %v2123 = vpop.f32.mrb[0].mxu0
      %2124 = vmatprep.mubr.f32.mxu0 0.0
      %2125 = vmatmul.mubr.f32.gmra.mrb[0].mxu0 %v2019
      %v2126 = vpop.f32.mrb[0].mxu0
      %v2127 = vadd.f32 0.0, %v2126
      %v2128 = vpop.f32.mrb[0].mxu0
      %2129 = vdwg.mxu0
      %2130 = vrot.lane.b32.xlu0 %v496, 64
      %v2131 = vpop.permute.xlu0 %2130
      %2132 = vrot.lane.b32.xlu0 %v497, 64
      %v2133 = vpop.permute.xlu0 %2132
      %2134 = vrot.lane.b32.xlu0 %v498, 64
      %v2135 = vpop.permute.xlu0 %2134
      %2136 = vrot.lane.b32.xlu0 %v499, 64
      %v2137 = vpop.permute.xlu0 %2136
      %2138 = vrot.lane.b32.xlu0 %v500, 64
      %v2139 = vpop.permute.xlu0 %2138
      %2140 = vrot.lane.b32.xlu0 %v501, 64
      %v2141 = vpop.permute.xlu0 %2140
      %2142 = vrot.lane.b32.xlu0 %v502, 64
      %v2143 = vpop.permute.xlu0 %2142
      %2144 = vrot.lane.b32.xlu0 %v503, 64
      %v2145 = vpop.permute.xlu0 %2144
      %v2154 = vmul.f32 %v2092, %v2131
      %v2155 = vmul.f32 %v2097, %v2133
      %v2156 = vmul.f32 %v2102, %v2135
      %v2157 = vmul.f32 %v2107, %v2137
      %v2158 = vmul.f32 %v2112, %v2139
      %v2159 = vmul.f32 %v2117, %v2141
      %v2160 = vmul.f32 %v2122, %v2143
      %v2161 = vmul.f32 %v2127, %v2145
      %v2163 = vsel %vm397, %v2154, 0
      %v2166 = vsel %vm397, %v2155, 0
      %v2169 = vsel %vm397, %v2156, 0
      %v2172 = vsel %vm397, %v2157, 0
      %v2175 = vsel %vm397, %v2158, 0
      %v2178 = vsel %vm397, %v2159, 0
      %v2181 = vsel %vm397, %v2160, 0
      %v2184 = vsel %vm397, %v2161, 0
      %2186 = vmatprep.subr.mxu0 0.0
      %2187 = vmatpush1.msra.mxu0 %v492
      %2188 = vmatprep.subr.mxu0 0.0
      %2189 = vmatpush1.msra.mxu0 %v493
      %2190 = vmatprep.subr.mxu0 0.0
      %2191 = vmatpush1.msra.mxu0 %v494
      %2192 = vmatprep.subr.mxu0 0.0
      %2193 = vmatpush1.msra.mxu0 %v495
      %2194 = vmatprep.subr.mxu0 0.0
      %2195 = vmatpush1.msra.mxu0 0.0
      %2196 = vmatprep.subr.mxu0 0.0
      %2197 = vmatpush1.msra.mxu0 0.0
      %2198 = vmatprep.subr.mxu0 0.0
      %2199 = vmatpush1.msra.mxu0 0.0
      %2200 = vmatprep.subr.mxu0 0.0
      %2201 = vmatpush1.msra.mxu0 0.0
      %2202 = vmatprep.subr.mxu0 0.0
      %2203 = vmatpush1.msra.mxu0 0.0
      %2204 = vmatprep.subr.mxu0 0.0
      %2205 = vmatpush1.msra.mxu0 0.0
      %2206 = vmatprep.subr.mxu0 0.0
      %2207 = vmatpush1.msra.mxu0 0.0
      %2208 = vmatprep.subr.mxu0 0.0
      %2209 = vmatpush1.msra.mxu0 0.0
      %2210 = vmatprep.subr.mxu0 0.0
      %2211 = vmatpush1.msra.mxu0 0.0
      %2212 = vmatprep.subr.mxu0 0.0
      %2213 = vmatpush1.msra.mxu0 0.0
      %2214 = vmatprep.subr.mxu0 0.0
      %2215 = vmatpush1.msra.mxu0 0.0
      %2216 = vmatprep.subr.mxu0 0.0
      %2217 = vmatpush1.msra.mxu0 0.0
      %2218 = vmatprep.subr.mxu0 0.0
      %2219 = vmatpush1.msra.mxu0 0.0
      %2220 = vmatprep.subr.mxu0 0.0
      %2221 = vmatpush1.msra.mxu0 0.0
      %2222 = vmatprep.subr.mxu0 0.0
      %2223 = vmatpush1.msra.mxu0 0.0
      %2224 = vmatprep.subr.mxu0 0.0
      %2225 = vmatpush1.msra.mxu0 0.0
      %2226 = vmatprep.subr.mxu0 0.0
      %2227 = vmatpush1.msra.mxu0 0.0
      %2228 = vmatprep.subr.mxu0 0.0
      %2229 = vmatpush1.msra.mxu0 0.0
      %2230 = vmatprep.subr.mxu0 0.0
      %2231 = vmatpush1.msra.mxu0 0.0
      %2232 = vmatprep.subr.mxu0 0.0
      %2233 = vmatpush1.msra.mxu0 0.0
      %2234 = vmatprep.subr.mxu0 0.0
      %2235 = vmatpush1.msra.mxu0 0.0
      %2236 = vmatprep.subr.mxu0 0.0
      %2237 = vmatpush1.msra.mxu0 0.0
      %2238 = vmatprep.subr.mxu0 0.0
      %2239 = vmatpush1.msra.mxu0 0.0
      %2240 = vmatprep.subr.mxu0 0.0
      %2241 = vmatpush1.msra.mxu0 0.0
      %2242 = vmatprep.subr.mxu0 0.0
      %2243 = vmatpush1.msra.mxu0 0.0
      %2244 = vmatprep.subr.mxu0 0.0
      %2245 = vmatpush1.msra.mxu0 0.0
      %2246 = vmatprep.subr.mxu0 0.0
      %2247 = vmatpush1.msra.mxu0 0.0
      %2248 = vmatprep.subr.mxu0 0.0
      %2249 = vmatpush1.msra.mxu0 0.0
      %2250 = vmatprep.mubr.f32.mxu0 0.0
      %2251 = vmatmul.mubr.f32.gmra.mrb[0].mxu0 %v2163
      %v2252 = vpop.f32.mrb[0].mxu0
      %v2253 = vadd.f32 0.0, %v2252
      %v2254 = vpop.f32.mrb[0].mxu0
      %2255 = vmatprep.mubr.f32.mxu0 0.0
      %2256 = vmatmul.mubr.f32.gmra.mrb[0].mxu0 %v2166
      %v2257 = vpop.f32.mrb[0].mxu0
      %v2258 = vadd.f32 0.0, %v2257
      %v2259 = vpop.f32.mrb[0].mxu0
      %2260 = vmatprep.mubr.f32.mxu0 0.0
      %2261 = vmatmul.mubr.f32.gmra.mrb[0].mxu0 %v2169
      %v2262 = vpop.f32.mrb[0].mxu0
      %v2263 = vadd.f32 0.0, %v2262
      %v2264 = vpop.f32.mrb[0].mxu0
      %2265 = vmatprep.mubr.f32.mxu0 0.0
      %2266 = vmatmul.mubr.f32.gmra.mrb[0].mxu0 %v2172
      %v2267 = vpop.f32.mrb[0].mxu0
      %v2268 = vadd.f32 0.0, %v2267
      %v2269 = vpop.f32.mrb[0].mxu0
      %2270 = vmatprep.mubr.f32.mxu0 0.0
      %2271 = vmatmul.mubr.f32.gmra.mrb[0].mxu0 %v2175
      %v2272 = vpop.f32.mrb[0].mxu0
      %v2273 = vadd.f32 0.0, %v2272
      %v2274 = vpop.f32.mrb[0].mxu0
      %2275 = vmatprep.mubr.f32.mxu0 0.0
      %2276 = vmatmul.mubr.f32.gmra.mrb[0].mxu0 %v2178
      %v2277 = vpop.f32.mrb[0].mxu0
      %v2278 = vadd.f32 0.0, %v2277
      %v2279 = vpop.f32.mrb[0].mxu0
      %2280 = vmatprep.mubr.f32.mxu0 0.0
      %2281 = vmatmul.mubr.f32.gmra.mrb[0].mxu0 %v2181
      %v2282 = vpop.f32.mrb[0].mxu0
      %v2283 = vadd.f32 0.0, %v2282
      %v2284 = vpop.f32.mrb[0].mxu0
      %2285 = vmatprep.mubr.f32.mxu0 0.0
      %2286 = vmatmul.mubr.f32.gmra.mrb[0].mxu0 %v2184
      %v2287 = vpop.f32.mrb[0].mxu0
      %v2288 = vadd.f32 0.0, %v2287
      %v2289 = vpop.f32.mrb[0].mxu0
      %2290 = vdwg.mxu0
      %2291 = vset.pattern.permute.xlu0 1
      %2292 = vperm.xlu0 %2291, %v1941
      %v2293 = vpop.permute.xlu0 %2292
      %2295 = vset.pattern.permute.xlu0 1
      %2296 = vperm.xlu0 %2295, %v1942
      %v2297 = vpop.permute.xlu0 %2296
      %2299 = vset.pattern.permute.xlu0 1
      %2300 = vperm.xlu0 %2299, %v1943
      %v2301 = vpop.permute.xlu0 %2300
      %2303 = vset.pattern.permute.xlu0 1
      %2304 = vperm.xlu0 %2303, %v1944
      %v2305 = vpop.permute.xlu0 %2304
      %2307 = vset.pattern.permute.xlu0 1
      %2308 = vperm.xlu0 %2307, %v1945
      %v2309 = vpop.permute.xlu0 %2308
      %2311 = vset.pattern.permute.xlu0 1
      %2312 = vperm.xlu0 %2311, %v1946
      %v2313 = vpop.permute.xlu0 %2312
      %2315 = vset.pattern.permute.xlu0 1
      %2316 = vperm.xlu0 %2315, %v1947
      %v2317 = vpop.permute.xlu0 %2316
      %2319 = vset.pattern.permute.xlu0 1
      %2320 = vperm.xlu0 %2319, %v1948
      %v2321 = vpop.permute.xlu0 %2320
      %v2323 = vmul.f32 %v1787, %v2293
      %v2324 = vmul.f32 %v1788, %v2297
      %v2325 = vmul.f32 %v1789, %v2301
      %v2326 = vmul.f32 %v1790, %v2305
      %v2327 = vmul.f32 %v1791, %v2309
      %v2328 = vmul.f32 %v1792, %v2313
      %v2329 = vmul.f32 %v1793, %v2317
      %v2330 = vmul.f32 %v1794, %v2321
      %2339 = vrot.lane.b32.xlu0 %v2323, 124
      %v2340 = vpop.permute.xlu0 %2339
      %2341 = vrot.lane.b32.xlu0 %v2324, 124
      %v2342 = vpop.permute.xlu0 %2341
      %2343 = vrot.lane.b32.xlu0 %v2325, 124
      %v2344 = vpop.permute.xlu0 %2343
      %2345 = vrot.lane.b32.xlu0 %v2326, 124
      %v2346 = vpop.permute.xlu0 %2345
      %2347 = vrot.lane.b32.xlu0 %v2327, 124
      %v2348 = vpop.permute.xlu0 %2347
      %2349 = vrot.lane.b32.xlu0 %v2328, 124
      %v2350 = vpop.permute.xlu0 %2349
      %2351 = vrot.lane.b32.xlu0 %v2329, 124
      %v2352 = vpop.permute.xlu0 %2351
      %2353 = vrot.lane.b32.xlu0 %v2330, 124
      %v2354 = vpop.permute.xlu0 %2353
      %v2355 = vsel %vm1713, %v2340, 0
      %v2357 = vsel %vm1713, %v2342, 0
      %v2359 = vsel %vm1713, %v2344, 0
      %v2361 = vsel %vm1713, %v2346, 0
      %v2363 = vsel %vm1713, %v2348, 0
      %v2365 = vsel %vm1713, %v2350, 0
      %v2367 = vsel %vm1713, %v2352, 0
      %v2369 = vsel %vm1713, %v2354, 0
      %2371 = vmatprep.subr.mxu0 0.0
      %2372 = vmatpush1.msra.mxu0 %v2023
      %2373 = vmatprep.subr.mxu0 0.0
      %2374 = vmatpush1.msra.mxu0 0.0
      %2375 = vmatprep.subr.mxu0 0.0
      %2376 = vmatpush1.msra.mxu0 0.0
      %2377 = vmatprep.subr.mxu0 0.0
      %2378 = vmatpush1.msra.mxu0 0.0
      %2379 = vmatprep.subr.mxu0 0.0
      %2380 = vmatpush1.msra.mxu0 0.0
      %2381 = vmatprep.subr.mxu0 0.0
      %2382 = vmatpush1.msra.mxu0 0.0
      %2383 = vmatprep.subr.mxu0 0.0
      %2384 = vmatpush1.msra.mxu0 0.0
      %2385 = vmatprep.subr.mxu0 0.0
      %2386 = vmatpush1.msra.mxu0 0.0
      %2387 = vmatprep.subr.mxu0 0.0
      %2388 = vmatpush1.msra.mxu0 0.0
      %2389 = vmatprep.subr.mxu0 0.0
      %2390 = vmatpush1.msra.mxu0 0.0
      %2391 = vmatprep.subr.mxu0 0.0
      %2392 = vmatpush1.msra.mxu0 0.0
      %2393 = vmatprep.subr.mxu0 0.0
      %2394 = vmatpush1.msra.mxu0 0.0
      %2395 = vmatprep.subr.mxu0 0.0
      %2396 = vmatpush1.msra.mxu0 0.0
      %2397 = vmatprep.subr.mxu0 0.0
      %2398 = vmatpush1.msra.mxu0 0.0
      %2399 = vmatprep.subr.mxu0 0.0
      %2400 = vmatpush1.msra.mxu0 0.0
      %2401 = vmatprep.subr.mxu0 0.0
      %2402 = vmatpush1.msra.mxu0 0.0
      %2403 = vmatprep.subr.mxu0 0.0
      %2404 = vmatpush1.msra.mxu0 0.0
      %2405 = vmatprep.subr.mxu0 0.0
      %2406 = vmatpush1.msra.mxu0 0.0
      %2407 = vmatprep.subr.mxu0 0.0
      %2408 = vmatpush1.msra.mxu0 0.0
      %2409 = vmatprep.subr.mxu0 0.0
      %2410 = vmatpush1.msra.mxu0 0.0
      %2411 = vmatprep.subr.mxu0 0.0
      %2412 = vmatpush1.msra.mxu0 0.0
      %2413 = vmatprep.subr.mxu0 0.0
      %2414 = vmatpush1.msra.mxu0 0.0
      %2415 = vmatprep.subr.mxu0 0.0
      %2416 = vmatpush1.msra.mxu0 0.0
      %2417 = vmatprep.subr.mxu0 0.0
      %2418 = vmatpush1.msra.mxu0 0.0
      %2419 = vmatprep.subr.mxu0 0.0
      %2420 = vmatpush1.msra.mxu0 0.0
      %2421 = vmatprep.subr.mxu0 0.0
      %2422 = vmatpush1.msra.mxu0 0.0
      %2423 = vmatprep.subr.mxu0 0.0
      %2424 = vmatpush1.msra.mxu0 0.0
      %2425 = vmatprep.subr.mxu0 0.0
      %2426 = vmatpush1.msra.mxu0 0.0
      %2427 = vmatprep.subr.mxu0 0.0
      %2428 = vmatpush1.msra.mxu0 0.0
      %2429 = vmatprep.subr.mxu0 0.0
      %2430 = vmatpush1.msra.mxu0 0.0
      %2431 = vmatprep.subr.mxu0 0.0
      %2432 = vmatpush1.msra.mxu0 0.0
      %2433 = vmatprep.subr.mxu0 0.0
      %2434 = vmatpush1.msra.mxu0 0.0
      %2435 = vmatprep.mubr.f32.mxu0 0.0
      %2436 = vmatmul.mubr.f32.gmra.mrb[0].mxu0 %v2355
      %v2437 = vpop.f32.mrb[0].mxu0
      %v2438 = vadd.f32 0.0, %v2437
      %v2439 = vpop.f32.mrb[0].mxu0
      %2440 = vmatprep.mubr.f32.mxu0 0.0
      %2441 = vmatmul.mubr.f32.gmra.mrb[0].mxu0 %v2357
      %v2442 = vpop.f32.mrb[0].mxu0
      %v2443 = vadd.f32 0.0, %v2442
      %v2444 = vpop.f32.mrb[0].mxu0
      %2445 = vmatprep.mubr.f32.mxu0 0.0
      %2446 = vmatmul.mubr.f32.gmra.mrb[0].mxu0 %v2359
      %v2447 = vpop.f32.mrb[0].mxu0
      %v2448 = vadd.f32 0.0, %v2447
      %v2449 = vpop.f32.mrb[0].mxu0
      %2450 = vmatprep.mubr.f32.mxu0 0.0
      %2451 = vmatmul.mubr.f32.gmra.mrb[0].mxu0 %v2361
      %v2452 = vpop.f32.mrb[0].mxu0
      %v2453 = vadd.f32 0.0, %v2452
      %v2454 = vpop.f32.mrb[0].mxu0
      %2455 = vmatprep.mubr.f32.mxu0 0.0
      %2456 = vmatmul.mubr.f32.gmra.mrb[0].mxu0 %v2363
      %v2457 = vpop.f32.mrb[0].mxu0
      %v2458 = vadd.f32 0.0, %v2457
      %v2459 = vpop.f32.mrb[0].mxu0
      %2460 = vmatprep.mubr.f32.mxu0 0.0
      %2461 = vmatmul.mubr.f32.gmra.mrb[0].mxu0 %v2365
      %v2462 = vpop.f32.mrb[0].mxu0
      %v2463 = vadd.f32 0.0, %v2462
      %v2464 = vpop.f32.mrb[0].mxu0
      %2465 = vmatprep.mubr.f32.mxu0 0.0
      %2466 = vmatmul.mubr.f32.gmra.mrb[0].mxu0 %v2367
      %v2467 = vpop.f32.mrb[0].mxu0
      %v2468 = vadd.f32 0.0, %v2467
      %v2469 = vpop.f32.mrb[0].mxu0
      %2470 = vmatprep.mubr.f32.mxu0 0.0
      %2471 = vmatmul.mubr.f32.gmra.mrb[0].mxu0 %v2369
      %v2472 = vpop.f32.mrb[0].mxu0
      %v2473 = vadd.f32 0.0, %v2472
      %v2474 = vpop.f32.mrb[0].mxu0
      %2475 = vdwg.mxu0
      %v2476 = vmul.f32 %v2438, %v2131
      %v2477 = vmul.f32 %v2443, %v2133
      %v2478 = vmul.f32 %v2448, %v2135
      %v2479 = vmul.f32 %v2453, %v2137
      %v2480 = vmul.f32 %v2458, %v2139
      %v2481 = vmul.f32 %v2463, %v2141
      %v2482 = vmul.f32 %v2468, %v2143
      %v2483 = vmul.f32 %v2473, %v2145
      %v2485 = vsel %vm397, %v2476, 0
      %v2488 = vsel %vm397, %v2477, 0
      %v2491 = vsel %vm397, %v2478, 0
      %v2494 = vsel %vm397, %v2479, 0
      %v2497 = vsel %vm397, %v2480, 0
      %v2500 = vsel %vm397, %v2481, 0
      %v2503 = vsel %vm397, %v2482, 0
      %v2506 = vsel %vm397, %v2483, 0
      %2508 = vmatprep.subr.mxu0 0.0
      %2509 = vmatpush1.msra.mxu0 %v492
      %2510 = vmatprep.subr.mxu0 0.0
      %2511 = vmatpush1.msra.mxu0 %v493
      %2512 = vmatprep.subr.mxu0 0.0
      %2513 = vmatpush1.msra.mxu0 %v494
      %2514 = vmatprep.subr.mxu0 0.0
      %2515 = vmatpush1.msra.mxu0 %v495
      %2516 = vmatprep.subr.mxu0 0.0
      %2517 = vmatpush1.msra.mxu0 0.0
      %2518 = vmatprep.subr.mxu0 0.0
      %2519 = vmatpush1.msra.mxu0 0.0
      %2520 = vmatprep.subr.mxu0 0.0
      %2521 = vmatpush1.msra.mxu0 0.0
      %2522 = vmatprep.subr.mxu0 0.0
      %2523 = vmatpush1.msra.mxu0 0.0
      %2524 = vmatprep.subr.mxu0 0.0
      %2525 = vmatpush1.msra.mxu0 0.0
      %2526 = vmatprep.subr.mxu0 0.0
      %2527 = vmatpush1.msra.mxu0 0.0
      %2528 = vmatprep.subr.mxu0 0.0
      %2529 = vmatpush1.msra.mxu0 0.0
      %2530 = vmatprep.subr.mxu0 0.0
      %2531 = vmatpush1.msra.mxu0 0.0
      %2532 = vmatprep.subr.mxu0 0.0
      %2533 = vmatpush1.msra.mxu0 0.0
      %2534 = vmatprep.subr.mxu0 0.0
      %2535 = vmatpush1.msra.mxu0 0.0
      %2536 = vmatprep.subr.mxu0 0.0
      %2537 = vmatpush1.msra.mxu0 0.0
      %2538 = vmatprep.subr.mxu0 0.0
      %2539 = vmatpush1.msra.mxu0 0.0
      %2540 = vmatprep.subr.mxu0 0.0
      %2541 = vmatpush1.msra.mxu0 0.0
      %2542 = vmatprep.subr.mxu0 0.0
      %2543 = vmatpush1.msra.mxu0 0.0
      %2544 = vmatprep.subr.mxu0 0.0
      %2545 = vmatpush1.msra.mxu0 0.0
      %2546 = vmatprep.subr.mxu0 0.0
      %2547 = vmatpush1.msra.mxu0 0.0
      %2548 = vmatprep.subr.mxu0 0.0
      %2549 = vmatpush1.msra.mxu0 0.0
      %2550 = vmatprep.subr.mxu0 0.0
      %2551 = vmatpush1.msra.mxu0 0.0
      %2552 = vmatprep.subr.mxu0 0.0
      %2553 = vmatpush1.msra.mxu0 0.0
      %2554 = vmatprep.subr.mxu0 0.0
      %2555 = vmatpush1.msra.mxu0 0.0
      %2556 = vmatprep.subr.mxu0 0.0
      %2557 = vmatpush1.msra.mxu0 0.0
      %2558 = vmatprep.subr.mxu0 0.0
      %2559 = vmatpush1.msra.mxu0 0.0
      %2560 = vmatprep.subr.mxu0 0.0
      %2561 = vmatpush1.msra.mxu0 0.0
      %2562 = vmatprep.subr.mxu0 0.0
      %2563 = vmatpush1.msra.mxu0 0.0
      %2564 = vmatprep.subr.mxu0 0.0
      %2565 = vmatpush1.msra.mxu0 0.0
      %2566 = vmatprep.subr.mxu0 0.0
      %2567 = vmatpush1.msra.mxu0 0.0
      %2568 = vmatprep.subr.mxu0 0.0
      %2569 = vmatpush1.msra.mxu0 0.0
      %2570 = vmatprep.subr.mxu0 0.0
      %2571 = vmatpush1.msra.mxu0 0.0
      %2572 = vmatprep.mubr.f32.mxu0 0.0
      %2573 = vmatmul.mubr.f32.gmra.mrb[0].mxu0 %v2485
      %v2574 = vpop.f32.mrb[0].mxu0
      %v2575 = vadd.f32 0.0, %v2574
      %v2576 = vpop.f32.mrb[0].mxu0
      %2577 = vmatprep.mubr.f32.mxu0 0.0
      %2578 = vmatmul.mubr.f32.gmra.mrb[0].mxu0 %v2488
      %v2579 = vpop.f32.mrb[0].mxu0
      %v2580 = vadd.f32 0.0, %v2579
      %v2581 = vpop.f32.mrb[0].mxu0
      %2582 = vmatprep.mubr.f32.mxu0 0.0
      %2583 = vmatmul.mubr.f32.gmra.mrb[0].mxu0 %v2491
      %v2584 = vpop.f32.mrb[0].mxu0
      %v2585 = vadd.f32 0.0, %v2584
      %v2586 = vpop.f32.mrb[0].mxu0
      %2587 = vmatprep.mubr.f32.mxu0 0.0
      %2588 = vmatmul.mubr.f32.gmra.mrb[0].mxu0 %v2494
      %v2589 = vpop.f32.mrb[0].mxu0
      %v2590 = vadd.f32 0.0, %v2589
      %v2591 = vpop.f32.mrb[0].mxu0
      %2592 = vmatprep.mubr.f32.mxu0 0.0
      %2593 = vmatmul.mubr.f32.gmra.mrb[0].mxu0 %v2497
      %v2594 = vpop.f32.mrb[0].mxu0
      %v2595 = vadd.f32 0.0, %v2594
      %v2596 = vpop.f32.mrb[0].mxu0
      %2597 = vmatprep.mubr.f32.mxu0 0.0
      %2598 = vmatmul.mubr.f32.gmra.mrb[0].mxu0 %v2500
      %v2599 = vpop.f32.mrb[0].mxu0
      %v2600 = vadd.f32 0.0, %v2599
      %v2601 = vpop.f32.mrb[0].mxu0
      %2602 = vmatprep.mubr.f32.mxu0 0.0
      %2603 = vmatmul.mubr.f32.gmra.mrb[0].mxu0 %v2503
      %v2604 = vpop.f32.mrb[0].mxu0
      %v2605 = vadd.f32 0.0, %v2604
      %v2606 = vpop.f32.mrb[0].mxu0
      %2607 = vmatprep.mubr.f32.mxu0 0.0
      %2608 = vmatmul.mubr.f32.gmra.mrb[0].mxu0 %v2506
      %v2609 = vpop.f32.mrb[0].mxu0
      %v2610 = vadd.f32 0.0, %v2609
      %v2611 = vpop.f32.mrb[0].mxu0
      %2612 = vdwg.mxu0
      %2613 = vset.pattern.permute.xlu0 2
      %2614 = vperm.xlu0 %2613, %v1941
      %v2615 = vpop.permute.xlu0 %2614
      %2617 = vset.pattern.permute.xlu0 2
      %2618 = vperm.xlu0 %2617, %v1942
      %v2619 = vpop.permute.xlu0 %2618
      %2621 = vset.pattern.permute.xlu0 2
      %2622 = vperm.xlu0 %2621, %v1943
      %v2623 = vpop.permute.xlu0 %2622
      %2625 = vset.pattern.permute.xlu0 2
      %2626 = vperm.xlu0 %2625, %v1944
      %v2627 = vpop.permute.xlu0 %2626
      %2629 = vset.pattern.permute.xlu0 2
      %2630 = vperm.xlu0 %2629, %v1945
      %v2631 = vpop.permute.xlu0 %2630
      %2633 = vset.pattern.permute.xlu0 2
      %2634 = vperm.xlu0 %2633, %v1946
      %v2635 = vpop.permute.xlu0 %2634
      %2637 = vset.pattern.permute.xlu0 2
      %2638 = vperm.xlu0 %2637, %v1947
      %v2639 = vpop.permute.xlu0 %2638
      %2641 = vset.pattern.permute.xlu0 2
      %2642 = vperm.xlu0 %2641, %v1948
      %v2643 = vpop.permute.xlu0 %2642
      %v2645 = vmul.f32 %v1787, %v2615
      %v2646 = vmul.f32 %v1788, %v2619
      %v2647 = vmul.f32 %v1789, %v2623
      %v2648 = vmul.f32 %v1790, %v2627
      %v2649 = vmul.f32 %v1791, %v2631
      %v2650 = vmul.f32 %v1792, %v2635
      %v2651 = vmul.f32 %v1793, %v2639
      %v2652 = vmul.f32 %v1794, %v2643
      %2661 = vrot.lane.b32.xlu0 %v2645, 120
      %v2662 = vpop.permute.xlu0 %2661
      %2663 = vrot.lane.b32.xlu0 %v2646, 120
      %v2664 = vpop.permute.xlu0 %2663
      %2665 = vrot.lane.b32.xlu0 %v2647, 120
      %v2666 = vpop.permute.xlu0 %2665
      %2667 = vrot.lane.b32.xlu0 %v2648, 120
      %v2668 = vpop.permute.xlu0 %2667
      %2669 = vrot.lane.b32.xlu0 %v2649, 120
      %v2670 = vpop.permute.xlu0 %2669
      %2671 = vrot.lane.b32.xlu0 %v2650, 120
      %v2672 = vpop.permute.xlu0 %2671
      %2673 = vrot.lane.b32.xlu0 %v2651, 120
      %v2674 = vpop.permute.xlu0 %2673
      %2675 = vrot.lane.b32.xlu0 %v2652, 120
      %v2676 = vpop.permute.xlu0 %2675
      %v2677 = vsel %vm1713, %v2662, 0
      %v2679 = vsel %vm1713, %v2664, 0
      %v2681 = vsel %vm1713, %v2666, 0
      %v2683 = vsel %vm1713, %v2668, 0
      %v2685 = vsel %vm1713, %v2670, 0
      %v2687 = vsel %vm1713, %v2672, 0
      %v2689 = vsel %vm1713, %v2674, 0
      %v2691 = vsel %vm1713, %v2676, 0
      %2693 = vmatprep.subr.mxu0 0.0
      %2694 = vmatpush1.msra.mxu0 %v2023
      %2695 = vmatprep.subr.mxu0 0.0
      %2696 = vmatpush1.msra.mxu0 0.0
      %2697 = vmatprep.subr.mxu0 0.0
      %2698 = vmatpush1.msra.mxu0 0.0
      %2699 = vmatprep.subr.mxu0 0.0
      %2700 = vmatpush1.msra.mxu0 0.0
      %2701 = vmatprep.subr.mxu0 0.0
      %2702 = vmatpush1.msra.mxu0 0.0
      %2703 = vmatprep.subr.mxu0 0.0
      %2704 = vmatpush1.msra.mxu0 0.0
      %2705 = vmatprep.subr.mxu0 0.0
      %2706 = vmatpush1.msra.mxu0 0.0
      %2707 = vmatprep.subr.mxu0 0.0
      %2708 = vmatpush1.msra.mxu0 0.0
      %2709 = vmatprep.subr.mxu0 0.0
      %2710 = vmatpush1.msra.mxu0 0.0
      %2711 = vmatprep.subr.mxu0 0.0
      %2712 = vmatpush1.msra.mxu0 0.0
      %2713 = vmatprep.subr.mxu0 0.0
      %2714 = vmatpush1.msra.mxu0 0.0
      %2715 = vmatprep.subr.mxu0 0.0
      %2716 = vmatpush1.msra.mxu0 0.0
      %2717 = vmatprep.subr.mxu0 0.0
      %2718 = vmatpush1.msra.mxu0 0.0
      %2719 = vmatprep.subr.mxu0 0.0
      %2720 = vmatpush1.msra.mxu0 0.0
      %2721 = vmatprep.subr.mxu0 0.0
      %2722 = vmatpush1.msra.mxu0 0.0
      %2723 = vmatprep.subr.mxu0 0.0
      %2724 = vmatpush1.msra.mxu0 0.0
      %2725 = vmatprep.subr.mxu0 0.0
      %2726 = vmatpush1.msra.mxu0 0.0
      %2727 = vmatprep.subr.mxu0 0.0
      %2728 = vmatpush1.msra.mxu0 0.0
      %2729 = vmatprep.subr.mxu0 0.0
      %2730 = vmatpush1.msra.mxu0 0.0
      %2731 = vmatprep.subr.mxu0 0.0
      %2732 = vmatpush1.msra.mxu0 0.0
      %2733 = vmatprep.subr.mxu0 0.0
      %2734 = vmatpush1.msra.mxu0 0.0
      %2735 = vmatprep.subr.mxu0 0.0
      %2736 = vmatpush1.msra.mxu0 0.0
      %2737 = vmatprep.subr.mxu0 0.0
      %2738 = vmatpush1.msra.mxu0 0.0
      %2739 = vmatprep.subr.mxu0 0.0
      %2740 = vmatpush1.msra.mxu0 0.0
      %2741 = vmatprep.subr.mxu0 0.0
      %2742 = vmatpush1.msra.mxu0 0.0
      %2743 = vmatprep.subr.mxu0 0.0
      %2744 = vmatpush1.msra.mxu0 0.0
      %2745 = vmatprep.subr.mxu0 0.0
      %2746 = vmatpush1.msra.mxu0 0.0
      %2747 = vmatprep.subr.mxu0 0.0
      %2748 = vmatpush1.msra.mxu0 0.0
      %2749 = vmatprep.subr.mxu0 0.0
      %2750 = vmatpush1.msra.mxu0 0.0
      %2751 = vmatprep.subr.mxu0 0.0
      %2752 = vmatpush1.msra.mxu0 0.0
      %2753 = vmatprep.subr.mxu0 0.0
      %2754 = vmatpush1.msra.mxu0 0.0
      %2755 = vmatprep.subr.mxu0 0.0
      %2756 = vmatpush1.msra.mxu0 0.0
      %2757 = vmatprep.mubr.f32.mxu0 0.0
      %2758 = vmatmul.mubr.f32.gmra.mrb[0].mxu0 %v2677
      %v2759 = vpop.f32.mrb[0].mxu0
      %v2760 = vadd.f32 0.0, %v2759
      %v2761 = vpop.f32.mrb[0].mxu0
      %2762 = vmatprep.mubr.f32.mxu0 0.0
      %2763 = vmatmul.mubr.f32.gmra.mrb[0].mxu0 %v2679
      %v2764 = vpop.f32.mrb[0].mxu0
      %v2765 = vadd.f32 0.0, %v2764
      %v2766 = vpop.f32.mrb[0].mxu0
      %2767 = vmatprep.mubr.f32.mxu0 0.0
      %2768 = vmatmul.mubr.f32.gmra.mrb[0].mxu0 %v2681
      %v2769 = vpop.f32.mrb[0].mxu0
      %v2770 = vadd.f32 0.0, %v2769
      %v2771 = vpop.f32.mrb[0].mxu0
      %2772 = vmatprep.mubr.f32.mxu0 0.0
      %2773 = vmatmul.mubr.f32.gmra.mrb[0].mxu0 %v2683
      %v2774 = vpop.f32.mrb[0].mxu0
      %v2775 = vadd.f32 0.0, %v2774
      %v2776 = vpop.f32.mrb[0].mxu0
      %2777 = vmatprep.mubr.f32.mxu0 0.0
      %2778 = vmatmul.mubr.f32.gmra.mrb[0].mxu0 %v2685
      %v2779 = vpop.f32.mrb[0].mxu0
      %v2780 = vadd.f32 0.0, %v2779
      %v2781 = vpop.f32.mrb[0].mxu0
      %2782 = vmatprep.mubr.f32.mxu0 0.0
      %2783 = vmatmul.mubr.f32.gmra.mrb[0].mxu0 %v2687
      %v2784 = vpop.f32.mrb[0].mxu0
      %v2785 = vadd.f32 0.0, %v2784
      %v2786 = vpop.f32.mrb[0].mxu0
      %2787 = vmatprep.mubr.f32.mxu0 0.0
      %2788 = vmatmul.mubr.f32.gmra.mrb[0].mxu0 %v2689
      %v2789 = vpop.f32.mrb[0].mxu0
      %v2790 = vadd.f32 0.0, %v2789
      %v2791 = vpop.f32.mrb[0].mxu0
      %2792 = vmatprep.mubr.f32.mxu0 0.0
      %2793 = vmatmul.mubr.f32.gmra.mrb[0].mxu0 %v2691
      %v2794 = vpop.f32.mrb[0].mxu0
      %v2795 = vadd.f32 0.0, %v2794
      %v2796 = vpop.f32.mrb[0].mxu0
      %2797 = vdwg.mxu0
      %v2798 = vmul.f32 %v2760, %v2131
      %v2799 = vmul.f32 %v2765, %v2133
      %v2800 = vmul.f32 %v2770, %v2135
      %v2801 = vmul.f32 %v2775, %v2137
      %v2802 = vmul.f32 %v2780, %v2139
      %v2803 = vmul.f32 %v2785, %v2141
      %v2804 = vmul.f32 %v2790, %v2143
      %v2805 = vmul.f32 %v2795, %v2145
      %v2807 = vsel %vm397, %v2798, 0
      %v2810 = vsel %vm397, %v2799, 0
      %v2813 = vsel %vm397, %v2800, 0
      %v2816 = vsel %vm397, %v2801, 0
      %v2819 = vsel %vm397, %v2802, 0
      %v2822 = vsel %vm397, %v2803, 0
      %v2825 = vsel %vm397, %v2804, 0
      %v2828 = vsel %vm397, %v2805, 0
      %2830 = vmatprep.subr.mxu0 0.0
      %2831 = vmatpush1.msra.mxu0 %v492
      %2832 = vmatprep.subr.mxu0 0.0
      %2833 = vmatpush1.msra.mxu0 %v493
      %2834 = vmatprep.subr.mxu0 0.0
      %2835 = vmatpush1.msra.mxu0 %v494
      %2836 = vmatprep.subr.mxu0 0.0
      %2837 = vmatpush1.msra.mxu0 %v495
      %2838 = vmatprep.subr.mxu0 0.0
      %2839 = vmatpush1.msra.mxu0 0.0
      %2840 = vmatprep.subr.mxu0 0.0
      %2841 = vmatpush1.msra.mxu0 0.0
      %2842 = vmatprep.subr.mxu0 0.0
      %2843 = vmatpush1.msra.mxu0 0.0
      %2844 = vmatprep.subr.mxu0 0.0
      %2845 = vmatpush1.msra.mxu0 0.0
      %2846 = vmatprep.subr.mxu0 0.0
      %2847 = vmatpush1.msra.mxu0 0.0
      %2848 = vmatprep.subr.mxu0 0.0
      %2849 = vmatpush1.msra.mxu0 0.0
      %2850 = vmatprep.subr.mxu0 0.0
      %2851 = vmatpush1.msra.mxu0 0.0
      %2852 = vmatprep.subr.mxu0 0.0
      %2853 = vmatpush1.msra.mxu0 0.0
      %2854 = vmatprep.subr.mxu0 0.0
      %2855 = vmatpush1.msra.mxu0 0.0
      %2856 = vmatprep.subr.mxu0 0.0
      %2857 = vmatpush1.msra.mxu0 0.0
      %2858 = vmatprep.subr.mxu0 0.0
      %2859 = vmatpush1.msra.mxu0 0.0
      %2860 = vmatprep.subr.mxu0 0.0
      %2861 = vmatpush1.msra.mxu0 0.0
      %2862 = vmatprep.subr.mxu0 0.0
      %2863 = vmatpush1.msra.mxu0 0.0
      %2864 = vmatprep.subr.mxu0 0.0
      %2865 = vmatpush1.msra.mxu0 0.0
      %2866 = vmatprep.subr.mxu0 0.0
      %2867 = vmatpush1.msra.mxu0 0.0
      %2868 = vmatprep.subr.mxu0 0.0
      %2869 = vmatpush1.msra.mxu0 0.0
      %2870 = vmatprep.subr.mxu0 0.0
      %2871 = vmatpush1.msra.mxu0 0.0
      %2872 = vmatprep.subr.mxu0 0.0
      %2873 = vmatpush1.msra.mxu0 0.0
      %2874 = vmatprep.subr.mxu0 0.0
      %2875 = vmatpush1.msra.mxu0 0.0
      %2876 = vmatprep.subr.mxu0 0.0
      %2877 = vmatpush1.msra.mxu0 0.0
      %2878 = vmatprep.subr.mxu0 0.0
      %2879 = vmatpush1.msra.mxu0 0.0
      %2880 = vmatprep.subr.mxu0 0.0
      %2881 = vmatpush1.msra.mxu0 0.0
      %2882 = vmatprep.subr.mxu0 0.0
      %2883 = vmatpush1.msra.mxu0 0.0
      %2884 = vmatprep.subr.mxu0 0.0
      %2885 = vmatpush1.msra.mxu0 0.0
      %2886 = vmatprep.subr.mxu0 0.0
      %2887 = vmatpush1.msra.mxu0 0.0
      %2888 = vmatprep.subr.mxu0 0.0
      %2889 = vmatpush1.msra.mxu0 0.0
      %2890 = vmatprep.subr.mxu0 0.0
      %2891 = vmatpush1.msra.mxu0 0.0
      %2892 = vmatprep.subr.mxu0 0.0
      %2893 = vmatpush1.msra.mxu0 0.0
      %2894 = vmatprep.mubr.f32.mxu0 0.0
      %2895 = vmatmul.mubr.f32.gmra.mrb[0].mxu0 %v2807
      %v2896 = vpop.f32.mrb[0].mxu0
      %v2897 = vadd.f32 0.0, %v2896
      %v2898 = vpop.f32.mrb[0].mxu0
      %2899 = vmatprep.mubr.f32.mxu0 0.0
      %2900 = vmatmul.mubr.f32.gmra.mrb[0].mxu0 %v2810
      %v2901 = vpop.f32.mrb[0].mxu0
      %v2902 = vadd.f32 0.0, %v2901
      %v2903 = vpop.f32.mrb[0].mxu0
      %2904 = vmatprep.mubr.f32.mxu0 0.0
      %2905 = vmatmul.mubr.f32.gmra.mrb[0].mxu0 %v2813
      %v2906 = vpop.f32.mrb[0].mxu0
      %v2907 = vadd.f32 0.0, %v2906
      %v2908 = vpop.f32.mrb[0].mxu0
      %2909 = vmatprep.mubr.f32.mxu0 0.0
      %2910 = vmatmul.mubr.f32.gmra.mrb[0].mxu0 %v2816
      %v2911 = vpop.f32.mrb[0].mxu0
      %v2912 = vadd.f32 0.0, %v2911
      %v2913 = vpop.f32.mrb[0].mxu0
      %2914 = vmatprep.mubr.f32.mxu0 0.0
      %2915 = vmatmul.mubr.f32.gmra.mrb[0].mxu0 %v2819
      %v2916 = vpop.f32.mrb[0].mxu0
      %v2917 = vadd.f32 0.0, %v2916
      %v2918 = vpop.f32.mrb[0].mxu0
      %2919 = vmatprep.mubr.f32.mxu0 0.0
      %2920 = vmatmul.mubr.f32.gmra.mrb[0].mxu0 %v2822
      %v2921 = vpop.f32.mrb[0].mxu0
      %v2922 = vadd.f32 0.0, %v2921
      %v2923 = vpop.f32.mrb[0].mxu0
      %2924 = vmatprep.mubr.f32.mxu0 0.0
      %2925 = vmatmul.mubr.f32.gmra.mrb[0].mxu0 %v2825
      %v2926 = vpop.f32.mrb[0].mxu0
      %v2927 = vadd.f32 0.0, %v2926
      %v2928 = vpop.f32.mrb[0].mxu0
      %2929 = vmatprep.mubr.f32.mxu0 0.0
      %2930 = vmatmul.mubr.f32.gmra.mrb[0].mxu0 %v2828
      %v2931 = vpop.f32.mrb[0].mxu0
      %v2932 = vadd.f32 0.0, %v2931
      %v2933 = vpop.f32.mrb[0].mxu0
      %2934 = vdwg.mxu0
      %2935 = vset.pattern.permute.xlu0 3
      %2936 = vperm.xlu0 %2935, %v1941
      %v2937 = vpop.permute.xlu0 %2936
      %2939 = vset.pattern.permute.xlu0 3
      %2940 = vperm.xlu0 %2939, %v1942
      %v2941 = vpop.permute.xlu0 %2940
      %2943 = vset.pattern.permute.xlu0 3
      %2944 = vperm.xlu0 %2943, %v1943
      %v2945 = vpop.permute.xlu0 %2944
      %2947 = vset.pattern.permute.xlu0 3
      %2948 = vperm.xlu0 %2947, %v1944
      %v2949 = vpop.permute.xlu0 %2948
      %2951 = vset.pattern.permute.xlu0 3
      %2952 = vperm.xlu0 %2951, %v1945
      %v2953 = vpop.permute.xlu0 %2952
      %2955 = vset.pattern.permute.xlu0 3
      %2956 = vperm.xlu0 %2955, %v1946
      %v2957 = vpop.permute.xlu0 %2956
      %2959 = vset.pattern.permute.xlu0 3
      %2960 = vperm.xlu0 %2959, %v1947
      %v2961 = vpop.permute.xlu0 %2960
      %2963 = vset.pattern.permute.xlu0 3
      %2964 = vperm.xlu0 %2963, %v1948
      %v2965 = vpop.permute.xlu0 %2964
      %v2967 = vmul.f32 %v1787, %v2937
      %v2968 = vmul.f32 %v1788, %v2941
      %v2969 = vmul.f32 %v1789, %v2945
      %v2970 = vmul.f32 %v1790, %v2949
      %v2971 = vmul.f32 %v1791, %v2953
      %v2972 = vmul.f32 %v1792, %v2957
      %v2973 = vmul.f32 %v1793, %v2961
      %v2974 = vmul.f32 %v1794, %v2965
      %2983 = vrot.lane.b32.xlu0 %v2967, 116
      %v2984 = vpop.permute.xlu0 %2983
      %2985 = vrot.lane.b32.xlu0 %v2968, 116
      %v2986 = vpop.permute.xlu0 %2985
      %2987 = vrot.lane.b32.xlu0 %v2969, 116
      %v2988 = vpop.permute.xlu0 %2987
      %2989 = vrot.lane.b32.xlu0 %v2970, 116
      %v2990 = vpop.permute.xlu0 %2989
      %2991 = vrot.lane.b32.xlu0 %v2971, 116
      %v2992 = vpop.permute.xlu0 %2991
      %2993 = vrot.lane.b32.xlu0 %v2972, 116
      %v2994 = vpop.permute.xlu0 %2993
      %2995 = vrot.lane.b32.xlu0 %v2973, 116
      %v2996 = vpop.permute.xlu0 %2995
      %2997 = vrot.lane.b32.xlu0 %v2974, 116
      %v2998 = vpop.permute.xlu0 %2997
      %v2999 = vsel %vm1713, %v2984, 0
      %v3001 = vsel %vm1713, %v2986, 0
      %v3003 = vsel %vm1713, %v2988, 0
      %v3005 = vsel %vm1713, %v2990, 0
      %v3007 = vsel %vm1713, %v2992, 0
      %v3009 = vsel %vm1713, %v2994, 0
      %v3011 = vsel %vm1713, %v2996, 0
      %v3013 = vsel %vm1713, %v2998, 0
      %3015 = vmatprep.subr.mxu0 0.0
      %3016 = vmatpush1.msra.mxu0 %v2023
      %3017 = vmatprep.subr.mxu0 0.0
      %3018 = vmatpush1.msra.mxu0 0.0
      %3019 = vmatprep.subr.mxu0 0.0
      %3020 = vmatpush1.msra.mxu0 0.0
      %3021 = vmatprep.subr.mxu0 0.0
      %3022 = vmatpush1.msra.mxu0 0.0
      %3023 = vmatprep.subr.mxu0 0.0
      %3024 = vmatpush1.msra.mxu0 0.0
      %3025 = vmatprep.subr.mxu0 0.0
      %3026 = vmatpush1.msra.mxu0 0.0
      %3027 = vmatprep.subr.mxu0 0.0
      %3028 = vmatpush1.msra.mxu0 0.0
      %3029 = vmatprep.subr.mxu0 0.0
      %3030 = vmatpush1.msra.mxu0 0.0
      %3031 = vmatprep.subr.mxu0 0.0
      %3032 = vmatpush1.msra.mxu0 0.0
      %3033 = vmatprep.subr.mxu0 0.0
      %3034 = vmatpush1.msra.mxu0 0.0
      %3035 = vmatprep.subr.mxu0 0.0
      %3036 = vmatpush1.msra.mxu0 0.0
      %3037 = vmatprep.subr.mxu0 0.0
      %3038 = vmatpush1.msra.mxu0 0.0
      %3039 = vmatprep.subr.mxu0 0.0
      %3040 = vmatpush1.msra.mxu0 0.0
      %3041 = vmatprep.subr.mxu0 0.0
      %3042 = vmatpush1.msra.mxu0 0.0
      %3043 = vmatprep.subr.mxu0 0.0
      %3044 = vmatpush1.msra.mxu0 0.0
      %3045 = vmatprep.subr.mxu0 0.0
      %3046 = vmatpush1.msra.mxu0 0.0
      %3047 = vmatprep.subr.mxu0 0.0
      %3048 = vmatpush1.msra.mxu0 0.0
      %3049 = vmatprep.subr.mxu0 0.0
      %3050 = vmatpush1.msra.mxu0 0.0
      %3051 = vmatprep.subr.mxu0 0.0
      %3052 = vmatpush1.msra.mxu0 0.0
      %3053 = vmatprep.subr.mxu0 0.0
      %3054 = vmatpush1.msra.mxu0 0.0
      %3055 = vmatprep.subr.mxu0 0.0
      %3056 = vmatpush1.msra.mxu0 0.0
      %3057 = vmatprep.subr.mxu0 0.0
      %3058 = vmatpush1.msra.mxu0 0.0
      %3059 = vmatprep.subr.mxu0 0.0
      %3060 = vmatpush1.msra.mxu0 0.0
      %3061 = vmatprep.subr.mxu0 0.0
      %3062 = vmatpush1.msra.mxu0 0.0
      %3063 = vmatprep.subr.mxu0 0.0
      %3064 = vmatpush1.msra.mxu0 0.0
      %3065 = vmatprep.subr.mxu0 0.0
      %3066 = vmatpush1.msra.mxu0 0.0
      %3067 = vmatprep.subr.mxu0 0.0
      %3068 = vmatpush1.msra.mxu0 0.0
      %3069 = vmatprep.subr.mxu0 0.0
      %3070 = vmatpush1.msra.mxu0 0.0
      %3071 = vmatprep.subr.mxu0 0.0
      %3072 = vmatpush1.msra.mxu0 0.0
      %3073 = vmatprep.subr.mxu0 0.0
      %3074 = vmatpush1.msra.mxu0 0.0
      %3075 = vmatprep.subr.mxu0 0.0
      %3076 = vmatpush1.msra.mxu0 0.0
      %3077 = vmatprep.subr.mxu0 0.0
      %3078 = vmatpush1.msra.mxu0 0.0
      %3079 = vmatprep.mubr.f32.mxu0 0.0
      %3080 = vmatmul.mubr.f32.gmra.mrb[0].mxu0 %v2999
      %v3081 = vpop.f32.mrb[0].mxu0
      %v3082 = vadd.f32 0.0, %v3081
      %v3083 = vpop.f32.mrb[0].mxu0
      %3084 = vmatprep.mubr.f32.mxu0 0.0
      %3085 = vmatmul.mubr.f32.gmra.mrb[0].mxu0 %v3001
      %v3086 = vpop.f32.mrb[0].mxu0
      %v3087 = vadd.f32 0.0, %v3086
      %v3088 = vpop.f32.mrb[0].mxu0
      %3089 = vmatprep.mubr.f32.mxu0 0.0
      %3090 = vmatmul.mubr.f32.gmra.mrb[0].mxu0 %v3003
      %v3091 = vpop.f32.mrb[0].mxu0
      %v3092 = vadd.f32 0.0, %v3091
      %v3093 = vpop.f32.mrb[0].mxu0
      %3094 = vmatprep.mubr.f32.mxu0 0.0
      %3095 = vmatmul.mubr.f32.gmra.mrb[0].mxu0 %v3005
      %v3096 = vpop.f32.mrb[0].mxu0
      %v3097 = vadd.f32 0.0, %v3096
      %v3098 = vpop.f32.mrb[0].mxu0
      %3099 = vmatprep.mubr.f32.mxu0 0.0
      %3100 = vmatmul.mubr.f32.gmra.mrb[0].mxu0 %v3007
      %v3101 = vpop.f32.mrb[0].mxu0
      %v3102 = vadd.f32 0.0, %v3101
      %v3103 = vpop.f32.mrb[0].mxu0
      %3104 = vmatprep.mubr.f32.mxu0 0.0
      %3105 = vmatmul.mubr.f32.gmra.mrb[0].mxu0 %v3009
      %v3106 = vpop.f32.mrb[0].mxu0
      %v3107 = vadd.f32 0.0, %v3106
      %v3108 = vpop.f32.mrb[0].mxu0
      %3109 = vmatprep.mubr.f32.mxu0 0.0
      %3110 = vmatmul.mubr.f32.gmra.mrb[0].mxu0 %v3011
      %v3111 = vpop.f32.mrb[0].mxu0
      %v3112 = vadd.f32 0.0, %v3111
      %v3113 = vpop.f32.mrb[0].mxu0
      %3114 = vmatprep.mubr.f32.mxu0 0.0
      %3115 = vmatmul.mubr.f32.gmra.mrb[0].mxu0 %v3013
      %v3116 = vpop.f32.mrb[0].mxu0
      %v3117 = vadd.f32 0.0, %v3116
      %v3118 = vpop.f32.mrb[0].mxu0
      %3119 = vdwg.mxu0
      %v3120 = vmul.f32 %v3082, %v2131
      %v3121 = vmul.f32 %v3087, %v2133
      %v3122 = vmul.f32 %v3092, %v2135
      %v3123 = vmul.f32 %v3097, %v2137
      %v3124 = vmul.f32 %v3102, %v2139
      %v3125 = vmul.f32 %v3107, %v2141
      %v3126 = vmul.f32 %v3112, %v2143
      %v3127 = vmul.f32 %v3117, %v2145
      %v3129 = vsel %vm397, %v3120, 0
      %v3132 = vsel %vm397, %v3121, 0
      %v3135 = vsel %vm397, %v3122, 0
      %v3138 = vsel %vm397, %v3123, 0
      %v3141 = vsel %vm397, %v3124, 0
      %v3144 = vsel %vm397, %v3125, 0
      %v3147 = vsel %vm397, %v3126, 0
      %v3150 = vsel %vm397, %v3127, 0
      %3152 = vmatprep.subr.mxu0 0.0
      %3153 = vmatpush1.msra.mxu0 %v492
      %3154 = vmatprep.subr.mxu0 0.0
      %3155 = vmatpush1.msra.mxu0 %v493
      %3156 = vmatprep.subr.mxu0 0.0
      %3157 = vmatpush1.msra.mxu0 %v494
      %3158 = vmatprep.subr.mxu0 0.0
      %3159 = vmatpush1.msra.mxu0 %v495
      %3160 = vmatprep.subr.mxu0 0.0
      %3161 = vmatpush1.msra.mxu0 0.0
      %3162 = vmatprep.subr.mxu0 0.0
      %3163 = vmatpush1.msra.mxu0 0.0
      %3164 = vmatprep.subr.mxu0 0.0
      %3165 = vmatpush1.msra.mxu0 0.0
      %3166 = vmatprep.subr.mxu0 0.0
      %3167 = vmatpush1.msra.mxu0 0.0
      %3168 = vmatprep.subr.mxu0 0.0
      %3169 = vmatpush1.msra.mxu0 0.0
      %3170 = vmatprep.subr.mxu0 0.0
      %3171 = vmatpush1.msra.mxu0 0.0
      %3172 = vmatprep.subr.mxu0 0.0
      %3173 = vmatpush1.msra.mxu0 0.0
      %3174 = vmatprep.subr.mxu0 0.0
      %3175 = vmatpush1.msra.mxu0 0.0
      %3176 = vmatprep.subr.mxu0 0.0
      %3177 = vmatpush1.msra.mxu0 0.0
      %3178 = vmatprep.subr.mxu0 0.0
      %3179 = vmatpush1.msra.mxu0 0.0
      %3180 = vmatprep.subr.mxu0 0.0
      %3181 = vmatpush1.msra.mxu0 0.0
      %3182 = vmatprep.subr.mxu0 0.0
      %3183 = vmatpush1.msra.mxu0 0.0
      %3184 = vmatprep.subr.mxu0 0.0
      %3185 = vmatpush1.msra.mxu0 0.0
      %3186 = vmatprep.subr.mxu0 0.0
      %3187 = vmatpush1.msra.mxu0 0.0
      %3188 = vmatprep.subr.mxu0 0.0
      %3189 = vmatpush1.msra.mxu0 0.0
      %3190 = vmatprep.subr.mxu0 0.0
      %3191 = vmatpush1.msra.mxu0 0.0
      %3192 = vmatprep.subr.mxu0 0.0
      %3193 = vmatpush1.msra.mxu0 0.0
      %3194 = vmatprep.subr.mxu0 0.0
      %3195 = vmatpush1.msra.mxu0 0.0
      %3196 = vmatprep.subr.mxu0 0.0
      %3197 = vmatpush1.msra.mxu0 0.0
      %3198 = vmatprep.subr.mxu0 0.0
      %3199 = vmatpush1.msra.mxu0 0.0
      %3200 = vmatprep.subr.mxu0 0.0
      %3201 = vmatpush1.msra.mxu0 0.0
      %3202 = vmatprep.subr.mxu0 0.0
      %3203 = vmatpush1.msra.mxu0 0.0
      %3204 = vmatprep.subr.mxu0 0.0
      %3205 = vmatpush1.msra.mxu0 0.0
      %3206 = vmatprep.subr.mxu0 0.0
      %3207 = vmatpush1.msra.mxu0 0.0
      %3208 = vmatprep.subr.mxu0 0.0
      %3209 = vmatpush1.msra.mxu0 0.0
      %3210 = vmatprep.subr.mxu0 0.0
      %3211 = vmatpush1.msra.mxu0 0.0
      %3212 = vmatprep.subr.mxu0 0.0
      %3213 = vmatpush1.msra.mxu0 0.0
      %3214 = vmatprep.subr.mxu0 0.0
      %3215 = vmatpush1.msra.mxu0 0.0
      %3216 = vmatprep.mubr.f32.mxu0 0.0
      %3217 = vmatmul.mubr.f32.gmra.mrb[0].mxu0 %v3129
      %v3218 = vpop.f32.mrb[0].mxu0
      %v3219 = vadd.f32 0.0, %v3218
      %v3220 = vpop.f32.mrb[0].mxu0
      %3221 = vmatprep.mubr.f32.mxu0 0.0
      %3222 = vmatmul.mubr.f32.gmra.mrb[0].mxu0 %v3132
      %v3223 = vpop.f32.mrb[0].mxu0
      %v3224 = vadd.f32 0.0, %v3223
      %v3225 = vpop.f32.mrb[0].mxu0
      %3226 = vmatprep.mubr.f32.mxu0 0.0
      %3227 = vmatmul.mubr.f32.gmra.mrb[0].mxu0 %v3135
      %v3228 = vpop.f32.mrb[0].mxu0
      %v3229 = vadd.f32 0.0, %v3228
      %v3230 = vpop.f32.mrb[0].mxu0
      %3231 = vmatprep.mubr.f32.mxu0 0.0
      %3232 = vmatmul.mubr.f32.gmra.mrb[0].mxu0 %v3138
      %v3233 = vpop.f32.mrb[0].mxu0
      %v3234 = vadd.f32 0.0, %v3233
      %v3235 = vpop.f32.mrb[0].mxu0
      %3236 = vmatprep.mubr.f32.mxu0 0.0
      %3237 = vmatmul.mubr.f32.gmra.mrb[0].mxu0 %v3141
      %v3238 = vpop.f32.mrb[0].mxu0
      %v3239 = vadd.f32 0.0, %v3238
      %v3240 = vpop.f32.mrb[0].mxu0
      %3241 = vmatprep.mubr.f32.mxu0 0.0
      %3242 = vmatmul.mubr.f32.gmra.mrb[0].mxu0 %v3144
      %v3243 = vpop.f32.mrb[0].mxu0
      %v3244 = vadd.f32 0.0, %v3243
      %v3245 = vpop.f32.mrb[0].mxu0
      %3246 = vmatprep.mubr.f32.mxu0 0.0
      %3247 = vmatmul.mubr.f32.gmra.mrb[0].mxu0 %v3147
      %v3248 = vpop.f32.mrb[0].mxu0
      %v3249 = vadd.f32 0.0, %v3248
      %v3250 = vpop.f32.mrb[0].mxu0
      %3251 = vmatprep.mubr.f32.mxu0 0.0
      %3252 = vmatmul.mubr.f32.gmra.mrb[0].mxu0 %v3150
      %v3253 = vpop.f32.mrb[0].mxu0
      %v3254 = vadd.f32 0.0, %v3253
      %v3255 = vpop.f32.mrb[0].mxu0
      %3256 = vdwg.mxu0
      %3265 = vrot.lane.b32.xlu0 %v2575, 8
      %v3266 = vpop.permute.xlu0 %3265
      %3267 = vrot.lane.b32.xlu0 %v2580, 8
      %v3268 = vpop.permute.xlu0 %3267
      %3269 = vrot.lane.b32.xlu0 %v2585, 8
      %v3270 = vpop.permute.xlu0 %3269
      %3271 = vrot.lane.b32.xlu0 %v2590, 8
      %v3272 = vpop.permute.xlu0 %3271
      %3273 = vrot.lane.b32.xlu0 %v2595, 8
      %v3274 = vpop.permute.xlu0 %3273
      %3275 = vrot.lane.b32.xlu0 %v2600, 8
      %v3276 = vpop.permute.xlu0 %3275
      %3277 = vrot.lane.b32.xlu0 %v2605, 8
      %v3278 = vpop.permute.xlu0 %3277
      %3279 = vrot.lane.b32.xlu0 %v2610, 8
      %v3280 = vpop.permute.xlu0 %3279
      %3297 = vrot.lane.b32.xlu0 %v2897, 16
      %v3298 = vpop.permute.xlu0 %3297
      %3299 = vrot.lane.b32.xlu0 %v2902, 16
      %v3300 = vpop.permute.xlu0 %3299
      %3301 = vrot.lane.b32.xlu0 %v2907, 16
      %v3302 = vpop.permute.xlu0 %3301
      %3303 = vrot.lane.b32.xlu0 %v2912, 16
      %v3304 = vpop.permute.xlu0 %3303
      %3305 = vrot.lane.b32.xlu0 %v2917, 16
      %v3306 = vpop.permute.xlu0 %3305
      %3307 = vrot.lane.b32.xlu0 %v2922, 16
      %v3308 = vpop.permute.xlu0 %3307
      %3309 = vrot.lane.b32.xlu0 %v2927, 16
      %v3310 = vpop.permute.xlu0 %3309
      %3311 = vrot.lane.b32.xlu0 %v2932, 16
      %v3312 = vpop.permute.xlu0 %3311
      %3329 = vrot.lane.b32.xlu0 %v3219, 24
      %v3330 = vpop.permute.xlu0 %3329
      %3331 = vrot.lane.b32.xlu0 %v3224, 24
      %v3332 = vpop.permute.xlu0 %3331
      %3333 = vrot.lane.b32.xlu0 %v3229, 24
      %v3334 = vpop.permute.xlu0 %3333
      %3335 = vrot.lane.b32.xlu0 %v3234, 24
      %v3336 = vpop.permute.xlu0 %3335
      %3337 = vrot.lane.b32.xlu0 %v3239, 24
      %v3338 = vpop.permute.xlu0 %3337
      %3339 = vrot.lane.b32.xlu0 %v3244, 24
      %v3340 = vpop.permute.xlu0 %3339
      %3341 = vrot.lane.b32.xlu0 %v3249, 24
      %v3342 = vpop.permute.xlu0 %3341
      %3343 = vrot.lane.b32.xlu0 %v3254, 24
      %v3344 = vpop.permute.xlu0 %3343
      %v3353 = vsel %vm504, %v2253, %v3266
      %v3354 = vsel %vm504, %v2258, %v3268
      %v3355 = vsel %vm504, %v2263, %v3270
      %v3356 = vsel %vm504, %v2268, %v3272
      %v3357 = vsel %vm504, %v2273, %v3274
      %v3358 = vsel %vm504, %v2278, %v3276
      %v3359 = vsel %vm504, %v2283, %v3278
      %v3360 = vsel %vm504, %v2288, %v3280
      %v3361 = vsel %vm1795, %v3353, %v3298
      %v3362 = vsel %vm1795, %v3354, %v3300
      %v3363 = vsel %vm1795, %v3355, %v3302
      %v3364 = vsel %vm1795, %v3356, %v3304
      %v3365 = vsel %vm1795, %v3357, %v3306
      %v3366 = vsel %vm1795, %v3358, %v3308
      %v3367 = vsel %vm1795, %v3359, %v3310
      %v3368 = vsel %vm1795, %v3360, %v3312
      %vm3369 = vcmask 195584
      %v3370 = vsel %vm3369, %v3361, %v3330
      %v3371 = vsel %vm3369, %v3362, %v3332
      %v3372 = vsel %vm3369, %v3363, %v3334
      %v3373 = vsel %vm3369, %v3364, %v3336
      %v3374 = vsel %vm3369, %v3365, %v3338
      %v3375 = vsel %vm3369, %v3366, %v3340
      %v3376 = vsel %vm3369, %v3367, %v3342
      %v3377 = vsel %vm3369, %v3368, %v3344
      %3378 = vst.msk [vmem:[%s343] sm:$0xff] %vm397, %v3370
      %3379 = vst.msk [vmem:[%s343 + $0x8] sm:$0xff] %vm397, %v3371
      %3380 = vst.msk [vmem:[%s343 + $0x10] sm:$0xff] %vm397, %v3372
      %3381 = vst.msk [vmem:[%s343 + $0x18] sm:$0xff] %vm397, %v3373
      %3382 = vst.msk [vmem:[%s343 + $0x20] sm:$0xff] %vm397, %v3374
      %3383 = vst.msk [vmem:[%s343 + $0x28] sm:$0xff] %vm397, %v3375
      %3384 = vst.msk [vmem:[%s343 + $0x30] sm:$0xff] %vm397, %v3376
      %3385 = vst.msk [vmem:[%s343 + $0x38] sm:$0xff] %vm397, %v3377
      %s3386 = smul.u32 8, %s24
      %p3387 = scmp.lt.s32.totalorder %s23, 1
      %s3388 = scalar_select %p3387, %s23, 1
      %p3389 = scmp.lt.s32.totalorder %s3386, 15
      %s3390 = scalar_select %p3389, %s3386, 15
      %s3391 = smul.addr %s3388, 16
      %s3392 = sadd.s32 %s3390, %s3391
      %s3393 = smul.addr %s3392, 8
      %s3394 = scalar_lea.vmem %s8, %s3393
      // Predicated region
      $region53: #{tpu_custom_call.1} parent=51 // pred_check
        %p3395 = pneg %p226
      $region54: #{tpu_custom_call.1} parent=51 // pred_check_branch
        %3397 = sbr.rel (%p3395) target = $region56
      $region55: #{tpu_custom_call.1} parent=51 // pred_region
        %s3398 = smul.u32 8, %s24
      $region56: #{tpu_custom_call.1} parent=51 // pred_fallthru
        _
    $region52: #{tpu_custom_call.1} parent=5 // pred_fallthru
      _
    %p3399 = scmp.le.s32.totalorder 2, %s14
    // Predicated region
    $region57: #{tpu_custom_call.1} parent=5 // pred_check
      %p3400 = pneg %p3399
    $region58: #{tpu_custom_call.1} parent=5 // pred_check_branch
      %3402 = sbr.rel (%p3400) target = $region60
    $region59: #{tpu_custom_call.1} parent=5 // pred_region
      %s3403 = ssub.s32 %s14, 2
      // Predicated region
      $region61: #{tpu_custom_call.1} parent=59 // pred_check
        %p3404 = pneg %p232
      $region62: #{tpu_custom_call.1} parent=59 // pred_check_branch
        %3406 = sbr.rel (%p3404) target = $region64
      $region63: #{tpu_custom_call.1} parent=59 // pred_region
        %s3407 = smul.u32 8, %s26
        %p3408 = scmp.lt.s32.totalorder %s25, 1
        %s3409 = scalar_select %p3408, %s25, 1
        %p3410 = scmp.lt.s32.totalorder %s3407, 15
        %s3411 = scalar_select %p3410, %s3407, 15
        %s3412 = smul.addr %s3409, 16
        %s3413 = sadd.s32 %s3411, %s3412
        %s3414 = smul.addr %s3413, 8
        %s3415 = scalar_lea.vmem %s8, %s3414
      $region64: #{tpu_custom_call.1} parent=59 // pred_fallthru
        _
    $region60: #{tpu_custom_call.1} parent=5 // pred_fallthru
      _
  $region6: #{tpu_custom_call.1} parent=0 // loop_footer
    %s18 = sadd.s32 1, %s14
  $region7: #{tpu_custom_call.1} parent=0 // loop_footer_branch
    %13 = sbr.rel target = $region3
  $region8: #{tpu_custom_call.1} parent=0 // loop_exit
    _

</llo_original>
